<compile_context>
chip_gen: v5e
topology: v5e:2x2
jax: 0.10.0
libtpu: 0.0.40
codegen_flags: <defaults>
</compile_context>

<pallas_src>
import functools

import jax
import jax.numpy as jnp
import numpy as np
from jax.experimental import pallas as pl
from jax.experimental.pallas import tpu as pltpu


def _round_up(n, m=128):
    return ((n + m - 1) // m) * m


# ----------------------------- Pallas kernel ------------------------------- #

def _fused_tail_kernel(h_ref,
                       w2_ref, b2_ref, w3_ref, b3_ref, w4_ref, b4_ref,
                       wfc_ref, bfc_ref,
                       o_ref):
    """conv2..conv4 (dense Toeplitz matmuls) + sigmoid, then the FC layer.

    h_ref:   [Npad, 2048]  conv1 output, (c,h,w)-flattened per sample, 0-padded
    wX_ref:  bf16 Toeplitz conv weights (128-padded cols, zero-padded rows)
    wfc_ref: [256, 128] f32 FC weight (pre-transposed, channel-major rows)
    bX_ref:  [1, P] f32 bias rows (padded entries are exactly 0.0)
    o_ref:   [Npad, 128]   FC output padded to 128 classes (sliced outside)
    """
    h = h_ref[...]
    for w_ref, b_ref in ((w2_ref, b2_ref), (w3_ref, b3_ref), (w4_ref, b4_ref)):
        # bf16 storage, f32 compute + accumulation (matches the f32 reference).
        z = jnp.dot(h, w_ref[...].astype(jnp.float32),
                    preferred_element_type=jnp.float32) + b_ref[...]
        h = jax.nn.sigmoid(z)
    o_ref[...] = (jnp.dot(h, wfc_ref[...], preferred_element_type=jnp.float32)
                  + bfc_ref[...])


@functools.partial(jax.jit, static_argnames=("nr_classes",))
def original_net_forward(x, params, *, nr_classes):
    """x: [N, 1, H, W]; params from prepare_params."""
    w1col, b1, weights, biases = params
    N, Cin, H, W = x.shape
    Npad = max(8, ((N + 7) // 8) * 8)            # 8-row sublane padding (f32)
    x = x.astype(jnp.float32)
    if Npad != N:
        x = jnp.pad(x, ((0, Npad - N), (0, 0), (0, 0), (0, 0)))

    # ---- conv1 as im2col + [25,12] matmul + sigmoid (k=5, s=2, p=1) -------- #
    k1, s1, p1 = 5, 2, 1
    Ho = (H - k1 + 2 * p1) // s1 + 1
    Wo = (W - k1 + 2 * p1) // s1 + 1
    xp = jnp.pad(x, ((0, 0), (0, 0), (p1, p1), (p1, p1)))
    cols = []
    for c in range(Cin):                          # (c, kh, kw) patch order
        for kh in range(k1):
            for kw in range(k1):
                cols.append(xp[:, c, kh:kh + s1 * Ho:s1, kw:kw + s1 * Wo:s1])
    patches = jnp.stack(cols, axis=-1)            # [Npad, Ho, Wo, Cin*k*k]
    h1 = jax.nn.sigmoid(
        jnp.einsum("nhwk,kf->nhwf", patches, w1col,
                   precision=jax.lax.Precision.HIGHEST) + b1)
    # PyTorch-style (c,h,w) flatten per sample; pad lanes to the W2 row count.
    h1 = jnp.transpose(h1, (0, 3, 1, 2)).reshape(Npad, -1)
    rows2 = weights[0].shape[0]
    h1 = jnp.pad(h1, ((0, 0), (0, rows2 - h1.shape[1])))

    # ---- fused conv2..conv4 + FC Pallas kernel ----------------------------- #
    out_pad = weights[-1].shape[1]
    operands = [h1]
    for w, b in zip(weights, biases):
        operands += [w, b]

    out = pl.pallas_call(
        _fused_tail_kernel,
        out_shape=jax.ShapeDtypeStruct((Npad, out_pad), jnp.float32),
        # No grid: single invocation, whole arrays resident once in VMEM
        # (no double-buffering of the weights).
        in_specs=[pl.BlockSpec(memory_space=pltpu.MemorySpace.VMEM)
                  for _ in operands],
        out_specs=pl.BlockSpec(memory_space=pltpu.MemorySpace.VMEM),
        compiler_params=pltpu.CompilerParams(
            vmem_limit_bytes=24 * 1024 * 1024),
    )(*operands)
    return out[:N, :nr_classes]


# -------------------- one-time (numpy) parameter lowering ------------------- #

def conv_to_dense(w, b, h, w_sp, stride, padding):
    """PyTorch Conv2d (w:[F,Cin,k,k], b:[F]) acting on a (c,h,w)-flattened input
    -> dense matrix [Cin*h*w_sp, round128(F*Ho*Wo)] and bias [1, round128]."""
    F_, Cin, k, _ = w.shape
    Ho = (h - k + 2 * padding) // stride + 1
    Wo = (w_sp - k + 2 * padding) // stride + 1
    out_pad = _round_up(F_ * Ho * Wo)
    Wd = np.zeros((Cin * h * w_sp, out_pad), np.float32)
    bd = np.zeros((1, out_pad), np.float32)
    for f in range(F_):
        for oh in range(Ho):
            for ow in range(Wo):
                col = (f * Ho + oh) * Wo + ow
                bd[0, col] = b[f]
                for c in range(Cin):
                    for kh in range(k):
                        ih = oh * stride + kh - padding
                        if ih < 0 or ih >= h:
                            continue
                        row_base = (c * h + ih) * w_sp
                        for kw in range(k):
                            iw = ow * stride + kw - padding
                            if iw < 0 or iw >= w_sp:
                                continue
                            Wd[row_base + iw, col] = w[f, c, kh, kw]
    return Wd, bd, Ho, Wo


def prepare_params(conv_params, fc_w, fc_b, H, W):
    """One-time conversion (outside jit) of PyTorch-layout params:
       conv1 -> im2col weight [Cin*k*k, F] (f32);
       conv2..4 -> bf16 Toeplitz matrices; FC -> f32 padded matmul operand."""
    # conv1: keep the original small weight, im2col form.
    w1, b1, s1, p1 = conv_params[0]
    w1 = np.asarray(w1)
    F1, C1, k1, _ = w1.shape
    w1col = jnp.asarray(w1.reshape(F1, C1 * k1 * k1).T)      # [(c,kh,kw), F]
    b1j = jnp.asarray(b1)
    h = (H - k1 + 2 * p1) // s1 + 1
    w_sp = (W - k1 + 2 * p1) // s1 + 1
    prev_pad = _round_up(F1 * h * w_sp)                      # 2028 -> 2048
    f_last = F1

    weights, biases = [], []
    for (cw, cb, stride, padding) in conv_params[1:]:
        Wd, bd, h, w_sp = conv_to_dense(np.asarray(cw), np.asarray(cb),
                                        h, w_sp, stride, padding)
        if prev_pad > Wd.shape[0]:
            # zero rows neutralize the previous layer's padded (sigmoid(0)=0.5)
            # columns; padded bias entries stay exactly 0.0.
            Wd = np.pad(Wd, ((0, prev_pad - Wd.shape[0]), (0, 0)))
        weights.append(jnp.asarray(Wd).astype(jnp.bfloat16))  # bf16 storage
        biases.append(jnp.asarray(bd))
        prev_pad = Wd.shape[1]
        f_last = cw.shape[0]

    dim = f_last * h * w_sp                      # PyTorch flatten dim (c,h,w)
    C = fc_w.shape[0]
    c_pad = _round_up(C)
    Wfc = np.zeros((prev_pad, c_pad), np.float32)
    Wfc[:dim, :C] = np.asarray(fc_w).T           # pre-transposed, channel-major
    bfc = np.zeros((1, c_pad), np.float32)
    bfc[0, :C] = np.asarray(fc_b)
    weights.append(jnp.asarray(Wfc))             # FC stays f32 (accuracy)
    biases.append(jnp.asarray(bfc))
    return (w1col, b1j, tuple(weights), tuple(biases))


# --------------------------------- main ------------------------------------ #

if __name__ == "__main__":
    # Original_Net body is fixed: Conv(1->12,k5,p1,s2), Conv(12->12,k5,p1,s2),
    # Conv(12->12,k5,p1,s1), Conv(12->12,k3,p1,s1), each + Sigmoid, then Linear.
    # With a 28x28 single-channel input: 28 -> 13 -> 6 -> 4 -> 4, dim = 12*4*4.
    batch, in_ch, H, W, C = 2, 1, 28, 28, 10
    dim = 12 * 4 * 4                                           # 192

    keys = jax.random.split(jax.random.PRNGKey(0), 11)

    conv_cfg = [  # (out_ch, in_ch, kernel, stride, padding)
        (12, 1, 5, 2, 1),
        (12, 12, 5, 2, 1),
        (12, 12, 5, 1, 1),
        (12, 12, 3, 1, 1),
    ]
    conv_params = []
    for i, (fo, fi, k, s, p) in enumerate(conv_cfg):
        scale = 1.0 / np.sqrt(fi * k * k)
        cw = scale * jax.random.normal(keys[2 * i], (fo, fi, k, k), dtype=jnp.float32)
        cb = scale * jax.random.normal(keys[2 * i + 1], (fo,), dtype=jnp.float32)
        conv_params.append((cw, cb, s, p))

    fc_scale = 1.0 / np.sqrt(dim)
    fc_w = fc_scale * jax.random.normal(keys[8], (C, dim), dtype=jnp.float32)
    fc_b = fc_scale * jax.random.normal(keys[9], (C,), dtype=jnp.float32)

    x = jax.random.normal(keys[10], (batch, in_ch, H, W), dtype=jnp.float32)

    # One-time weight lowering (hoisted out of the per-call path).
    params = prepare_params(conv_params, fc_w, fc_b, H, W)

    out = original_net_forward(x, params, nr_classes=C)
    out = jax.block_until_ready(out)
    assert out.shape == (batch, C), out.shape

    # Pure-JAX reference with PyTorch Conv2d semantics.  conv2..4 weights are
    # round-tripped through bf16 (the exact values the kernel consumes).
    hr = x
    for li, (cw, cb, s, p) in enumerate(conv_params):
        cw_eff = cw if li == 0 else cw.astype(jnp.bfloat16).astype(jnp.float32)
        hr = jax.lax.conv_general_dilated(
            hr, cw_eff, window_strides=(s, s), padding=((p, p), (p, p)),
            dimension_numbers=("NCHW", "OIHW", "NCHW"),
            precision=jax.lax.Precision.HIGHEST)
        hr = jax.nn.sigmoid(hr + cb[None, :, None, None])
    ref = jnp.dot(hr.reshape(batch, -1), fc_w.T,
                  precision=jax.lax.Precision.HIGHEST) + fc_b

    np.testing.assert_allclose(np.asarray(out), np.asarray(ref),
                               rtol=2e-4, atol=2e-4)
    print("KERNEL_OK")
</pallas_src>

<mosaic_0001>
module attributes {stable_mosaic.version = 11 : i64} {
  func.func @_fused_tail_kernel(%arg0: memref<8x2048xf32, #tpu.memory_space<vmem>>, %arg1: memref<2048x512xbf16, #tpu.memory_space<vmem>>, %arg2: memref<1x512xf32, #tpu.memory_space<vmem>>, %arg3: memref<512x256xbf16, #tpu.memory_space<vmem>>, %arg4: memref<1x256xf32, #tpu.memory_space<vmem>>, %arg5: memref<256x256xbf16, #tpu.memory_space<vmem>>, %arg6: memref<1x256xf32, #tpu.memory_space<vmem>>, %arg7: memref<256x128xf32, #tpu.memory_space<vmem>>, %arg8: memref<1x128xf32, #tpu.memory_space<vmem>>, %arg9: memref<8x128xf32, #tpu.memory_space<vmem>>) attributes {dimension_semantics = [], scalar_prefetch = 0 : i64, scratch_operands = 0 : i64, tpu.core_type = #tpu.core_type<tc>} {
    %c0 = arith.constant 0 : index
    %c0_0 = arith.constant 0 : index
    %0 = vector.load %arg0[%c0, %c0_0] : memref<8x2048xf32, #tpu.memory_space<vmem>>, vector<8x2048xf32>
    %c0_1 = arith.constant 0 : index
    %c0_2 = arith.constant 0 : index
    %1 = vector.load %arg1[%c0_1, %c0_2] : memref<2048x512xbf16, #tpu.memory_space<vmem>>, vector<2048x512xbf16>
    %2 = arith.extf %1 : vector<2048x512xbf16> to vector<2048x512xf32>
    %cst = arith.constant dense<0.000000e+00> : vector<8x512xf32>
    %3 = tpu.matmul %0, %2, %cst {dimension_numbers = #tpu.dot_dimension_numbers<[1], [0], [0], [1], [0, 0, 1, 1], [], []>} : vector<8x2048xf32>, vector<2048x512xf32>, vector<8x512xf32> -> vector<8x512xf32>
    %c0_3 = arith.constant 0 : index
    %c0_4 = arith.constant 0 : index
    %4 = vector.load %arg2[%c0_3, %c0_4] : memref<1x512xf32, #tpu.memory_space<vmem>>, vector<1x512xf32>
    %5 = vector.broadcast %4 : vector<1x512xf32> to vector<8x512xf32>
    %6 = arith.addf %3, %5 : vector<8x512xf32>
    %7 = arith.negf %6 : vector<8x512xf32>
    %8 = math.exp %7 : vector<8x512xf32>
    %cst_5 = arith.constant 1.000000e+00 : f32
    %9 = vector.broadcast %cst_5 : f32 to vector<8x512xf32>
    %10 = arith.addf %9, %8 : vector<8x512xf32>
    %11 = arith.divf %9, %10 : vector<8x512xf32>
    %c0_6 = arith.constant 0 : index
    %c0_7 = arith.constant 0 : index
    %12 = vector.load %arg3[%c0_6, %c0_7] : memref<512x256xbf16, #tpu.memory_space<vmem>>, vector<512x256xbf16>
    %13 = arith.extf %12 : vector<512x256xbf16> to vector<512x256xf32>
    %cst_8 = arith.constant dense<0.000000e+00> : vector<8x256xf32>
    %14 = tpu.matmul %11, %13, %cst_8 {dimension_numbers = #tpu.dot_dimension_numbers<[1], [0], [0], [1], [0, 0, 1, 1], [], []>} : vector<8x512xf32>, vector<512x256xf32>, vector<8x256xf32> -> vector<8x256xf32>
    %c0_9 = arith.constant 0 : index
    %c0_10 = arith.constant 0 : index
    %15 = vector.load %arg4[%c0_9, %c0_10] : memref<1x256xf32, #tpu.memory_space<vmem>>, vector<1x256xf32>
    %16 = vector.broadcast %15 : vector<1x256xf32> to vector<8x256xf32>
    %17 = arith.addf %14, %16 : vector<8x256xf32>
    %18 = arith.negf %17 : vector<8x256xf32>
    %19 = math.exp %18 : vector<8x256xf32>
    %cst_11 = arith.constant 1.000000e+00 : f32
    %20 = vector.broadcast %cst_11 : f32 to vector<8x256xf32>
    %21 = arith.addf %20, %19 : vector<8x256xf32>
    %22 = arith.divf %20, %21 : vector<8x256xf32>
    %c0_12 = arith.constant 0 : index
    %c0_13 = arith.constant 0 : index
    %23 = vector.load %arg5[%c0_12, %c0_13] : memref<256x256xbf16, #tpu.memory_space<vmem>>, vector<256x256xbf16>
    %24 = arith.extf %23 : vector<256x256xbf16> to vector<256x256xf32>
    %cst_14 = arith.constant dense<0.000000e+00> : vector<8x256xf32>
    %25 = tpu.matmul %22, %24, %cst_14 {dimension_numbers = #tpu.dot_dimension_numbers<[1], [0], [0], [1], [0, 0, 1, 1], [], []>} : vector<8x256xf32>, vector<256x256xf32>, vector<8x256xf32> -> vector<8x256xf32>
    %c0_15 = arith.constant 0 : index
    %c0_16 = arith.constant 0 : index
    %26 = vector.load %arg6[%c0_15, %c0_16] : memref<1x256xf32, #tpu.memory_space<vmem>>, vector<1x256xf32>
    %27 = vector.broadcast %26 : vector<1x256xf32> to vector<8x256xf32>
    %28 = arith.addf %25, %27 : vector<8x256xf32>
    %29 = arith.negf %28 : vector<8x256xf32>
    %30 = math.exp %29 : vector<8x256xf32>
    %cst_17 = arith.constant 1.000000e+00 : f32
    %31 = vector.broadcast %cst_17 : f32 to vector<8x256xf32>
    %32 = arith.addf %31, %30 : vector<8x256xf32>
    %33 = arith.divf %31, %32 : vector<8x256xf32>
    %c0_18 = arith.constant 0 : index
    %c0_19 = arith.constant 0 : index
    %34 = vector.load %arg7[%c0_18, %c0_19] : memref<256x128xf32, #tpu.memory_space<vmem>>, vector<256x128xf32>
    %cst_20 = arith.constant dense<0.000000e+00> : vector<8x128xf32>
    %35 = tpu.matmul %33, %34, %cst_20 {dimension_numbers = #tpu.dot_dimension_numbers<[1], [0], [0], [1], [0, 0, 1, 1], [], []>} : vector<8x256xf32>, vector<256x128xf32>, vector<8x128xf32> -> vector<8x128xf32>
    %c0_21 = arith.constant 0 : index
    %c0_22 = arith.constant 0 : index
    %36 = vector.load %arg8[%c0_21, %c0_22] : memref<1x128xf32, #tpu.memory_space<vmem>>, vector<1x128xf32>
    %37 = vector.broadcast %36 : vector<1x128xf32> to vector<8x128xf32>
    %38 = arith.addf %35, %37 : vector<8x128xf32>
    %c0_23 = arith.constant 0 : index
    %c0_24 = arith.constant 0 : index
    %39 = vector.load %arg9[%c0_23, %c0_24] : memref<8x128xf32, #tpu.memory_space<vmem>>, vector<8x128xf32>
    tpu.vector_store %arg9[%c0_23, %c0_24], %38 {strides = array<i32>} : memref<8x128xf32, #tpu.memory_space<vmem>>, vector<8x128xf32>,
    return
  }
}

</mosaic_0001>

<llo_original>
// kernel: original_net_forward.1
$region0: #{original_net_forward.1}
  #allocation0 [shape = 'u32[]', space=smem, size = 0x4, offset = 0x4, fixed_abs, tag = 'smem constant byte address 0x4 - core index']
  #allocation1 [shape = 'u32[72,128]{1,0:T(1,128)}', space=vmem, size = 0x9000, scoped, tag = 'internal scratch']
  %s0 = inlined_call_operand.vmem [shape: f32[8,2048], index: 0, kind: input, shape index: {}]
  %s1 = inlined_call_operand.vmem [shape: bf16[2048,512], index: 1, kind: input, shape index: {}]
  %s2 = inlined_call_operand.vmem [shape: f32[1,512], index: 2, kind: input, shape index: {}]
  %s3 = inlined_call_operand.vmem [shape: bf16[512,256], index: 3, kind: input, shape index: {}]
  %s4 = inlined_call_operand.vmem [shape: f32[1,256], index: 4, kind: input, shape index: {}]
  %s5 = inlined_call_operand.vmem [shape: bf16[256,256], index: 5, kind: input, shape index: {}]
  %s6 = inlined_call_operand.vmem [shape: f32[1,256], index: 6, kind: input, shape index: {}]
  %s7 = inlined_call_operand.vmem [shape: f32[256,128], index: 7, kind: input, shape index: {}]
  %s8 = inlined_call_operand.vmem [shape: f32[1,128], index: 8, kind: input, shape index: {}]
  %s9 = inlined_call_operand.vmem [shape: f32[8,128], index: 9, kind: output, shape index: {}]
  %s10 = sld [smem:[#allocation0]]
  $region46: #{original_net_forward.1} parent=0
    _
  %s12 = ssub.s32 1, %s10
  %s13 = scalar_select 0, %s12, %s10
  // Predicated region
  $region2: #{original_net_forward.1} parent=0 // pred_check
    _
  $region3: #{original_net_forward.1} parent=0 // pred_check_branch
    %15 = sbr.rel (0) target = $region5
  $region4: #{original_net_forward.1} parent=0 // pred_region
    _
  $region5: #{original_net_forward.1} parent=0 // pred_fallthru
    _
  // Predicated region
  $region6: #{original_net_forward.1} parent=0 // pred_check
    _
  $region7: #{original_net_forward.1} parent=0 // pred_check_branch
    %17 = sbr.rel (0) target = $region9
  $region8: #{original_net_forward.1} parent=0 // pred_region
    _
  $region9: #{original_net_forward.1} parent=0 // pred_fallthru
    _
  // Predicated region
  $region10: #{original_net_forward.1} parent=0 // pred_check
    _
  $region11: #{original_net_forward.1} parent=0 // pred_check_branch
    %19 = sbr.rel (0) target = $region13
  $region12: #{original_net_forward.1} parent=0 // pred_region
    _
  $region13: #{original_net_forward.1} parent=0 // pred_fallthru
    _
  // Predicated region
  $region14: #{original_net_forward.1} parent=0 // pred_check
    _
  $region15: #{original_net_forward.1} parent=0 // pred_check_branch
    %21 = sbr.rel (0) target = $region17
  $region16: #{original_net_forward.1} parent=0 // pred_region
    _
  $region17: #{original_net_forward.1} parent=0 // pred_fallthru
    _
  // Predicated region
  $region18: #{original_net_forward.1} parent=0 // pred_check
    _
  $region19: #{original_net_forward.1} parent=0 // pred_check_branch
    %23 = sbr.rel (0) target = $region21
  $region20: #{original_net_forward.1} parent=0 // pred_region
    _
  $region21: #{original_net_forward.1} parent=0 // pred_fallthru
    _
  // Predicated region
  $region22: #{original_net_forward.1} parent=0 // pred_check
    _
  $region23: #{original_net_forward.1} parent=0 // pred_check_branch
    %25 = sbr.rel (0) target = $region25
  $region24: #{original_net_forward.1} parent=0 // pred_region
    _
  $region25: #{original_net_forward.1} parent=0 // pred_fallthru
    _
  // Predicated region
  $region26: #{original_net_forward.1} parent=0 // pred_check
    _
  $region27: #{original_net_forward.1} parent=0 // pred_check_branch
    %27 = sbr.rel (0) target = $region29
  $region28: #{original_net_forward.1} parent=0 // pred_region
    _
  $region29: #{original_net_forward.1} parent=0 // pred_fallthru
    _
  // Predicated region
  $region30: #{original_net_forward.1} parent=0 // pred_check
    _
  $region31: #{original_net_forward.1} parent=0 // pred_check_branch
    %29 = sbr.rel (0) target = $region33
  $region32: #{original_net_forward.1} parent=0 // pred_region
    _
  $region33: #{original_net_forward.1} parent=0 // pred_fallthru
    _
  // Predicated region
  $region34: #{original_net_forward.1} parent=0 // pred_check
    _
  $region35: #{original_net_forward.1} parent=0 // pred_check_branch
    %31 = sbr.rel (0) target = $region37
  $region36: #{original_net_forward.1} parent=0 // pred_region
    _
  $region37: #{original_net_forward.1} parent=0 // pred_fallthru
    _
  %v32 = vld [vmem:[%s0] sm:$0xff]
  %v33 = vld [vmem:[%s0 + $0x8] sm:$0xff]
  %v34 = vld [vmem:[%s0 + $0x10] sm:$0xff]
  %v35 = vld [vmem:[%s0 + $0x18] sm:$0xff]
  %v36 = vld [vmem:[%s0 + $0x20] sm:$0xff]
  %v37 = vld [vmem:[%s0 + $0x28] sm:$0xff]
  %v38 = vld [vmem:[%s0 + $0x30] sm:$0xff]
  %v39 = vld [vmem:[%s0 + $0x38] sm:$0xff]
  %v40 = vld [vmem:[%s0 + $0x40] sm:$0xff]
  %v41 = vld [vmem:[%s0 + $0x48] sm:$0xff]
  %v42 = vld [vmem:[%s0 + $0x50] sm:$0xff]
  %v43 = vld [vmem:[%s0 + $0x58] sm:$0xff]
  %v44 = vld [vmem:[%s0 + $0x60] sm:$0xff]
  %v45 = vld [vmem:[%s0 + $0x68] sm:$0xff]
  %v46 = vld [vmem:[%s0 + $0x70] sm:$0xff]
  %v47 = vld [vmem:[%s0 + $0x78] sm:$0xff]
  %v48 = vld [vmem:[%s1] sm:$0xff]
  %v49 = vld [vmem:[%s1 + $0x8] sm:$0xff]
  %v50 = vld [vmem:[%s1 + $0x10] sm:$0xff]
  %v51 = vld [vmem:[%s1 + $0x18] sm:$0xff]
  %v52 = vld [vmem:[%s1 + $0x20] sm:$0xff]
  %v53 = vld [vmem:[%s1 + $0x28] sm:$0xff]
  %v54 = vld [vmem:[%s1 + $0x30] sm:$0xff]
  %v55 = vld [vmem:[%s1 + $0x38] sm:$0xff]
  %v56 = vld [vmem:[%s1 + $0x40] sm:$0xff]
  %v57 = vld [vmem:[%s1 + $0x48] sm:$0xff]
  %v58 = vld [vmem:[%s1 + $0x50] sm:$0xff]
  %v59 = vld [vmem:[%s1 + $0x58] sm:$0xff]
  %v60 = vld [vmem:[%s1 + $0x60] sm:$0xff]
  %v61 = vld [vmem:[%s1 + $0x68] sm:$0xff]
  %v62 = vld [vmem:[%s1 + $0x70] sm:$0xff]
  %v63 = vld [vmem:[%s1 + $0x78] sm:$0xff]
  %v64 = vld [vmem:[%s1 + $0x80] sm:$0xff]
  %v65 = vld [vmem:[%s1 + $0x88] sm:$0xff]
  %v66 = vld [vmem:[%s1 + $0x90] sm:$0xff]
  %v67 = vld [vmem:[%s1 + $0x98] sm:$0xff]
  %v68 = vld [vmem:[%s1 + $0xa0] sm:$0xff]
  %v69 = vld [vmem:[%s1 + $0xa8] sm:$0xff]
  %v70 = vld [vmem:[%s1 + $0xb0] sm:$0xff]
  %v71 = vld [vmem:[%s1 + $0xb8] sm:$0xff]
  %v72 = vld [vmem:[%s1 + $0xc0] sm:$0xff]
  %v73 = vld [vmem:[%s1 + $0xc8] sm:$0xff]
  %v74 = vld [vmem:[%s1 + $0xd0] sm:$0xff]
  %v75 = vld [vmem:[%s1 + $0xd8] sm:$0xff]
  %v76 = vld [vmem:[%s1 + $0xe0] sm:$0xff]
  %v77 = vld [vmem:[%s1 + $0xe8] sm:$0xff]
  %v78 = vld [vmem:[%s1 + $0xf0] sm:$0xff]
  %v79 = vld [vmem:[%s1 + $0xf8] sm:$0xff]
  %v80 = vld [vmem:[%s1 + $0x100] sm:$0xff]
  %v81 = vld [vmem:[%s1 + $0x108] sm:$0xff]
  %v82 = vld [vmem:[%s1 + $0x110] sm:$0xff]
  %v83 = vld [vmem:[%s1 + $0x118] sm:$0xff]
  %v84 = vld [vmem:[%s1 + $0x120] sm:$0xff]
  %v85 = vld [vmem:[%s1 + $0x128] sm:$0xff]
  %v86 = vld [vmem:[%s1 + $0x130] sm:$0xff]
  %v87 = vld [vmem:[%s1 + $0x138] sm:$0xff]
  %v88 = vld [vmem:[%s1 + $0x140] sm:$0xff]
  %v89 = vld [vmem:[%s1 + $0x148] sm:$0xff]
  %v90 = vld [vmem:[%s1 + $0x150] sm:$0xff]
  %v91 = vld [vmem:[%s1 + $0x158] sm:$0xff]
  %v92 = vld [vmem:[%s1 + $0x160] sm:$0xff]
  %v93 = vld [vmem:[%s1 + $0x168] sm:$0xff]
  %v94 = vld [vmem:[%s1 + $0x170] sm:$0xff]
  %v95 = vld [vmem:[%s1 + $0x178] sm:$0xff]
  %v96 = vld [vmem:[%s1 + $0x180] sm:$0xff]
  %v97 = vld [vmem:[%s1 + $0x188] sm:$0xff]
  %v98 = vld [vmem:[%s1 + $0x190] sm:$0xff]
  %v99 = vld [vmem:[%s1 + $0x198] sm:$0xff]
  %v100 = vld [vmem:[%s1 + $0x1a0] sm:$0xff]
  %v101 = vld [vmem:[%s1 + $0x1a8] sm:$0xff]
  %v102 = vld [vmem:[%s1 + $0x1b0] sm:$0xff]
  %v103 = vld [vmem:[%s1 + $0x1b8] sm:$0xff]
  %v104 = vld [vmem:[%s1 + $0x1c0] sm:$0xff]
  %v105 = vld [vmem:[%s1 + $0x1c8] sm:$0xff]
  %v106 = vld [vmem:[%s1 + $0x1d0] sm:$0xff]
  %v107 = vld [vmem:[%s1 + $0x1d8] sm:$0xff]
  %v108 = vld [vmem:[%s1 + $0x1e0] sm:$0xff]
  %v109 = vld [vmem:[%s1 + $0x1e8] sm:$0xff]
  %v110 = vld [vmem:[%s1 + $0x1f0] sm:$0xff]
  %v111 = vld [vmem:[%s1 + $0x1f8] sm:$0xff]
  %v112 = vld [vmem:[%s1 + $0x200] sm:$0xff]
  %v113 = vld [vmem:[%s1 + $0x208] sm:$0xff]
  %v114 = vld [vmem:[%s1 + $0x210] sm:$0xff]
  %v115 = vld [vmem:[%s1 + $0x218] sm:$0xff]
  %v116 = vld [vmem:[%s1 + $0x220] sm:$0xff]
  %v117 = vld [vmem:[%s1 + $0x228] sm:$0xff]
  %v118 = vld [vmem:[%s1 + $0x230] sm:$0xff]
  %v119 = vld [vmem:[%s1 + $0x238] sm:$0xff]
  %v120 = vld [vmem:[%s1 + $0x240] sm:$0xff]
  %v121 = vld [vmem:[%s1 + $0x248] sm:$0xff]
  %v122 = vld [vmem:[%s1 + $0x250] sm:$0xff]
  %v123 = vld [vmem:[%s1 + $0x258] sm:$0xff]
  %v124 = vld [vmem:[%s1 + $0x260] sm:$0xff]
  %v125 = vld [vmem:[%s1 + $0x268] sm:$0xff]
  %v126 = vld [vmem:[%s1 + $0x270] sm:$0xff]
  %v127 = vld [vmem:[%s1 + $0x278] sm:$0xff]
  %v128 = vld [vmem:[%s1 + $0x280] sm:$0xff]
  %v129 = vld [vmem:[%s1 + $0x288] sm:$0xff]
  %v130 = vld [vmem:[%s1 + $0x290] sm:$0xff]
  %v131 = vld [vmem:[%s1 + $0x298] sm:$0xff]
  %v132 = vld [vmem:[%s1 + $0x2a0] sm:$0xff]
  %v133 = vld [vmem:[%s1 + $0x2a8] sm:$0xff]
  %v134 = vld [vmem:[%s1 + $0x2b0] sm:$0xff]
  %v135 = vld [vmem:[%s1 + $0x2b8] sm:$0xff]
  %v136 = vld [vmem:[%s1 + $0x2c0] sm:$0xff]
  %v137 = vld [vmem:[%s1 + $0x2c8] sm:$0xff]
  %v138 = vld [vmem:[%s1 + $0x2d0] sm:$0xff]
  %v139 = vld [vmem:[%s1 + $0x2d8] sm:$0xff]
  %v140 = vld [vmem:[%s1 + $0x2e0] sm:$0xff]
  %v141 = vld [vmem:[%s1 + $0x2e8] sm:$0xff]
  %v142 = vld [vmem:[%s1 + $0x2f0] sm:$0xff]
  %v143 = vld [vmem:[%s1 + $0x2f8] sm:$0xff]
  %v144 = vld [vmem:[%s1 + $0x300] sm:$0xff]
  %v145 = vld [vmem:[%s1 + $0x308] sm:$0xff]
  %v146 = vld [vmem:[%s1 + $0x310] sm:$0xff]
  %v147 = vld [vmem:[%s1 + $0x318] sm:$0xff]
  %v148 = vld [vmem:[%s1 + $0x320] sm:$0xff]
  %v149 = vld [vmem:[%s1 + $0x328] sm:$0xff]
  %v150 = vld [vmem:[%s1 + $0x330] sm:$0xff]
  %v151 = vld [vmem:[%s1 + $0x338] sm:$0xff]
  %v152 = vld [vmem:[%s1 + $0x340] sm:$0xff]
  %v153 = vld [vmem:[%s1 + $0x348] sm:$0xff]
  %v154 = vld [vmem:[%s1 + $0x350] sm:$0xff]
  %v155 = vld [vmem:[%s1 + $0x358] sm:$0xff]
  %v156 = vld [vmem:[%s1 + $0x360] sm:$0xff]
  %v157 = vld [vmem:[%s1 + $0x368] sm:$0xff]
  %v158 = vld [vmem:[%s1 + $0x370] sm:$0xff]
  %v159 = vld [vmem:[%s1 + $0x378] sm:$0xff]
  %v160 = vld [vmem:[%s1 + $0x380] sm:$0xff]
  %v161 = vld [vmem:[%s1 + $0x388] sm:$0xff]
  %v162 = vld [vmem:[%s1 + $0x390] sm:$0xff]
  %v163 = vld [vmem:[%s1 + $0x398] sm:$0xff]
  %v164 = vld [vmem:[%s1 + $0x3a0] sm:$0xff]
  %v165 = vld [vmem:[%s1 + $0x3a8] sm:$0xff]
  %v166 = vld [vmem:[%s1 + $0x3b0] sm:$0xff]
  %v167 = vld [vmem:[%s1 + $0x3b8] sm:$0xff]
  %v168 = vld [vmem:[%s1 + $0x3c0] sm:$0xff]
  %v169 = vld [vmem:[%s1 + $0x3c8] sm:$0xff]
  %v170 = vld [vmem:[%s1 + $0x3d0] sm:$0xff]
  %v171 = vld [vmem:[%s1 + $0x3d8] sm:$0xff]
  %v172 = vld [vmem:[%s1 + $0x3e0] sm:$0xff]
  %v173 = vld [vmem:[%s1 + $0x3e8] sm:$0xff]
  %v174 = vld [vmem:[%s1 + $0x3f0] sm:$0xff]
  %v175 = vld [vmem:[%s1 + $0x3f8] sm:$0xff]
  %v176 = vld [vmem:[%s1 + $0x400] sm:$0xff]
  %v177 = vld [vmem:[%s1 + $0x408] sm:$0xff]
  %v178 = vld [vmem:[%s1 + $0x410] sm:$0xff]
  %v179 = vld [vmem:[%s1 + $0x418] sm:$0xff]
  %v180 = vld [vmem:[%s1 + $0x420] sm:$0xff]
  %v181 = vld [vmem:[%s1 + $0x428] sm:$0xff]
  %v182 = vld [vmem:[%s1 + $0x430] sm:$0xff]
  %v183 = vld [vmem:[%s1 + $0x438] sm:$0xff]
  %v184 = vld [vmem:[%s1 + $0x440] sm:$0xff]
  %v185 = vld [vmem:[%s1 + $0x448] sm:$0xff]
  %v186 = vld [vmem:[%s1 + $0x450] sm:$0xff]
  %v187 = vld [vmem:[%s1 + $0x458] sm:$0xff]
  %v188 = vld [vmem:[%s1 + $0x460] sm:$0xff]
  %v189 = vld [vmem:[%s1 + $0x468] sm:$0xff]
  %v190 = vld [vmem:[%s1 + $0x470] sm:$0xff]
  %v191 = vld [vmem:[%s1 + $0x478] sm:$0xff]
  %v192 = vld [vmem:[%s1 + $0x480] sm:$0xff]
  %v193 = vld [vmem:[%s1 + $0x488] sm:$0xff]
  %v194 = vld [vmem:[%s1 + $0x490] sm:$0xff]
  %v195 = vld [vmem:[%s1 + $0x498] sm:$0xff]
  %v196 = vld [vmem:[%s1 + $0x4a0] sm:$0xff]
  %v197 = vld [vmem:[%s1 + $0x4a8] sm:$0xff]
  %v198 = vld [vmem:[%s1 + $0x4b0] sm:$0xff]
  %v199 = vld [vmem:[%s1 + $0x4b8] sm:$0xff]
  %v200 = vld [vmem:[%s1 + $0x4c0] sm:$0xff]
  %v201 = vld [vmem:[%s1 + $0x4c8] sm:$0xff]
  %v202 = vld [vmem:[%s1 + $0x4d0] sm:$0xff]
  %v203 = vld [vmem:[%s1 + $0x4d8] sm:$0xff]
  %v204 = vld [vmem:[%s1 + $0x4e0] sm:$0xff]
  %v205 = vld [vmem:[%s1 + $0x4e8] sm:$0xff]
  %v206 = vld [vmem:[%s1 + $0x4f0] sm:$0xff]
  %v207 = vld [vmem:[%s1 + $0x4f8] sm:$0xff]
  %v208 = vld [vmem:[%s1 + $0x500] sm:$0xff]
  %v209 = vld [vmem:[%s1 + $0x508] sm:$0xff]
  %v210 = vld [vmem:[%s1 + $0x510] sm:$0xff]
  %v211 = vld [vmem:[%s1 + $0x518] sm:$0xff]
  %v212 = vld [vmem:[%s1 + $0x520] sm:$0xff]
  %v213 = vld [vmem:[%s1 + $0x528] sm:$0xff]
  %v214 = vld [vmem:[%s1 + $0x530] sm:$0xff]
  %v215 = vld [vmem:[%s1 + $0x538] sm:$0xff]
  %v216 = vld [vmem:[%s1 + $0x540] sm:$0xff]
  %v217 = vld [vmem:[%s1 + $0x548] sm:$0xff]
  %v218 = vld [vmem:[%s1 + $0x550] sm:$0xff]
  %v219 = vld [vmem:[%s1 + $0x558] sm:$0xff]
  %v220 = vld [vmem:[%s1 + $0x560] sm:$0xff]
  %v221 = vld [vmem:[%s1 + $0x568] sm:$0xff]
  %v222 = vld [vmem:[%s1 + $0x570] sm:$0xff]
  %v223 = vld [vmem:[%s1 + $0x578] sm:$0xff]
  %v224 = vld [vmem:[%s1 + $0x580] sm:$0xff]
  %v225 = vld [vmem:[%s1 + $0x588] sm:$0xff]
  %v226 = vld [vmem:[%s1 + $0x590] sm:$0xff]
  %v227 = vld [vmem:[%s1 + $0x598] sm:$0xff]
  %v228 = vld [vmem:[%s1 + $0x5a0] sm:$0xff]
  %v229 = vld [vmem:[%s1 + $0x5a8] sm:$0xff]
  %v230 = vld [vmem:[%s1 + $0x5b0] sm:$0xff]
  %v231 = vld [vmem:[%s1 + $0x5b8] sm:$0xff]
  %v232 = vld [vmem:[%s1 + $0x5c0] sm:$0xff]
  %v233 = vld [vmem:[%s1 + $0x5c8] sm:$0xff]
  %v234 = vld [vmem:[%s1 + $0x5d0] sm:$0xff]
  %v235 = vld [vmem:[%s1 + $0x5d8] sm:$0xff]
  %v236 = vld [vmem:[%s1 + $0x5e0] sm:$0xff]
  %v237 = vld [vmem:[%s1 + $0x5e8] sm:$0xff]
  %v238 = vld [vmem:[%s1 + $0x5f0] sm:$0xff]
  %v239 = vld [vmem:[%s1 + $0x5f8] sm:$0xff]
  %v240 = vld [vmem:[%s1 + $0x600] sm:$0xff]
  %v241 = vld [vmem:[%s1 + $0x608] sm:$0xff]
  %v242 = vld [vmem:[%s1 + $0x610] sm:$0xff]
  %v243 = vld [vmem:[%s1 + $0x618] sm:$0xff]
  %v244 = vld [vmem:[%s1 + $0x620] sm:$0xff]
  %v245 = vld [vmem:[%s1 + $0x628] sm:$0xff]
  %v246 = vld [vmem:[%s1 + $0x630] sm:$0xff]
  %v247 = vld [vmem:[%s1 + $0x638] sm:$0xff]
  %v248 = vld [vmem:[%s1 + $0x640] sm:$0xff]
  %v249 = vld [vmem:[%s1 + $0x648] sm:$0xff]
  %v250 = vld [vmem:[%s1 + $0x650] sm:$0xff]
  %v251 = vld [vmem:[%s1 + $0x658] sm:$0xff]
  %v252 = vld [vmem:[%s1 + $0x660] sm:$0xff]
  %v253 = vld [vmem:[%s1 + $0x668] sm:$0xff]
  %v254 = vld [vmem:[%s1 + $0x670] sm:$0xff]
  %v255 = vld [vmem:[%s1 + $0x678] sm:$0xff]
  %v256 = vld [vmem:[%s1 + $0x680] sm:$0xff]
  %v257 = vld [vmem:[%s1 + $0x688] sm:$0xff]
  %v258 = vld [vmem:[%s1 + $0x690] sm:$0xff]
  %v259 = vld [vmem:[%s1 + $0x698] sm:$0xff]
  %v260 = vld [vmem:[%s1 + $0x6a0] sm:$0xff]
  %v261 = vld [vmem:[%s1 + $0x6a8] sm:$0xff]
  %v262 = vld [vmem:[%s1 + $0x6b0] sm:$0xff]
  %v263 = vld [vmem:[%s1 + $0x6b8] sm:$0xff]
  %v264 = vld [vmem:[%s1 + $0x6c0] sm:$0xff]
  %v265 = vld [vmem:[%s1 + $0x6c8] sm:$0xff]
  %v266 = vld [vmem:[%s1 + $0x6d0] sm:$0xff]
  %v267 = vld [vmem:[%s1 + $0x6d8] sm:$0xff]
  %v268 = vld [vmem:[%s1 + $0x6e0] sm:$0xff]
  %v269 = vld [vmem:[%s1 + $0x6e8] sm:$0xff]
  %v270 = vld [vmem:[%s1 + $0x6f0] sm:$0xff]
  %v271 = vld [vmem:[%s1 + $0x6f8] sm:$0xff]
  %v272 = vld [vmem:[%s1 + $0x700] sm:$0xff]
  %v273 = vld [vmem:[%s1 + $0x708] sm:$0xff]
  %v274 = vld [vmem:[%s1 + $0x710] sm:$0xff]
  %v275 = vld [vmem:[%s1 + $0x718] sm:$0xff]
  %v276 = vld [vmem:[%s1 + $0x720] sm:$0xff]
  %v277 = vld [vmem:[%s1 + $0x728] sm:$0xff]
  %v278 = vld [vmem:[%s1 + $0x730] sm:$0xff]
  %v279 = vld [vmem:[%s1 + $0x738] sm:$0xff]
  %v280 = vld [vmem:[%s1 + $0x740] sm:$0xff]
  %v281 = vld [vmem:[%s1 + $0x748] sm:$0xff]
  %v282 = vld [vmem:[%s1 + $0x750] sm:$0xff]
  %v283 = vld [vmem:[%s1 + $0x758] sm:$0xff]
  %v284 = vld [vmem:[%s1 + $0x760] sm:$0xff]
  %v285 = vld [vmem:[%s1 + $0x768] sm:$0xff]
  %v286 = vld [vmem:[%s1 + $0x770] sm:$0xff]
  %v287 = vld [vmem:[%s1 + $0x778] sm:$0xff]
  %v288 = vld [vmem:[%s1 + $0x780] sm:$0xff]
  %v289 = vld [vmem:[%s1 + $0x788] sm:$0xff]
  %v290 = vld [vmem:[%s1 + $0x790] sm:$0xff]
  %v291 = vld [vmem:[%s1 + $0x798] sm:$0xff]
  %v292 = vld [vmem:[%s1 + $0x7a0] sm:$0xff]
  %v293 = vld [vmem:[%s1 + $0x7a8] sm:$0xff]
  %v294 = vld [vmem:[%s1 + $0x7b0] sm:$0xff]
  %v295 = vld [vmem:[%s1 + $0x7b8] sm:$0xff]
  %v296 = vld [vmem:[%s1 + $0x7c0] sm:$0xff]
  %v297 = vld [vmem:[%s1 + $0x7c8] sm:$0xff]
  %v298 = vld [vmem:[%s1 + $0x7d0] sm:$0xff]
  %v299 = vld [vmem:[%s1 + $0x7d8] sm:$0xff]
  %v300 = vld [vmem:[%s1 + $0x7e0] sm:$0xff]
  %v301 = vld [vmem:[%s1 + $0x7e8] sm:$0xff]
  %v302 = vld [vmem:[%s1 + $0x7f0] sm:$0xff]
  %v303 = vld [vmem:[%s1 + $0x7f8] sm:$0xff]
  %v304 = vld [vmem:[%s1 + $0x800] sm:$0xff]
  %v305 = vld [vmem:[%s1 + $0x808] sm:$0xff]
  %v306 = vld [vmem:[%s1 + $0x810] sm:$0xff]
  %v307 = vld [vmem:[%s1 + $0x818] sm:$0xff]
  %v308 = vld [vmem:[%s1 + $0x820] sm:$0xff]
  %v309 = vld [vmem:[%s1 + $0x828] sm:$0xff]
  %v310 = vld [vmem:[%s1 + $0x830] sm:$0xff]
  %v311 = vld [vmem:[%s1 + $0x838] sm:$0xff]
  %v312 = vld [vmem:[%s1 + $0x840] sm:$0xff]
  %v313 = vld [vmem:[%s1 + $0x848] sm:$0xff]
  %v314 = vld [vmem:[%s1 + $0x850] sm:$0xff]
  %v315 = vld [vmem:[%s1 + $0x858] sm:$0xff]
  %v316 = vld [vmem:[%s1 + $0x860] sm:$0xff]
  %v317 = vld [vmem:[%s1 + $0x868] sm:$0xff]
  %v318 = vld [vmem:[%s1 + $0x870] sm:$0xff]
  %v319 = vld [vmem:[%s1 + $0x878] sm:$0xff]
  %v320 = vld [vmem:[%s1 + $0x880] sm:$0xff]
  %v321 = vld [vmem:[%s1 + $0x888] sm:$0xff]
  %v322 = vld [vmem:[%s1 + $0x890] sm:$0xff]
  %v323 = vld [vmem:[%s1 + $0x898] sm:$0xff]
  %v324 = vld [vmem:[%s1 + $0x8a0] sm:$0xff]
  %v325 = vld [vmem:[%s1 + $0x8a8] sm:$0xff]
  %v326 = vld [vmem:[%s1 + $0x8b0] sm:$0xff]
  %v327 = vld [vmem:[%s1 + $0x8b8] sm:$0xff]
  %v328 = vld [vmem:[%s1 + $0x8c0] sm:$0xff]
  %v329 = vld [vmem:[%s1 + $0x8c8] sm:$0xff]
  %v330 = vld [vmem:[%s1 + $0x8d0] sm:$0xff]
  %v331 = vld [vmem:[%s1 + $0x8d8] sm:$0xff]
  %v332 = vld [vmem:[%s1 + $0x8e0] sm:$0xff]
  %v333 = vld [vmem:[%s1 + $0x8e8] sm:$0xff]
  %v334 = vld [vmem:[%s1 + $0x8f0] sm:$0xff]
  %v335 = vld [vmem:[%s1 + $0x8f8] sm:$0xff]
  %v336 = vld [vmem:[%s1 + $0x900] sm:$0xff]
  %v337 = vld [vmem:[%s1 + $0x908] sm:$0xff]
  %v338 = vld [vmem:[%s1 + $0x910] sm:$0xff]
  %v339 = vld [vmem:[%s1 + $0x918] sm:$0xff]
  %v340 = vld [vmem:[%s1 + $0x920] sm:$0xff]
  %v341 = vld [vmem:[%s1 + $0x928] sm:$0xff]
  %v342 = vld [vmem:[%s1 + $0x930] sm:$0xff]
  %v343 = vld [vmem:[%s1 + $0x938] sm:$0xff]
  %v344 = vld [vmem:[%s1 + $0x940] sm:$0xff]
  %v345 = vld [vmem:[%s1 + $0x948] sm:$0xff]
  %v346 = vld [vmem:[%s1 + $0x950] sm:$0xff]
  %v347 = vld [vmem:[%s1 + $0x958] sm:$0xff]
  %v348 = vld [vmem:[%s1 + $0x960] sm:$0xff]
  %v349 = vld [vmem:[%s1 + $0x968] sm:$0xff]
  %v350 = vld [vmem:[%s1 + $0x970] sm:$0xff]
  %v351 = vld [vmem:[%s1 + $0x978] sm:$0xff]
  %v352 = vld [vmem:[%s1 + $0x980] sm:$0xff]
  %v353 = vld [vmem:[%s1 + $0x988] sm:$0xff]
  %v354 = vld [vmem:[%s1 + $0x990] sm:$0xff]
  %v355 = vld [vmem:[%s1 + $0x998] sm:$0xff]
  %v356 = vld [vmem:[%s1 + $0x9a0] sm:$0xff]
  %v357 = vld [vmem:[%s1 + $0x9a8] sm:$0xff]
  %v358 = vld [vmem:[%s1 + $0x9b0] sm:$0xff]
  %v359 = vld [vmem:[%s1 + $0x9b8] sm:$0xff]
  %v360 = vld [vmem:[%s1 + $0x9c0] sm:$0xff]
  %v361 = vld [vmem:[%s1 + $0x9c8] sm:$0xff]
  %v362 = vld [vmem:[%s1 + $0x9d0] sm:$0xff]
  %v363 = vld [vmem:[%s1 + $0x9d8] sm:$0xff]
  %v364 = vld [vmem:[%s1 + $0x9e0] sm:$0xff]
  %v365 = vld [vmem:[%s1 + $0x9e8] sm:$0xff]
  %v366 = vld [vmem:[%s1 + $0x9f0] sm:$0xff]
  %v367 = vld [vmem:[%s1 + $0x9f8] sm:$0xff]
  %v368 = vld [vmem:[%s1 + $0xa00] sm:$0xff]
  %v369 = vld [vmem:[%s1 + $0xa08] sm:$0xff]
  %v370 = vld [vmem:[%s1 + $0xa10] sm:$0xff]
  %v371 = vld [vmem:[%s1 + $0xa18] sm:$0xff]
  %v372 = vld [vmem:[%s1 + $0xa20] sm:$0xff]
  %v373 = vld [vmem:[%s1 + $0xa28] sm:$0xff]
  %v374 = vld [vmem:[%s1 + $0xa30] sm:$0xff]
  %v375 = vld [vmem:[%s1 + $0xa38] sm:$0xff]
  %v376 = vld [vmem:[%s1 + $0xa40] sm:$0xff]
  %v377 = vld [vmem:[%s1 + $0xa48] sm:$0xff]
  %v378 = vld [vmem:[%s1 + $0xa50] sm:$0xff]
  %v379 = vld [vmem:[%s1 + $0xa58] sm:$0xff]
  %v380 = vld [vmem:[%s1 + $0xa60] sm:$0xff]
  %v381 = vld [vmem:[%s1 + $0xa68] sm:$0xff]
  %v382 = vld [vmem:[%s1 + $0xa70] sm:$0xff]
  %v383 = vld [vmem:[%s1 + $0xa78] sm:$0xff]
  %v384 = vld [vmem:[%s1 + $0xa80] sm:$0xff]
  %v385 = vld [vmem:[%s1 + $0xa88] sm:$0xff]
  %v386 = vld [vmem:[%s1 + $0xa90] sm:$0xff]
  %v387 = vld [vmem:[%s1 + $0xa98] sm:$0xff]
  %v388 = vld [vmem:[%s1 + $0xaa0] sm:$0xff]
  %v389 = vld [vmem:[%s1 + $0xaa8] sm:$0xff]
  %v390 = vld [vmem:[%s1 + $0xab0] sm:$0xff]
  %v391 = vld [vmem:[%s1 + $0xab8] sm:$0xff]
  %v392 = vld [vmem:[%s1 + $0xac0] sm:$0xff]
  %v393 = vld [vmem:[%s1 + $0xac8] sm:$0xff]
  %v394 = vld [vmem:[%s1 + $0xad0] sm:$0xff]
  %v395 = vld [vmem:[%s1 + $0xad8] sm:$0xff]
  %v396 = vld [vmem:[%s1 + $0xae0] sm:$0xff]
  %v397 = vld [vmem:[%s1 + $0xae8] sm:$0xff]
  %v398 = vld [vmem:[%s1 + $0xaf0] sm:$0xff]
  %v399 = vld [vmem:[%s1 + $0xaf8] sm:$0xff]
  %v400 = vld [vmem:[%s1 + $0xb00] sm:$0xff]
  %v401 = vld [vmem:[%s1 + $0xb08] sm:$0xff]
  %v402 = vld [vmem:[%s1 + $0xb10] sm:$0xff]
  %v403 = vld [vmem:[%s1 + $0xb18] sm:$0xff]
  %v404 = vld [vmem:[%s1 + $0xb20] sm:$0xff]
  %v405 = vld [vmem:[%s1 + $0xb28] sm:$0xff]
  %v406 = vld [vmem:[%s1 + $0xb30] sm:$0xff]
  %v407 = vld [vmem:[%s1 + $0xb38] sm:$0xff]
  %v408 = vld [vmem:[%s1 + $0xb40] sm:$0xff]
  %v409 = vld [vmem:[%s1 + $0xb48] sm:$0xff]
  %v410 = vld [vmem:[%s1 + $0xb50] sm:$0xff]
  %v411 = vld [vmem:[%s1 + $0xb58] sm:$0xff]
  %v412 = vld [vmem:[%s1 + $0xb60] sm:$0xff]
  %v413 = vld [vmem:[%s1 + $0xb68] sm:$0xff]
  %v414 = vld [vmem:[%s1 + $0xb70] sm:$0xff]
  %v415 = vld [vmem:[%s1 + $0xb78] sm:$0xff]
  %v416 = vld [vmem:[%s1 + $0xb80] sm:$0xff]
  %v417 = vld [vmem:[%s1 + $0xb88] sm:$0xff]
  %v418 = vld [vmem:[%s1 + $0xb90] sm:$0xff]
  %v419 = vld [vmem:[%s1 + $0xb98] sm:$0xff]
  %v420 = vld [vmem:[%s1 + $0xba0] sm:$0xff]
  %v421 = vld [vmem:[%s1 + $0xba8] sm:$0xff]
  %v422 = vld [vmem:[%s1 + $0xbb0] sm:$0xff]
  %v423 = vld [vmem:[%s1 + $0xbb8] sm:$0xff]
  %v424 = vld [vmem:[%s1 + $0xbc0] sm:$0xff]
  %v425 = vld [vmem:[%s1 + $0xbc8] sm:$0xff]
  %v426 = vld [vmem:[%s1 + $0xbd0] sm:$0xff]
  %v427 = vld [vmem:[%s1 + $0xbd8] sm:$0xff]
  %v428 = vld [vmem:[%s1 + $0xbe0] sm:$0xff]
  %v429 = vld [vmem:[%s1 + $0xbe8] sm:$0xff]
  %v430 = vld [vmem:[%s1 + $0xbf0] sm:$0xff]
  %v431 = vld [vmem:[%s1 + $0xbf8] sm:$0xff]
  %v432 = vld [vmem:[%s1 + $0xc00] sm:$0xff]
  %v433 = vld [vmem:[%s1 + $0xc08] sm:$0xff]
  %v434 = vld [vmem:[%s1 + $0xc10] sm:$0xff]
  %v435 = vld [vmem:[%s1 + $0xc18] sm:$0xff]
  %v436 = vld [vmem:[%s1 + $0xc20] sm:$0xff]
  %v437 = vld [vmem:[%s1 + $0xc28] sm:$0xff]
  %v438 = vld [vmem:[%s1 + $0xc30] sm:$0xff]
  %v439 = vld [vmem:[%s1 + $0xc38] sm:$0xff]
  %v440 = vld [vmem:[%s1 + $0xc40] sm:$0xff]
  %v441 = vld [vmem:[%s1 + $0xc48] sm:$0xff]
  %v442 = vld [vmem:[%s1 + $0xc50] sm:$0xff]
  %v443 = vld [vmem:[%s1 + $0xc58] sm:$0xff]
  %v444 = vld [vmem:[%s1 + $0xc60] sm:$0xff]
  %v445 = vld [vmem:[%s1 + $0xc68] sm:$0xff]
  %v446 = vld [vmem:[%s1 + $0xc70] sm:$0xff]
  %v447 = vld [vmem:[%s1 + $0xc78] sm:$0xff]
  %v448 = vld [vmem:[%s1 + $0xc80] sm:$0xff]
  %v449 = vld [vmem:[%s1 + $0xc88] sm:$0xff]
  %v450 = vld [vmem:[%s1 + $0xc90] sm:$0xff]
  %v451 = vld [vmem:[%s1 + $0xc98] sm:$0xff]
  %v452 = vld [vmem:[%s1 + $0xca0] sm:$0xff]
  %v453 = vld [vmem:[%s1 + $0xca8] sm:$0xff]
  %v454 = vld [vmem:[%s1 + $0xcb0] sm:$0xff]
  %v455 = vld [vmem:[%s1 + $0xcb8] sm:$0xff]
  %v456 = vld [vmem:[%s1 + $0xcc0] sm:$0xff]
  %v457 = vld [vmem:[%s1 + $0xcc8] sm:$0xff]
  %v458 = vld [vmem:[%s1 + $0xcd0] sm:$0xff]
  %v459 = vld [vmem:[%s1 + $0xcd8] sm:$0xff]
  %v460 = vld [vmem:[%s1 + $0xce0] sm:$0xff]
  %v461 = vld [vmem:[%s1 + $0xce8] sm:$0xff]
  %v462 = vld [vmem:[%s1 + $0xcf0] sm:$0xff]
  %v463 = vld [vmem:[%s1 + $0xcf8] sm:$0xff]
  %v464 = vld [vmem:[%s1 + $0xd00] sm:$0xff]
  %v465 = vld [vmem:[%s1 + $0xd08] sm:$0xff]
  %v466 = vld [vmem:[%s1 + $0xd10] sm:$0xff]
  %v467 = vld [vmem:[%s1 + $0xd18] sm:$0xff]
  %v468 = vld [vmem:[%s1 + $0xd20] sm:$0xff]
  %v469 = vld [vmem:[%s1 + $0xd28] sm:$0xff]
  %v470 = vld [vmem:[%s1 + $0xd30] sm:$0xff]
  %v471 = vld [vmem:[%s1 + $0xd38] sm:$0xff]
  %v472 = vld [vmem:[%s1 + $0xd40] sm:$0xff]
  %v473 = vld [vmem:[%s1 + $0xd48] sm:$0xff]
  %v474 = vld [vmem:[%s1 + $0xd50] sm:$0xff]
  %v475 = vld [vmem:[%s1 + $0xd58] sm:$0xff]
  %v476 = vld [vmem:[%s1 + $0xd60] sm:$0xff]
  %v477 = vld [vmem:[%s1 + $0xd68] sm:$0xff]
  %v478 = vld [vmem:[%s1 + $0xd70] sm:$0xff]
  %v479 = vld [vmem:[%s1 + $0xd78] sm:$0xff]
  %v480 = vld [vmem:[%s1 + $0xd80] sm:$0xff]
  %v481 = vld [vmem:[%s1 + $0xd88] sm:$0xff]
  %v482 = vld [vmem:[%s1 + $0xd90] sm:$0xff]
  %v483 = vld [vmem:[%s1 + $0xd98] sm:$0xff]
  %v484 = vld [vmem:[%s1 + $0xda0] sm:$0xff]
  %v485 = vld [vmem:[%s1 + $0xda8] sm:$0xff]
  %v486 = vld [vmem:[%s1 + $0xdb0] sm:$0xff]
  %v487 = vld [vmem:[%s1 + $0xdb8] sm:$0xff]
  %v488 = vld [vmem:[%s1 + $0xdc0] sm:$0xff]
  %v489 = vld [vmem:[%s1 + $0xdc8] sm:$0xff]
  %v490 = vld [vmem:[%s1 + $0xdd0] sm:$0xff]
  %v491 = vld [vmem:[%s1 + $0xdd8] sm:$0xff]
  %v492 = vld [vmem:[%s1 + $0xde0] sm:$0xff]
  %v493 = vld [vmem:[%s1 + $0xde8] sm:$0xff]
  %v494 = vld [vmem:[%s1 + $0xdf0] sm:$0xff]
  %v495 = vld [vmem:[%s1 + $0xdf8] sm:$0xff]
  %v496 = vld [vmem:[%s1 + $0xe00] sm:$0xff]
  %v497 = vld [vmem:[%s1 + $0xe08] sm:$0xff]
  %v498 = vld [vmem:[%s1 + $0xe10] sm:$0xff]
  %v499 = vld [vmem:[%s1 + $0xe18] sm:$0xff]
  %v500 = vld [vmem:[%s1 + $0xe20] sm:$0xff]
  %v501 = vld [vmem:[%s1 + $0xe28] sm:$0xff]
  %v502 = vld [vmem:[%s1 + $0xe30] sm:$0xff]
  %v503 = vld [vmem:[%s1 + $0xe38] sm:$0xff]
  %v504 = vld [vmem:[%s1 + $0xe40] sm:$0xff]
  %v505 = vld [vmem:[%s1 + $0xe48] sm:$0xff]
  %v506 = vld [vmem:[%s1 + $0xe50] sm:$0xff]
  %v507 = vld [vmem:[%s1 + $0xe58] sm:$0xff]
  %v508 = vld [vmem:[%s1 + $0xe60] sm:$0xff]
  %v509 = vld [vmem:[%s1 + $0xe68] sm:$0xff]
  %v510 = vld [vmem:[%s1 + $0xe70] sm:$0xff]
  %v511 = vld [vmem:[%s1 + $0xe78] sm:$0xff]
  %v512 = vld [vmem:[%s1 + $0xe80] sm:$0xff]
  %v513 = vld [vmem:[%s1 + $0xe88] sm:$0xff]
  %v514 = vld [vmem:[%s1 + $0xe90] sm:$0xff]
  %v515 = vld [vmem:[%s1 + $0xe98] sm:$0xff]
  %v516 = vld [vmem:[%s1 + $0xea0] sm:$0xff]
  %v517 = vld [vmem:[%s1 + $0xea8] sm:$0xff]
  %v518 = vld [vmem:[%s1 + $0xeb0] sm:$0xff]
  %v519 = vld [vmem:[%s1 + $0xeb8] sm:$0xff]
  %v520 = vld [vmem:[%s1 + $0xec0] sm:$0xff]
  %v521 = vld [vmem:[%s1 + $0xec8] sm:$0xff]
  %v522 = vld [vmem:[%s1 + $0xed0] sm:$0xff]
  %v523 = vld [vmem:[%s1 + $0xed8] sm:$0xff]
  %v524 = vld [vmem:[%s1 + $0xee0] sm:$0xff]
  %v525 = vld [vmem:[%s1 + $0xee8] sm:$0xff]
  %v526 = vld [vmem:[%s1 + $0xef0] sm:$0xff]
  %v527 = vld [vmem:[%s1 + $0xef8] sm:$0xff]
  %v528 = vld [vmem:[%s1 + $0xf00] sm:$0xff]
  %v529 = vld [vmem:[%s1 + $0xf08] sm:$0xff]
  %v530 = vld [vmem:[%s1 + $0xf10] sm:$0xff]
  %v531 = vld [vmem:[%s1 + $0xf18] sm:$0xff]
  %v532 = vld [vmem:[%s1 + $0xf20] sm:$0xff]
  %v533 = vld [vmem:[%s1 + $0xf28] sm:$0xff]
  %v534 = vld [vmem:[%s1 + $0xf30] sm:$0xff]
  %v535 = vld [vmem:[%s1 + $0xf38] sm:$0xff]
  %v536 = vld [vmem:[%s1 + $0xf40] sm:$0xff]
  %v537 = vld [vmem:[%s1 + $0xf48] sm:$0xff]
  %v538 = vld [vmem:[%s1 + $0xf50] sm:$0xff]
  %v539 = vld [vmem:[%s1 + $0xf58] sm:$0xff]
  %v540 = vld [vmem:[%s1 + $0xf60] sm:$0xff]
  %v541 = vld [vmem:[%s1 + $0xf68] sm:$0xff]
  %v542 = vld [vmem:[%s1 + $0xf70] sm:$0xff]
  %v543 = vld [vmem:[%s1 + $0xf78] sm:$0xff]
  %v544 = vld [vmem:[%s1 + $0xf80] sm:$0xff]
  %v545 = vld [vmem:[%s1 + $0xf88] sm:$0xff]
  %v546 = vld [vmem:[%s1 + $0xf90] sm:$0xff]
  %v547 = vld [vmem:[%s1 + $0xf98] sm:$0xff]
  %v548 = vld [vmem:[%s1 + $0xfa0] sm:$0xff]
  %v549 = vld [vmem:[%s1 + $0xfa8] sm:$0xff]
  %v550 = vld [vmem:[%s1 + $0xfb0] sm:$0xff]
  %v551 = vld [vmem:[%s1 + $0xfb8] sm:$0xff]
  %v552 = vld [vmem:[%s1 + $0xfc0] sm:$0xff]
  %v553 = vld [vmem:[%s1 + $0xfc8] sm:$0xff]
  %v554 = vld [vmem:[%s1 + $0xfd0] sm:$0xff]
  %v555 = vld [vmem:[%s1 + $0xfd8] sm:$0xff]
  %v556 = vld [vmem:[%s1 + $0xfe0] sm:$0xff]
  %v557 = vld [vmem:[%s1 + $0xfe8] sm:$0xff]
  %v558 = vld [vmem:[%s1 + $0xff0] sm:$0xff]
  %v559 = vld [vmem:[%s1 + $0xff8] sm:$0xff]
  %v560 = vunpack.c.l.bf16 %v48
  %v561 = vunpack.c.h.bf16 %v48
  %v562 = vunpack.c.l.bf16 %v49
  %v563 = vunpack.c.h.bf16 %v49
  %v564 = vunpack.c.l.bf16 %v50
  %v565 = vunpack.c.h.bf16 %v50
  %v566 = vunpack.c.l.bf16 %v51
  %v567 = vunpack.c.h.bf16 %v51
  %v568 = vunpack.c.l.bf16 %v52
  %v569 = vunpack.c.h.bf16 %v52
  %v570 = vunpack.c.l.bf16 %v53
  %v571 = vunpack.c.h.bf16 %v53
  %v572 = vunpack.c.l.bf16 %v54
  %v573 = vunpack.c.h.bf16 %v54
  %v574 = vunpack.c.l.bf16 %v55
  %v575 = vunpack.c.h.bf16 %v55
  %v576 = vunpack.c.l.bf16 %v56
  %v577 = vunpack.c.h.bf16 %v56
  %v578 = vunpack.c.l.bf16 %v57
  %v579 = vunpack.c.h.bf16 %v57
  %v580 = vunpack.c.l.bf16 %v58
  %v581 = vunpack.c.h.bf16 %v58
  %v582 = vunpack.c.l.bf16 %v59
  %v583 = vunpack.c.h.bf16 %v59
  %v584 = vunpack.c.l.bf16 %v60
  %v585 = vunpack.c.h.bf16 %v60
  %v586 = vunpack.c.l.bf16 %v61
  %v587 = vunpack.c.h.bf16 %v61
  %v588 = vunpack.c.l.bf16 %v62
  %v589 = vunpack.c.h.bf16 %v62
  %v590 = vunpack.c.l.bf16 %v63
  %v591 = vunpack.c.h.bf16 %v63
  %v592 = vunpack.c.l.bf16 %v64
  %v593 = vunpack.c.h.bf16 %v64
  %v594 = vunpack.c.l.bf16 %v65
  %v595 = vunpack.c.h.bf16 %v65
  %v596 = vunpack.c.l.bf16 %v66
  %v597 = vunpack.c.h.bf16 %v66
  %v598 = vunpack.c.l.bf16 %v67
  %v599 = vunpack.c.h.bf16 %v67
  %v600 = vunpack.c.l.bf16 %v68
  %v601 = vunpack.c.h.bf16 %v68
  %v602 = vunpack.c.l.bf16 %v69
  %v603 = vunpack.c.h.bf16 %v69
  %v604 = vunpack.c.l.bf16 %v70
  %v605 = vunpack.c.h.bf16 %v70
  %v606 = vunpack.c.l.bf16 %v71
  %v607 = vunpack.c.h.bf16 %v71
  %v608 = vunpack.c.l.bf16 %v72
  %v609 = vunpack.c.h.bf16 %v72
  %v610 = vunpack.c.l.bf16 %v73
  %v611 = vunpack.c.h.bf16 %v73
  %v612 = vunpack.c.l.bf16 %v74
  %v613 = vunpack.c.h.bf16 %v74
  %v614 = vunpack.c.l.bf16 %v75
  %v615 = vunpack.c.h.bf16 %v75
  %v616 = vunpack.c.l.bf16 %v76
  %v617 = vunpack.c.h.bf16 %v76
  %v618 = vunpack.c.l.bf16 %v77
  %v619 = vunpack.c.h.bf16 %v77
  %v620 = vunpack.c.l.bf16 %v78
  %v621 = vunpack.c.h.bf16 %v78
  %v622 = vunpack.c.l.bf16 %v79
  %v623 = vunpack.c.h.bf16 %v79
  %v624 = vunpack.c.l.bf16 %v80
  %v625 = vunpack.c.h.bf16 %v80
  %v626 = vunpack.c.l.bf16 %v81
  %v627 = vunpack.c.h.bf16 %v81
  %v628 = vunpack.c.l.bf16 %v82
  %v629 = vunpack.c.h.bf16 %v82
  %v630 = vunpack.c.l.bf16 %v83
  %v631 = vunpack.c.h.bf16 %v83
  %v632 = vunpack.c.l.bf16 %v84
  %v633 = vunpack.c.h.bf16 %v84
  %v634 = vunpack.c.l.bf16 %v85
  %v635 = vunpack.c.h.bf16 %v85
  %v636 = vunpack.c.l.bf16 %v86
  %v637 = vunpack.c.h.bf16 %v86
  %v638 = vunpack.c.l.bf16 %v87
  %v639 = vunpack.c.h.bf16 %v87
  %v640 = vunpack.c.l.bf16 %v88
  %v641 = vunpack.c.h.bf16 %v88
  %v642 = vunpack.c.l.bf16 %v89
  %v643 = vunpack.c.h.bf16 %v89
  %v644 = vunpack.c.l.bf16 %v90
  %v645 = vunpack.c.h.bf16 %v90
  %v646 = vunpack.c.l.bf16 %v91
  %v647 = vunpack.c.h.bf16 %v91
  %v648 = vunpack.c.l.bf16 %v92
  %v649 = vunpack.c.h.bf16 %v92
  %v650 = vunpack.c.l.bf16 %v93
  %v651 = vunpack.c.h.bf16 %v93
  %v652 = vunpack.c.l.bf16 %v94
  %v653 = vunpack.c.h.bf16 %v94
  %v654 = vunpack.c.l.bf16 %v95
  %v655 = vunpack.c.h.bf16 %v95
  %v656 = vunpack.c.l.bf16 %v96
  %v657 = vunpack.c.h.bf16 %v96
  %v658 = vunpack.c.l.bf16 %v97
  %v659 = vunpack.c.h.bf16 %v97
  %v660 = vunpack.c.l.bf16 %v98
  %v661 = vunpack.c.h.bf16 %v98
  %v662 = vunpack.c.l.bf16 %v99
  %v663 = vunpack.c.h.bf16 %v99
  %v664 = vunpack.c.l.bf16 %v100
  %v665 = vunpack.c.h.bf16 %v100
  %v666 = vunpack.c.l.bf16 %v101
  %v667 = vunpack.c.h.bf16 %v101
  %v668 = vunpack.c.l.bf16 %v102
  %v669 = vunpack.c.h.bf16 %v102
  %v670 = vunpack.c.l.bf16 %v103
  %v671 = vunpack.c.h.bf16 %v103
  %v672 = vunpack.c.l.bf16 %v104
  %v673 = vunpack.c.h.bf16 %v104
  %v674 = vunpack.c.l.bf16 %v105
  %v675 = vunpack.c.h.bf16 %v105
  %v676 = vunpack.c.l.bf16 %v106
  %v677 = vunpack.c.h.bf16 %v106
  %v678 = vunpack.c.l.bf16 %v107
  %v679 = vunpack.c.h.bf16 %v107
  %v680 = vunpack.c.l.bf16 %v108
  %v681 = vunpack.c.h.bf16 %v108
  %v682 = vunpack.c.l.bf16 %v109
  %v683 = vunpack.c.h.bf16 %v109
  %v684 = vunpack.c.l.bf16 %v110
  %v685 = vunpack.c.h.bf16 %v110
  %v686 = vunpack.c.l.bf16 %v111
  %v687 = vunpack.c.h.bf16 %v111
  %v688 = vunpack.c.l.bf16 %v112
  %v689 = vunpack.c.h.bf16 %v112
  %v690 = vunpack.c.l.bf16 %v113
  %v691 = vunpack.c.h.bf16 %v113
  %v692 = vunpack.c.l.bf16 %v114
  %v693 = vunpack.c.h.bf16 %v114
  %v694 = vunpack.c.l.bf16 %v115
  %v695 = vunpack.c.h.bf16 %v115
  %v696 = vunpack.c.l.bf16 %v116
  %v697 = vunpack.c.h.bf16 %v116
  %v698 = vunpack.c.l.bf16 %v117
  %v699 = vunpack.c.h.bf16 %v117
  %v700 = vunpack.c.l.bf16 %v118
  %v701 = vunpack.c.h.bf16 %v118
  %v702 = vunpack.c.l.bf16 %v119
  %v703 = vunpack.c.h.bf16 %v119
  %v704 = vunpack.c.l.bf16 %v120
  %v705 = vunpack.c.h.bf16 %v120
  %v706 = vunpack.c.l.bf16 %v121
  %v707 = vunpack.c.h.bf16 %v121
  %v708 = vunpack.c.l.bf16 %v122
  %v709 = vunpack.c.h.bf16 %v122
  %v710 = vunpack.c.l.bf16 %v123
  %v711 = vunpack.c.h.bf16 %v123
  %v712 = vunpack.c.l.bf16 %v124
  %v713 = vunpack.c.h.bf16 %v124
  %v714 = vunpack.c.l.bf16 %v125
  %v715 = vunpack.c.h.bf16 %v125
  %v716 = vunpack.c.l.bf16 %v126
  %v717 = vunpack.c.h.bf16 %v126
  %v718 = vunpack.c.l.bf16 %v127
  %v719 = vunpack.c.h.bf16 %v127
  %v720 = vunpack.c.l.bf16 %v128
  %v721 = vunpack.c.h.bf16 %v128
  %v722 = vunpack.c.l.bf16 %v129
  %v723 = vunpack.c.h.bf16 %v129
  %v724 = vunpack.c.l.bf16 %v130
  %v725 = vunpack.c.h.bf16 %v130
  %v726 = vunpack.c.l.bf16 %v131
  %v727 = vunpack.c.h.bf16 %v131
  %v728 = vunpack.c.l.bf16 %v132
  %v729 = vunpack.c.h.bf16 %v132
  %v730 = vunpack.c.l.bf16 %v133
  %v731 = vunpack.c.h.bf16 %v133
  %v732 = vunpack.c.l.bf16 %v134
  %v733 = vunpack.c.h.bf16 %v134
  %v734 = vunpack.c.l.bf16 %v135
  %v735 = vunpack.c.h.bf16 %v135
  %v736 = vunpack.c.l.bf16 %v136
  %v737 = vunpack.c.h.bf16 %v136
  %v738 = vunpack.c.l.bf16 %v137
  %v739 = vunpack.c.h.bf16 %v137
  %v740 = vunpack.c.l.bf16 %v138
  %v741 = vunpack.c.h.bf16 %v138
  %v742 = vunpack.c.l.bf16 %v139
  %v743 = vunpack.c.h.bf16 %v139
  %v744 = vunpack.c.l.bf16 %v140
  %v745 = vunpack.c.h.bf16 %v140
  %v746 = vunpack.c.l.bf16 %v141
  %v747 = vunpack.c.h.bf16 %v141
  %v748 = vunpack.c.l.bf16 %v142
  %v749 = vunpack.c.h.bf16 %v142
  %v750 = vunpack.c.l.bf16 %v143
  %v751 = vunpack.c.h.bf16 %v143
  %v752 = vunpack.c.l.bf16 %v144
  %v753 = vunpack.c.h.bf16 %v144
  %v754 = vunpack.c.l.bf16 %v145
  %v755 = vunpack.c.h.bf16 %v145
  %v756 = vunpack.c.l.bf16 %v146
  %v757 = vunpack.c.h.bf16 %v146
  %v758 = vunpack.c.l.bf16 %v147
  %v759 = vunpack.c.h.bf16 %v147
  %v760 = vunpack.c.l.bf16 %v148
  %v761 = vunpack.c.h.bf16 %v148
  %v762 = vunpack.c.l.bf16 %v149
  %v763 = vunpack.c.h.bf16 %v149
  %v764 = vunpack.c.l.bf16 %v150
  %v765 = vunpack.c.h.bf16 %v150
  %v766 = vunpack.c.l.bf16 %v151
  %v767 = vunpack.c.h.bf16 %v151
  %v768 = vunpack.c.l.bf16 %v152
  %v769 = vunpack.c.h.bf16 %v152
  %v770 = vunpack.c.l.bf16 %v153
  %v771 = vunpack.c.h.bf16 %v153
  %v772 = vunpack.c.l.bf16 %v154
  %v773 = vunpack.c.h.bf16 %v154
  %v774 = vunpack.c.l.bf16 %v155
  %v775 = vunpack.c.h.bf16 %v155
  %v776 = vunpack.c.l.bf16 %v156
  %v777 = vunpack.c.h.bf16 %v156
  %v778 = vunpack.c.l.bf16 %v157
  %v779 = vunpack.c.h.bf16 %v157
  %v780 = vunpack.c.l.bf16 %v158
  %v781 = vunpack.c.h.bf16 %v158
  %v782 = vunpack.c.l.bf16 %v159
  %v783 = vunpack.c.h.bf16 %v159
  %v784 = vunpack.c.l.bf16 %v160
  %v785 = vunpack.c.h.bf16 %v160
  %v786 = vunpack.c.l.bf16 %v161
  %v787 = vunpack.c.h.bf16 %v161
  %v788 = vunpack.c.l.bf16 %v162
  %v789 = vunpack.c.h.bf16 %v162
  %v790 = vunpack.c.l.bf16 %v163
  %v791 = vunpack.c.h.bf16 %v163
  %v792 = vunpack.c.l.bf16 %v164
  %v793 = vunpack.c.h.bf16 %v164
  %v794 = vunpack.c.l.bf16 %v165
  %v795 = vunpack.c.h.bf16 %v165
  %v796 = vunpack.c.l.bf16 %v166
  %v797 = vunpack.c.h.bf16 %v166
  %v798 = vunpack.c.l.bf16 %v167
  %v799 = vunpack.c.h.bf16 %v167
  %v800 = vunpack.c.l.bf16 %v168
  %v801 = vunpack.c.h.bf16 %v168
  %v802 = vunpack.c.l.bf16 %v169
  %v803 = vunpack.c.h.bf16 %v169
  %v804 = vunpack.c.l.bf16 %v170
  %v805 = vunpack.c.h.bf16 %v170
  %v806 = vunpack.c.l.bf16 %v171
  %v807 = vunpack.c.h.bf16 %v171
  %v808 = vunpack.c.l.bf16 %v172
  %v809 = vunpack.c.h.bf16 %v172
  %v810 = vunpack.c.l.bf16 %v173
  %v811 = vunpack.c.h.bf16 %v173
  %v812 = vunpack.c.l.bf16 %v174
  %v813 = vunpack.c.h.bf16 %v174
  %v814 = vunpack.c.l.bf16 %v175
  %v815 = vunpack.c.h.bf16 %v175
  %v816 = vunpack.c.l.bf16 %v176
  %v817 = vunpack.c.h.bf16 %v176
  %v818 = vunpack.c.l.bf16 %v177
  %v819 = vunpack.c.h.bf16 %v177
  %v820 = vunpack.c.l.bf16 %v178
  %v821 = vunpack.c.h.bf16 %v178
  %v822 = vunpack.c.l.bf16 %v179
  %v823 = vunpack.c.h.bf16 %v179
  %v824 = vunpack.c.l.bf16 %v180
  %v825 = vunpack.c.h.bf16 %v180
  %v826 = vunpack.c.l.bf16 %v181
  %v827 = vunpack.c.h.bf16 %v181
  %v828 = vunpack.c.l.bf16 %v182
  %v829 = vunpack.c.h.bf16 %v182
  %v830 = vunpack.c.l.bf16 %v183
  %v831 = vunpack.c.h.bf16 %v183
  %v832 = vunpack.c.l.bf16 %v184
  %v833 = vunpack.c.h.bf16 %v184
  %v834 = vunpack.c.l.bf16 %v185
  %v835 = vunpack.c.h.bf16 %v185
  %v836 = vunpack.c.l.bf16 %v186
  %v837 = vunpack.c.h.bf16 %v186
  %v838 = vunpack.c.l.bf16 %v187
  %v839 = vunpack.c.h.bf16 %v187
  %v840 = vunpack.c.l.bf16 %v188
  %v841 = vunpack.c.h.bf16 %v188
  %v842 = vunpack.c.l.bf16 %v189
  %v843 = vunpack.c.h.bf16 %v189
  %v844 = vunpack.c.l.bf16 %v190
  %v845 = vunpack.c.h.bf16 %v190
  %v846 = vunpack.c.l.bf16 %v191
  %v847 = vunpack.c.h.bf16 %v191
  %v848 = vunpack.c.l.bf16 %v192
  %v849 = vunpack.c.h.bf16 %v192
  %v850 = vunpack.c.l.bf16 %v193
  %v851 = vunpack.c.h.bf16 %v193
  %v852 = vunpack.c.l.bf16 %v194
  %v853 = vunpack.c.h.bf16 %v194
  %v854 = vunpack.c.l.bf16 %v195
  %v855 = vunpack.c.h.bf16 %v195
  %v856 = vunpack.c.l.bf16 %v196
  %v857 = vunpack.c.h.bf16 %v196
  %v858 = vunpack.c.l.bf16 %v197
  %v859 = vunpack.c.h.bf16 %v197
  %v860 = vunpack.c.l.bf16 %v198
  %v861 = vunpack.c.h.bf16 %v198
  %v862 = vunpack.c.l.bf16 %v199
  %v863 = vunpack.c.h.bf16 %v199
  %v864 = vunpack.c.l.bf16 %v200
  %v865 = vunpack.c.h.bf16 %v200
  %v866 = vunpack.c.l.bf16 %v201
  %v867 = vunpack.c.h.bf16 %v201
  %v868 = vunpack.c.l.bf16 %v202
  %v869 = vunpack.c.h.bf16 %v202
  %v870 = vunpack.c.l.bf16 %v203
  %v871 = vunpack.c.h.bf16 %v203
  %v872 = vunpack.c.l.bf16 %v204
  %v873 = vunpack.c.h.bf16 %v204
  %v874 = vunpack.c.l.bf16 %v205
  %v875 = vunpack.c.h.bf16 %v205
  %v876 = vunpack.c.l.bf16 %v206
  %v877 = vunpack.c.h.bf16 %v206
  %v878 = vunpack.c.l.bf16 %v207
  %v879 = vunpack.c.h.bf16 %v207
  %v880 = vunpack.c.l.bf16 %v208
  %v881 = vunpack.c.h.bf16 %v208
  %v882 = vunpack.c.l.bf16 %v209
  %v883 = vunpack.c.h.bf16 %v209
  %v884 = vunpack.c.l.bf16 %v210
  %v885 = vunpack.c.h.bf16 %v210
  %v886 = vunpack.c.l.bf16 %v211
  %v887 = vunpack.c.h.bf16 %v211
  %v888 = vunpack.c.l.bf16 %v212
  %v889 = vunpack.c.h.bf16 %v212
  %v890 = vunpack.c.l.bf16 %v213
  %v891 = vunpack.c.h.bf16 %v213
  %v892 = vunpack.c.l.bf16 %v214
  %v893 = vunpack.c.h.bf16 %v214
  %v894 = vunpack.c.l.bf16 %v215
  %v895 = vunpack.c.h.bf16 %v215
  %v896 = vunpack.c.l.bf16 %v216
  %v897 = vunpack.c.h.bf16 %v216
  %v898 = vunpack.c.l.bf16 %v217
  %v899 = vunpack.c.h.bf16 %v217
  %v900 = vunpack.c.l.bf16 %v218
  %v901 = vunpack.c.h.bf16 %v218
  %v902 = vunpack.c.l.bf16 %v219
  %v903 = vunpack.c.h.bf16 %v219
  %v904 = vunpack.c.l.bf16 %v220
  %v905 = vunpack.c.h.bf16 %v220
  %v906 = vunpack.c.l.bf16 %v221
  %v907 = vunpack.c.h.bf16 %v221
  %v908 = vunpack.c.l.bf16 %v222
  %v909 = vunpack.c.h.bf16 %v222
  %v910 = vunpack.c.l.bf16 %v223
  %v911 = vunpack.c.h.bf16 %v223
  %v912 = vunpack.c.l.bf16 %v224
  %v913 = vunpack.c.h.bf16 %v224
  %v914 = vunpack.c.l.bf16 %v225
  %v915 = vunpack.c.h.bf16 %v225
  %v916 = vunpack.c.l.bf16 %v226
  %v917 = vunpack.c.h.bf16 %v226
  %v918 = vunpack.c.l.bf16 %v227
  %v919 = vunpack.c.h.bf16 %v227
  %v920 = vunpack.c.l.bf16 %v228
  %v921 = vunpack.c.h.bf16 %v228
  %v922 = vunpack.c.l.bf16 %v229
  %v923 = vunpack.c.h.bf16 %v229
  %v924 = vunpack.c.l.bf16 %v230
  %v925 = vunpack.c.h.bf16 %v230
  %v926 = vunpack.c.l.bf16 %v231
  %v927 = vunpack.c.h.bf16 %v231
  %v928 = vunpack.c.l.bf16 %v232
  %v929 = vunpack.c.h.bf16 %v232
  %v930 = vunpack.c.l.bf16 %v233
  %v931 = vunpack.c.h.bf16 %v233
  %v932 = vunpack.c.l.bf16 %v234
  %v933 = vunpack.c.h.bf16 %v234
  %v934 = vunpack.c.l.bf16 %v235
  %v935 = vunpack.c.h.bf16 %v235
  %v936 = vunpack.c.l.bf16 %v236
  %v937 = vunpack.c.h.bf16 %v236
  %v938 = vunpack.c.l.bf16 %v237
  %v939 = vunpack.c.h.bf16 %v237
  %v940 = vunpack.c.l.bf16 %v238
  %v941 = vunpack.c.h.bf16 %v238
  %v942 = vunpack.c.l.bf16 %v239
  %v943 = vunpack.c.h.bf16 %v239
  %v944 = vunpack.c.l.bf16 %v240
  %v945 = vunpack.c.h.bf16 %v240
  %v946 = vunpack.c.l.bf16 %v241
  %v947 = vunpack.c.h.bf16 %v241
  %v948 = vunpack.c.l.bf16 %v242
  %v949 = vunpack.c.h.bf16 %v242
  %v950 = vunpack.c.l.bf16 %v243
  %v951 = vunpack.c.h.bf16 %v243
  %v952 = vunpack.c.l.bf16 %v244
  %v953 = vunpack.c.h.bf16 %v244
  %v954 = vunpack.c.l.bf16 %v245
  %v955 = vunpack.c.h.bf16 %v245
  %v956 = vunpack.c.l.bf16 %v246
  %v957 = vunpack.c.h.bf16 %v246
  %v958 = vunpack.c.l.bf16 %v247
  %v959 = vunpack.c.h.bf16 %v247
  %v960 = vunpack.c.l.bf16 %v248
  %v961 = vunpack.c.h.bf16 %v248
  %v962 = vunpack.c.l.bf16 %v249
  %v963 = vunpack.c.h.bf16 %v249
  %v964 = vunpack.c.l.bf16 %v250
  %v965 = vunpack.c.h.bf16 %v250
  %v966 = vunpack.c.l.bf16 %v251
  %v967 = vunpack.c.h.bf16 %v251
  %v968 = vunpack.c.l.bf16 %v252
  %v969 = vunpack.c.h.bf16 %v252
  %v970 = vunpack.c.l.bf16 %v253
  %v971 = vunpack.c.h.bf16 %v253
  %v972 = vunpack.c.l.bf16 %v254
  %v973 = vunpack.c.h.bf16 %v254
  %v974 = vunpack.c.l.bf16 %v255
  %v975 = vunpack.c.h.bf16 %v255
  %v976 = vunpack.c.l.bf16 %v256
  %v977 = vunpack.c.h.bf16 %v256
  %v978 = vunpack.c.l.bf16 %v257
  %v979 = vunpack.c.h.bf16 %v257
  %v980 = vunpack.c.l.bf16 %v258
  %v981 = vunpack.c.h.bf16 %v258
  %v982 = vunpack.c.l.bf16 %v259
  %v983 = vunpack.c.h.bf16 %v259
  %v984 = vunpack.c.l.bf16 %v260
  %v985 = vunpack.c.h.bf16 %v260
  %v986 = vunpack.c.l.bf16 %v261
  %v987 = vunpack.c.h.bf16 %v261
  %v988 = vunpack.c.l.bf16 %v262
  %v989 = vunpack.c.h.bf16 %v262
  %v990 = vunpack.c.l.bf16 %v263
  %v991 = vunpack.c.h.bf16 %v263
  %v992 = vunpack.c.l.bf16 %v264
  %v993 = vunpack.c.h.bf16 %v264
  %v994 = vunpack.c.l.bf16 %v265
  %v995 = vunpack.c.h.bf16 %v265
  %v996 = vunpack.c.l.bf16 %v266
  %v997 = vunpack.c.h.bf16 %v266
  %v998 = vunpack.c.l.bf16 %v267
  %v999 = vunpack.c.h.bf16 %v267
  %v1000 = vunpack.c.l.bf16 %v268
  %v1001 = vunpack.c.h.bf16 %v268
  %v1002 = vunpack.c.l.bf16 %v269
  %v1003 = vunpack.c.h.bf16 %v269
  %v1004 = vunpack.c.l.bf16 %v270
  %v1005 = vunpack.c.h.bf16 %v270
  %v1006 = vunpack.c.l.bf16 %v271
  %v1007 = vunpack.c.h.bf16 %v271
  %v1008 = vunpack.c.l.bf16 %v272
  %v1009 = vunpack.c.h.bf16 %v272
  %v1010 = vunpack.c.l.bf16 %v273
  %v1011 = vunpack.c.h.bf16 %v273
  %v1012 = vunpack.c.l.bf16 %v274
  %v1013 = vunpack.c.h.bf16 %v274
  %v1014 = vunpack.c.l.bf16 %v275
  %v1015 = vunpack.c.h.bf16 %v275
  %v1016 = vunpack.c.l.bf16 %v276
  %v1017 = vunpack.c.h.bf16 %v276
  %v1018 = vunpack.c.l.bf16 %v277
  %v1019 = vunpack.c.h.bf16 %v277
  %v1020 = vunpack.c.l.bf16 %v278
  %v1021 = vunpack.c.h.bf16 %v278
  %v1022 = vunpack.c.l.bf16 %v279
  %v1023 = vunpack.c.h.bf16 %v279
  %v1024 = vunpack.c.l.bf16 %v280
  %v1025 = vunpack.c.h.bf16 %v280
  %v1026 = vunpack.c.l.bf16 %v281
  %v1027 = vunpack.c.h.bf16 %v281
  %v1028 = vunpack.c.l.bf16 %v282
  %v1029 = vunpack.c.h.bf16 %v282
  %v1030 = vunpack.c.l.bf16 %v283
  %v1031 = vunpack.c.h.bf16 %v283
  %v1032 = vunpack.c.l.bf16 %v284
  %v1033 = vunpack.c.h.bf16 %v284
  %v1034 = vunpack.c.l.bf16 %v285
  %v1035 = vunpack.c.h.bf16 %v285
  %v1036 = vunpack.c.l.bf16 %v286
  %v1037 = vunpack.c.h.bf16 %v286
  %v1038 = vunpack.c.l.bf16 %v287
  %v1039 = vunpack.c.h.bf16 %v287
  %v1040 = vunpack.c.l.bf16 %v288
  %v1041 = vunpack.c.h.bf16 %v288
  %v1042 = vunpack.c.l.bf16 %v289
  %v1043 = vunpack.c.h.bf16 %v289
  %v1044 = vunpack.c.l.bf16 %v290
  %v1045 = vunpack.c.h.bf16 %v290
  %v1046 = vunpack.c.l.bf16 %v291
  %v1047 = vunpack.c.h.bf16 %v291
  %v1048 = vunpack.c.l.bf16 %v292
  %v1049 = vunpack.c.h.bf16 %v292
  %v1050 = vunpack.c.l.bf16 %v293
  %v1051 = vunpack.c.h.bf16 %v293
  %v1052 = vunpack.c.l.bf16 %v294
  %v1053 = vunpack.c.h.bf16 %v294
  %v1054 = vunpack.c.l.bf16 %v295
  %v1055 = vunpack.c.h.bf16 %v295
  %v1056 = vunpack.c.l.bf16 %v296
  %v1057 = vunpack.c.h.bf16 %v296
  %v1058 = vunpack.c.l.bf16 %v297
  %v1059 = vunpack.c.h.bf16 %v297
  %v1060 = vunpack.c.l.bf16 %v298
  %v1061 = vunpack.c.h.bf16 %v298
  %v1062 = vunpack.c.l.bf16 %v299
  %v1063 = vunpack.c.h.bf16 %v299
  %v1064 = vunpack.c.l.bf16 %v300
  %v1065 = vunpack.c.h.bf16 %v300
  %v1066 = vunpack.c.l.bf16 %v301
  %v1067 = vunpack.c.h.bf16 %v301
  %v1068 = vunpack.c.l.bf16 %v302
  %v1069 = vunpack.c.h.bf16 %v302
  %v1070 = vunpack.c.l.bf16 %v303
  %v1071 = vunpack.c.h.bf16 %v303
  %v1072 = vunpack.c.l.bf16 %v304
  %v1073 = vunpack.c.h.bf16 %v304
  %v1074 = vunpack.c.l.bf16 %v305
  %v1075 = vunpack.c.h.bf16 %v305
  %v1076 = vunpack.c.l.bf16 %v306
  %v1077 = vunpack.c.h.bf16 %v306
  %v1078 = vunpack.c.l.bf16 %v307
  %v1079 = vunpack.c.h.bf16 %v307
  %v1080 = vunpack.c.l.bf16 %v308
  %v1081 = vunpack.c.h.bf16 %v308
  %v1082 = vunpack.c.l.bf16 %v309
  %v1083 = vunpack.c.h.bf16 %v309
  %v1084 = vunpack.c.l.bf16 %v310
  %v1085 = vunpack.c.h.bf16 %v310
  %v1086 = vunpack.c.l.bf16 %v311
  %v1087 = vunpack.c.h.bf16 %v311
  %v1088 = vunpack.c.l.bf16 %v312
  %v1089 = vunpack.c.h.bf16 %v312
  %v1090 = vunpack.c.l.bf16 %v313
  %v1091 = vunpack.c.h.bf16 %v313
  %v1092 = vunpack.c.l.bf16 %v314
  %v1093 = vunpack.c.h.bf16 %v314
  %v1094 = vunpack.c.l.bf16 %v315
  %v1095 = vunpack.c.h.bf16 %v315
  %v1096 = vunpack.c.l.bf16 %v316
  %v1097 = vunpack.c.h.bf16 %v316
  %v1098 = vunpack.c.l.bf16 %v317
  %v1099 = vunpack.c.h.bf16 %v317
  %v1100 = vunpack.c.l.bf16 %v318
  %v1101 = vunpack.c.h.bf16 %v318
  %v1102 = vunpack.c.l.bf16 %v319
  %v1103 = vunpack.c.h.bf16 %v319
  %v1104 = vunpack.c.l.bf16 %v320
  %v1105 = vunpack.c.h.bf16 %v320
  %v1106 = vunpack.c.l.bf16 %v321
  %v1107 = vunpack.c.h.bf16 %v321
  %v1108 = vunpack.c.l.bf16 %v322
  %v1109 = vunpack.c.h.bf16 %v322
  %v1110 = vunpack.c.l.bf16 %v323
  %v1111 = vunpack.c.h.bf16 %v323
  %v1112 = vunpack.c.l.bf16 %v324
  %v1113 = vunpack.c.h.bf16 %v324
  %v1114 = vunpack.c.l.bf16 %v325
  %v1115 = vunpack.c.h.bf16 %v325
  %v1116 = vunpack.c.l.bf16 %v326
  %v1117 = vunpack.c.h.bf16 %v326
  %v1118 = vunpack.c.l.bf16 %v327
  %v1119 = vunpack.c.h.bf16 %v327
  %v1120 = vunpack.c.l.bf16 %v328
  %v1121 = vunpack.c.h.bf16 %v328
  %v1122 = vunpack.c.l.bf16 %v329
  %v1123 = vunpack.c.h.bf16 %v329
  %v1124 = vunpack.c.l.bf16 %v330
  %v1125 = vunpack.c.h.bf16 %v330
  %v1126 = vunpack.c.l.bf16 %v331
  %v1127 = vunpack.c.h.bf16 %v331
  %v1128 = vunpack.c.l.bf16 %v332
  %v1129 = vunpack.c.h.bf16 %v332
  %v1130 = vunpack.c.l.bf16 %v333
  %v1131 = vunpack.c.h.bf16 %v333
  %v1132 = vunpack.c.l.bf16 %v334
  %v1133 = vunpack.c.h.bf16 %v334
  %v1134 = vunpack.c.l.bf16 %v335
  %v1135 = vunpack.c.h.bf16 %v335
  %v1136 = vunpack.c.l.bf16 %v336
  %v1137 = vunpack.c.h.bf16 %v336
  %v1138 = vunpack.c.l.bf16 %v337
  %v1139 = vunpack.c.h.bf16 %v337
  %v1140 = vunpack.c.l.bf16 %v338
  %v1141 = vunpack.c.h.bf16 %v338
  %v1142 = vunpack.c.l.bf16 %v339
  %v1143 = vunpack.c.h.bf16 %v339
  %v1144 = vunpack.c.l.bf16 %v340
  %v1145 = vunpack.c.h.bf16 %v340
  %v1146 = vunpack.c.l.bf16 %v341
  %v1147 = vunpack.c.h.bf16 %v341
  %v1148 = vunpack.c.l.bf16 %v342
  %v1149 = vunpack.c.h.bf16 %v342
  %v1150 = vunpack.c.l.bf16 %v343
  %v1151 = vunpack.c.h.bf16 %v343
  %v1152 = vunpack.c.l.bf16 %v344
  %v1153 = vunpack.c.h.bf16 %v344
  %v1154 = vunpack.c.l.bf16 %v345
  %v1155 = vunpack.c.h.bf16 %v345
  %v1156 = vunpack.c.l.bf16 %v346
  %v1157 = vunpack.c.h.bf16 %v346
  %v1158 = vunpack.c.l.bf16 %v347
  %v1159 = vunpack.c.h.bf16 %v347
  %v1160 = vunpack.c.l.bf16 %v348
  %v1161 = vunpack.c.h.bf16 %v348
  %v1162 = vunpack.c.l.bf16 %v349
  %v1163 = vunpack.c.h.bf16 %v349
  %v1164 = vunpack.c.l.bf16 %v350
  %v1165 = vunpack.c.h.bf16 %v350
  %v1166 = vunpack.c.l.bf16 %v351
  %v1167 = vunpack.c.h.bf16 %v351
  %v1168 = vunpack.c.l.bf16 %v352
  %v1169 = vunpack.c.h.bf16 %v352
  %v1170 = vunpack.c.l.bf16 %v353
  %v1171 = vunpack.c.h.bf16 %v353
  %v1172 = vunpack.c.l.bf16 %v354
  %v1173 = vunpack.c.h.bf16 %v354
  %v1174 = vunpack.c.l.bf16 %v355
  %v1175 = vunpack.c.h.bf16 %v355
  %v1176 = vunpack.c.l.bf16 %v356
  %v1177 = vunpack.c.h.bf16 %v356
  %v1178 = vunpack.c.l.bf16 %v357
  %v1179 = vunpack.c.h.bf16 %v357
  %v1180 = vunpack.c.l.bf16 %v358
  %v1181 = vunpack.c.h.bf16 %v358
  %v1182 = vunpack.c.l.bf16 %v359
  %v1183 = vunpack.c.h.bf16 %v359
  %v1184 = vunpack.c.l.bf16 %v360
  %v1185 = vunpack.c.h.bf16 %v360
  %v1186 = vunpack.c.l.bf16 %v361
  %v1187 = vunpack.c.h.bf16 %v361
  %v1188 = vunpack.c.l.bf16 %v362
  %v1189 = vunpack.c.h.bf16 %v362
  %v1190 = vunpack.c.l.bf16 %v363
  %v1191 = vunpack.c.h.bf16 %v363
  %v1192 = vunpack.c.l.bf16 %v364
  %v1193 = vunpack.c.h.bf16 %v364
  %v1194 = vunpack.c.l.bf16 %v365
  %v1195 = vunpack.c.h.bf16 %v365
  %v1196 = vunpack.c.l.bf16 %v366
  %v1197 = vunpack.c.h.bf16 %v366
  %v1198 = vunpack.c.l.bf16 %v367
  %v1199 = vunpack.c.h.bf16 %v367
  %v1200 = vunpack.c.l.bf16 %v368
  %v1201 = vunpack.c.h.bf16 %v368
  %v1202 = vunpack.c.l.bf16 %v369
  %v1203 = vunpack.c.h.bf16 %v369
  %v1204 = vunpack.c.l.bf16 %v370
  %v1205 = vunpack.c.h.bf16 %v370
  %v1206 = vunpack.c.l.bf16 %v371
  %v1207 = vunpack.c.h.bf16 %v371
  %v1208 = vunpack.c.l.bf16 %v372
  %v1209 = vunpack.c.h.bf16 %v372
  %v1210 = vunpack.c.l.bf16 %v373
  %v1211 = vunpack.c.h.bf16 %v373
  %v1212 = vunpack.c.l.bf16 %v374
  %v1213 = vunpack.c.h.bf16 %v374
  %v1214 = vunpack.c.l.bf16 %v375
  %v1215 = vunpack.c.h.bf16 %v375
  %v1216 = vunpack.c.l.bf16 %v376
  %v1217 = vunpack.c.h.bf16 %v376
  %v1218 = vunpack.c.l.bf16 %v377
  %v1219 = vunpack.c.h.bf16 %v377
  %v1220 = vunpack.c.l.bf16 %v378
  %v1221 = vunpack.c.h.bf16 %v378
  %v1222 = vunpack.c.l.bf16 %v379
  %v1223 = vunpack.c.h.bf16 %v379
  %v1224 = vunpack.c.l.bf16 %v380
  %v1225 = vunpack.c.h.bf16 %v380
  %v1226 = vunpack.c.l.bf16 %v381
  %v1227 = vunpack.c.h.bf16 %v381
  %v1228 = vunpack.c.l.bf16 %v382
  %v1229 = vunpack.c.h.bf16 %v382
  %v1230 = vunpack.c.l.bf16 %v383
  %v1231 = vunpack.c.h.bf16 %v383
  %v1232 = vunpack.c.l.bf16 %v384
  %v1233 = vunpack.c.h.bf16 %v384
  %v1234 = vunpack.c.l.bf16 %v385
  %v1235 = vunpack.c.h.bf16 %v385
  %v1236 = vunpack.c.l.bf16 %v386
  %v1237 = vunpack.c.h.bf16 %v386
  %v1238 = vunpack.c.l.bf16 %v387
  %v1239 = vunpack.c.h.bf16 %v387
  %v1240 = vunpack.c.l.bf16 %v388
  %v1241 = vunpack.c.h.bf16 %v388
  %v1242 = vunpack.c.l.bf16 %v389
  %v1243 = vunpack.c.h.bf16 %v389
  %v1244 = vunpack.c.l.bf16 %v390
  %v1245 = vunpack.c.h.bf16 %v390
  %v1246 = vunpack.c.l.bf16 %v391
  %v1247 = vunpack.c.h.bf16 %v391
  %v1248 = vunpack.c.l.bf16 %v392
  %v1249 = vunpack.c.h.bf16 %v392
  %v1250 = vunpack.c.l.bf16 %v393
  %v1251 = vunpack.c.h.bf16 %v393
  %v1252 = vunpack.c.l.bf16 %v394
  %v1253 = vunpack.c.h.bf16 %v394
  %v1254 = vunpack.c.l.bf16 %v395
  %v1255 = vunpack.c.h.bf16 %v395
  %v1256 = vunpack.c.l.bf16 %v396
  %v1257 = vunpack.c.h.bf16 %v396
  %v1258 = vunpack.c.l.bf16 %v397
  %v1259 = vunpack.c.h.bf16 %v397
  %v1260 = vunpack.c.l.bf16 %v398
  %v1261 = vunpack.c.h.bf16 %v398
  %v1262 = vunpack.c.l.bf16 %v399
  %v1263 = vunpack.c.h.bf16 %v399
  %v1264 = vunpack.c.l.bf16 %v400
  %v1265 = vunpack.c.h.bf16 %v400
  %v1266 = vunpack.c.l.bf16 %v401
  %v1267 = vunpack.c.h.bf16 %v401
  %v1268 = vunpack.c.l.bf16 %v402
  %v1269 = vunpack.c.h.bf16 %v402
  %v1270 = vunpack.c.l.bf16 %v403
  %v1271 = vunpack.c.h.bf16 %v403
  %v1272 = vunpack.c.l.bf16 %v404
  %v1273 = vunpack.c.h.bf16 %v404
  %v1274 = vunpack.c.l.bf16 %v405
  %v1275 = vunpack.c.h.bf16 %v405
  %v1276 = vunpack.c.l.bf16 %v406
  %v1277 = vunpack.c.h.bf16 %v406
  %v1278 = vunpack.c.l.bf16 %v407
  %v1279 = vunpack.c.h.bf16 %v407
  %v1280 = vunpack.c.l.bf16 %v408
  %v1281 = vunpack.c.h.bf16 %v408
  %v1282 = vunpack.c.l.bf16 %v409
  %v1283 = vunpack.c.h.bf16 %v409
  %v1284 = vunpack.c.l.bf16 %v410
  %v1285 = vunpack.c.h.bf16 %v410
  %v1286 = vunpack.c.l.bf16 %v411
  %v1287 = vunpack.c.h.bf16 %v411
  %v1288 = vunpack.c.l.bf16 %v412
  %v1289 = vunpack.c.h.bf16 %v412
  %v1290 = vunpack.c.l.bf16 %v413
  %v1291 = vunpack.c.h.bf16 %v413
  %v1292 = vunpack.c.l.bf16 %v414
  %v1293 = vunpack.c.h.bf16 %v414
  %v1294 = vunpack.c.l.bf16 %v415
  %v1295 = vunpack.c.h.bf16 %v415
  %v1296 = vunpack.c.l.bf16 %v416
  %v1297 = vunpack.c.h.bf16 %v416
  %v1298 = vunpack.c.l.bf16 %v417
  %v1299 = vunpack.c.h.bf16 %v417
  %v1300 = vunpack.c.l.bf16 %v418
  %v1301 = vunpack.c.h.bf16 %v418
  %v1302 = vunpack.c.l.bf16 %v419
  %v1303 = vunpack.c.h.bf16 %v419
  %v1304 = vunpack.c.l.bf16 %v420
  %v1305 = vunpack.c.h.bf16 %v420
  %v1306 = vunpack.c.l.bf16 %v421
  %v1307 = vunpack.c.h.bf16 %v421
  %v1308 = vunpack.c.l.bf16 %v422
  %v1309 = vunpack.c.h.bf16 %v422
  %v1310 = vunpack.c.l.bf16 %v423
  %v1311 = vunpack.c.h.bf16 %v423
  %v1312 = vunpack.c.l.bf16 %v424
  %v1313 = vunpack.c.h.bf16 %v424
  %v1314 = vunpack.c.l.bf16 %v425
  %v1315 = vunpack.c.h.bf16 %v425
  %v1316 = vunpack.c.l.bf16 %v426
  %v1317 = vunpack.c.h.bf16 %v426
  %v1318 = vunpack.c.l.bf16 %v427
  %v1319 = vunpack.c.h.bf16 %v427
  %v1320 = vunpack.c.l.bf16 %v428
  %v1321 = vunpack.c.h.bf16 %v428
  %v1322 = vunpack.c.l.bf16 %v429
  %v1323 = vunpack.c.h.bf16 %v429
  %v1324 = vunpack.c.l.bf16 %v430
  %v1325 = vunpack.c.h.bf16 %v430
  %v1326 = vunpack.c.l.bf16 %v431
  %v1327 = vunpack.c.h.bf16 %v431
  %v1328 = vunpack.c.l.bf16 %v432
  %v1329 = vunpack.c.h.bf16 %v432
  %v1330 = vunpack.c.l.bf16 %v433
  %v1331 = vunpack.c.h.bf16 %v433
  %v1332 = vunpack.c.l.bf16 %v434
  %v1333 = vunpack.c.h.bf16 %v434
  %v1334 = vunpack.c.l.bf16 %v435
  %v1335 = vunpack.c.h.bf16 %v435
  %v1336 = vunpack.c.l.bf16 %v436
  %v1337 = vunpack.c.h.bf16 %v436
  %v1338 = vunpack.c.l.bf16 %v437
  %v1339 = vunpack.c.h.bf16 %v437
  %v1340 = vunpack.c.l.bf16 %v438
  %v1341 = vunpack.c.h.bf16 %v438
  %v1342 = vunpack.c.l.bf16 %v439
  %v1343 = vunpack.c.h.bf16 %v439
  %v1344 = vunpack.c.l.bf16 %v440
  %v1345 = vunpack.c.h.bf16 %v440
  %v1346 = vunpack.c.l.bf16 %v441
  %v1347 = vunpack.c.h.bf16 %v441
  %v1348 = vunpack.c.l.bf16 %v442
  %v1349 = vunpack.c.h.bf16 %v442
  %v1350 = vunpack.c.l.bf16 %v443
  %v1351 = vunpack.c.h.bf16 %v443
  %v1352 = vunpack.c.l.bf16 %v444
  %v1353 = vunpack.c.h.bf16 %v444
  %v1354 = vunpack.c.l.bf16 %v445
  %v1355 = vunpack.c.h.bf16 %v445
  %v1356 = vunpack.c.l.bf16 %v446
  %v1357 = vunpack.c.h.bf16 %v446
  %v1358 = vunpack.c.l.bf16 %v447
  %v1359 = vunpack.c.h.bf16 %v447
  %v1360 = vunpack.c.l.bf16 %v448
  %v1361 = vunpack.c.h.bf16 %v448
  %v1362 = vunpack.c.l.bf16 %v449
  %v1363 = vunpack.c.h.bf16 %v449
  %v1364 = vunpack.c.l.bf16 %v450
  %v1365 = vunpack.c.h.bf16 %v450
  %v1366 = vunpack.c.l.bf16 %v451
  %v1367 = vunpack.c.h.bf16 %v451
  %v1368 = vunpack.c.l.bf16 %v452
  %v1369 = vunpack.c.h.bf16 %v452
  %v1370 = vunpack.c.l.bf16 %v453
  %v1371 = vunpack.c.h.bf16 %v453
  %v1372 = vunpack.c.l.bf16 %v454
  %v1373 = vunpack.c.h.bf16 %v454
  %v1374 = vunpack.c.l.bf16 %v455
  %v1375 = vunpack.c.h.bf16 %v455
  %v1376 = vunpack.c.l.bf16 %v456
  %v1377 = vunpack.c.h.bf16 %v456
  %v1378 = vunpack.c.l.bf16 %v457
  %v1379 = vunpack.c.h.bf16 %v457
  %v1380 = vunpack.c.l.bf16 %v458
  %v1381 = vunpack.c.h.bf16 %v458
  %v1382 = vunpack.c.l.bf16 %v459
  %v1383 = vunpack.c.h.bf16 %v459
  %v1384 = vunpack.c.l.bf16 %v460
  %v1385 = vunpack.c.h.bf16 %v460
  %v1386 = vunpack.c.l.bf16 %v461
  %v1387 = vunpack.c.h.bf16 %v461
  %v1388 = vunpack.c.l.bf16 %v462
  %v1389 = vunpack.c.h.bf16 %v462
  %v1390 = vunpack.c.l.bf16 %v463
  %v1391 = vunpack.c.h.bf16 %v463
  %v1392 = vunpack.c.l.bf16 %v464
  %v1393 = vunpack.c.h.bf16 %v464
  %v1394 = vunpack.c.l.bf16 %v465
  %v1395 = vunpack.c.h.bf16 %v465
  %v1396 = vunpack.c.l.bf16 %v466
  %v1397 = vunpack.c.h.bf16 %v466
  %v1398 = vunpack.c.l.bf16 %v467
  %v1399 = vunpack.c.h.bf16 %v467
  %v1400 = vunpack.c.l.bf16 %v468
  %v1401 = vunpack.c.h.bf16 %v468
  %v1402 = vunpack.c.l.bf16 %v469
  %v1403 = vunpack.c.h.bf16 %v469
  %v1404 = vunpack.c.l.bf16 %v470
  %v1405 = vunpack.c.h.bf16 %v470
  %v1406 = vunpack.c.l.bf16 %v471
  %v1407 = vunpack.c.h.bf16 %v471
  %v1408 = vunpack.c.l.bf16 %v472
  %v1409 = vunpack.c.h.bf16 %v472
  %v1410 = vunpack.c.l.bf16 %v473
  %v1411 = vunpack.c.h.bf16 %v473
  %v1412 = vunpack.c.l.bf16 %v474
  %v1413 = vunpack.c.h.bf16 %v474
  %v1414 = vunpack.c.l.bf16 %v475
  %v1415 = vunpack.c.h.bf16 %v475
  %v1416 = vunpack.c.l.bf16 %v476
  %v1417 = vunpack.c.h.bf16 %v476
  %v1418 = vunpack.c.l.bf16 %v477
  %v1419 = vunpack.c.h.bf16 %v477
  %v1420 = vunpack.c.l.bf16 %v478
  %v1421 = vunpack.c.h.bf16 %v478
  %v1422 = vunpack.c.l.bf16 %v479
  %v1423 = vunpack.c.h.bf16 %v479
  %v1424 = vunpack.c.l.bf16 %v480
  %v1425 = vunpack.c.h.bf16 %v480
  %v1426 = vunpack.c.l.bf16 %v481
  %v1427 = vunpack.c.h.bf16 %v481
  %v1428 = vunpack.c.l.bf16 %v482
  %v1429 = vunpack.c.h.bf16 %v482
  %v1430 = vunpack.c.l.bf16 %v483
  %v1431 = vunpack.c.h.bf16 %v483
  %v1432 = vunpack.c.l.bf16 %v484
  %v1433 = vunpack.c.h.bf16 %v484
  %v1434 = vunpack.c.l.bf16 %v485
  %v1435 = vunpack.c.h.bf16 %v485
  %v1436 = vunpack.c.l.bf16 %v486
  %v1437 = vunpack.c.h.bf16 %v486
  %v1438 = vunpack.c.l.bf16 %v487
  %v1439 = vunpack.c.h.bf16 %v487
  %v1440 = vunpack.c.l.bf16 %v488
  %v1441 = vunpack.c.h.bf16 %v488
  %v1442 = vunpack.c.l.bf16 %v489
  %v1443 = vunpack.c.h.bf16 %v489
  %v1444 = vunpack.c.l.bf16 %v490
  %v1445 = vunpack.c.h.bf16 %v490
  %v1446 = vunpack.c.l.bf16 %v491
  %v1447 = vunpack.c.h.bf16 %v491
  %v1448 = vunpack.c.l.bf16 %v492
  %v1449 = vunpack.c.h.bf16 %v492
  %v1450 = vunpack.c.l.bf16 %v493
  %v1451 = vunpack.c.h.bf16 %v493
  %v1452 = vunpack.c.l.bf16 %v494
  %v1453 = vunpack.c.h.bf16 %v494
  %v1454 = vunpack.c.l.bf16 %v495
  %v1455 = vunpack.c.h.bf16 %v495
  %v1456 = vunpack.c.l.bf16 %v496
  %v1457 = vunpack.c.h.bf16 %v496
  %v1458 = vunpack.c.l.bf16 %v497
  %v1459 = vunpack.c.h.bf16 %v497
  %v1460 = vunpack.c.l.bf16 %v498
  %v1461 = vunpack.c.h.bf16 %v498
  %v1462 = vunpack.c.l.bf16 %v499
  %v1463 = vunpack.c.h.bf16 %v499
  %v1464 = vunpack.c.l.bf16 %v500
  %v1465 = vunpack.c.h.bf16 %v500
  %v1466 = vunpack.c.l.bf16 %v501
  %v1467 = vunpack.c.h.bf16 %v501
  %v1468 = vunpack.c.l.bf16 %v502
  %v1469 = vunpack.c.h.bf16 %v502
  %v1470 = vunpack.c.l.bf16 %v503
  %v1471 = vunpack.c.h.bf16 %v503
  %v1472 = vunpack.c.l.bf16 %v504
  %v1473 = vunpack.c.h.bf16 %v504
  %v1474 = vunpack.c.l.bf16 %v505
  %v1475 = vunpack.c.h.bf16 %v505
  %v1476 = vunpack.c.l.bf16 %v506
  %v1477 = vunpack.c.h.bf16 %v506
  %v1478 = vunpack.c.l.bf16 %v507
  %v1479 = vunpack.c.h.bf16 %v507
  %v1480 = vunpack.c.l.bf16 %v508
  %v1481 = vunpack.c.h.bf16 %v508
  %v1482 = vunpack.c.l.bf16 %v509
  %v1483 = vunpack.c.h.bf16 %v509
  %v1484 = vunpack.c.l.bf16 %v510
  %v1485 = vunpack.c.h.bf16 %v510
  %v1486 = vunpack.c.l.bf16 %v511
  %v1487 = vunpack.c.h.bf16 %v511
  %v1488 = vunpack.c.l.bf16 %v512
  %v1489 = vunpack.c.h.bf16 %v512
  %v1490 = vunpack.c.l.bf16 %v513
  %v1491 = vunpack.c.h.bf16 %v513
  %v1492 = vunpack.c.l.bf16 %v514
  %v1493 = vunpack.c.h.bf16 %v514
  %v1494 = vunpack.c.l.bf16 %v515
  %v1495 = vunpack.c.h.bf16 %v515
  %v1496 = vunpack.c.l.bf16 %v516
  %v1497 = vunpack.c.h.bf16 %v516
  %v1498 = vunpack.c.l.bf16 %v517
  %v1499 = vunpack.c.h.bf16 %v517
  %v1500 = vunpack.c.l.bf16 %v518
  %v1501 = vunpack.c.h.bf16 %v518
  %v1502 = vunpack.c.l.bf16 %v519
  %v1503 = vunpack.c.h.bf16 %v519
  %v1504 = vunpack.c.l.bf16 %v520
  %v1505 = vunpack.c.h.bf16 %v520
  %v1506 = vunpack.c.l.bf16 %v521
  %v1507 = vunpack.c.h.bf16 %v521
  %v1508 = vunpack.c.l.bf16 %v522
  %v1509 = vunpack.c.h.bf16 %v522
  %v1510 = vunpack.c.l.bf16 %v523
  %v1511 = vunpack.c.h.bf16 %v523
  %v1512 = vunpack.c.l.bf16 %v524
  %v1513 = vunpack.c.h.bf16 %v524
  %v1514 = vunpack.c.l.bf16 %v525
  %v1515 = vunpack.c.h.bf16 %v525
  %v1516 = vunpack.c.l.bf16 %v526
  %v1517 = vunpack.c.h.bf16 %v526
  %v1518 = vunpack.c.l.bf16 %v527
  %v1519 = vunpack.c.h.bf16 %v527
  %v1520 = vunpack.c.l.bf16 %v528
  %v1521 = vunpack.c.h.bf16 %v528
  %v1522 = vunpack.c.l.bf16 %v529
  %v1523 = vunpack.c.h.bf16 %v529
  %v1524 = vunpack.c.l.bf16 %v530
  %v1525 = vunpack.c.h.bf16 %v530
  %v1526 = vunpack.c.l.bf16 %v531
  %v1527 = vunpack.c.h.bf16 %v531
  %v1528 = vunpack.c.l.bf16 %v532
  %v1529 = vunpack.c.h.bf16 %v532
  %v1530 = vunpack.c.l.bf16 %v533
  %v1531 = vunpack.c.h.bf16 %v533
  %v1532 = vunpack.c.l.bf16 %v534
  %v1533 = vunpack.c.h.bf16 %v534
  %v1534 = vunpack.c.l.bf16 %v535
  %v1535 = vunpack.c.h.bf16 %v535
  %v1536 = vunpack.c.l.bf16 %v536
  %v1537 = vunpack.c.h.bf16 %v536
  %v1538 = vunpack.c.l.bf16 %v537
  %v1539 = vunpack.c.h.bf16 %v537
  %v1540 = vunpack.c.l.bf16 %v538
  %v1541 = vunpack.c.h.bf16 %v538
  %v1542 = vunpack.c.l.bf16 %v539
  %v1543 = vunpack.c.h.bf16 %v539
  %v1544 = vunpack.c.l.bf16 %v540
  %v1545 = vunpack.c.h.bf16 %v540
  %v1546 = vunpack.c.l.bf16 %v541
  %v1547 = vunpack.c.h.bf16 %v541
  %v1548 = vunpack.c.l.bf16 %v542
  %v1549 = vunpack.c.h.bf16 %v542
  %v1550 = vunpack.c.l.bf16 %v543
  %v1551 = vunpack.c.h.bf16 %v543
  %v1552 = vunpack.c.l.bf16 %v544
  %v1553 = vunpack.c.h.bf16 %v544
  %v1554 = vunpack.c.l.bf16 %v545
  %v1555 = vunpack.c.h.bf16 %v545
  %v1556 = vunpack.c.l.bf16 %v546
  %v1557 = vunpack.c.h.bf16 %v546
  %v1558 = vunpack.c.l.bf16 %v547
  %v1559 = vunpack.c.h.bf16 %v547
  %v1560 = vunpack.c.l.bf16 %v548
  %v1561 = vunpack.c.h.bf16 %v548
  %v1562 = vunpack.c.l.bf16 %v549
  %v1563 = vunpack.c.h.bf16 %v549
  %v1564 = vunpack.c.l.bf16 %v550
  %v1565 = vunpack.c.h.bf16 %v550
  %v1566 = vunpack.c.l.bf16 %v551
  %v1567 = vunpack.c.h.bf16 %v551
  %v1568 = vunpack.c.l.bf16 %v552
  %v1569 = vunpack.c.h.bf16 %v552
  %v1570 = vunpack.c.l.bf16 %v553
  %v1571 = vunpack.c.h.bf16 %v553
  %v1572 = vunpack.c.l.bf16 %v554
  %v1573 = vunpack.c.h.bf16 %v554
  %v1574 = vunpack.c.l.bf16 %v555
  %v1575 = vunpack.c.h.bf16 %v555
  %v1576 = vunpack.c.l.bf16 %v556
  %v1577 = vunpack.c.h.bf16 %v556
  %v1578 = vunpack.c.l.bf16 %v557
  %v1579 = vunpack.c.h.bf16 %v557
  %v1580 = vunpack.c.l.bf16 %v558
  %v1581 = vunpack.c.h.bf16 %v558
  %v1582 = vunpack.c.l.bf16 %v559
  %v1583 = vunpack.c.h.bf16 %v559
  %v1584 = vld [vmem:[%s2] sm:$0xf]
  %v1586 = vperm.slane %v1584, 0
  %v1587 = vperm.slane %v1584, 1
  %v1588 = vperm.slane %v1584, 2
  %v1589 = vperm.slane %v1584, 3
  %1594 = vmatpush.msra.mxu0 %v620
  %1595 = vmatpush.msra.mxu0 %v616
  %1596 = vmatpush.msra.mxu0 %v612
  %1597 = vmatpush.msra.mxu0 %v608
  %1598 = vmatpush.msra.mxu0 %v604
  %1599 = vmatpush.msra.mxu0 %v600
  %1600 = vmatpush.msra.mxu0 %v596
  %1601 = vmatpush.msra.mxu0 %v592
  %1602 = vmatpush.msra.mxu0 %v588
  %1603 = vmatpush.msra.mxu0 %v584
  %1604 = vmatpush.msra.mxu0 %v580
  %1605 = vmatpush.msra.mxu0 %v576
  %1606 = vmatpush.msra.mxu0 %v572
  %1607 = vmatpush.msra.mxu0 %v568
  %1608 = vmatpush.msra.mxu0 %v564
  %1609 = vmatpush.msra.mxu0 %v560
  %1610 = vmatmul.f32.gmra.mxu0 %v32
  %v1611 = vpop.f32.mrf.mxu0
  %v1612 = vadd.f32 %v1586, %v1611
  %1613 = vdwg.mxu0
  %1614 = vmatpush.msra.mxu0 %v684
  %1615 = vmatpush.msra.mxu0 %v680
  %1616 = vmatpush.msra.mxu0 %v676
  %1617 = vmatpush.msra.mxu0 %v672
  %1618 = vmatpush.msra.mxu0 %v668
  %1619 = vmatpush.msra.mxu0 %v664
  %1620 = vmatpush.msra.mxu0 %v660
  %1621 = vmatpush.msra.mxu0 %v656
  %1622 = vmatpush.msra.mxu0 %v652
  %1623 = vmatpush.msra.mxu0 %v648
  %1624 = vmatpush.msra.mxu0 %v644
  %1625 = vmatpush.msra.mxu0 %v640
  %1626 = vmatpush.msra.mxu0 %v636
  %1627 = vmatpush.msra.mxu0 %v632
  %1628 = vmatpush.msra.mxu0 %v628
  %1629 = vmatpush.msra.mxu0 %v624
  %1630 = vmatmul.f32.gmra.mxu0 %v33
  %v1631 = vpop.f32.mrf.mxu0
  %v1632 = vadd.f32 %v1612, %v1631
  %1633 = vdwg.mxu0
  %1634 = vmatpush.msra.mxu0 %v748
  %1635 = vmatpush.msra.mxu0 %v744
  %1636 = vmatpush.msra.mxu0 %v740
  %1637 = vmatpush.msra.mxu0 %v736
  %1638 = vmatpush.msra.mxu0 %v732
  %1639 = vmatpush.msra.mxu0 %v728
  %1640 = vmatpush.msra.mxu0 %v724
  %1641 = vmatpush.msra.mxu0 %v720
  %1642 = vmatpush.msra.mxu0 %v716
  %1643 = vmatpush.msra.mxu0 %v712
  %1644 = vmatpush.msra.mxu0 %v708
  %1645 = vmatpush.msra.mxu0 %v704
  %1646 = vmatpush.msra.mxu0 %v700
  %1647 = vmatpush.msra.mxu0 %v696
  %1648 = vmatpush.msra.mxu0 %v692
  %1649 = vmatpush.msra.mxu0 %v688
  %1650 = vmatmul.f32.gmra.mxu0 %v34
  %v1651 = vpop.f32.mrf.mxu0
  %v1652 = vadd.f32 %v1632, %v1651
  %1653 = vdwg.mxu0
  %1654 = vmatpush.msra.mxu0 %v812
  %1655 = vmatpush.msra.mxu0 %v808
  %1656 = vmatpush.msra.mxu0 %v804
  %1657 = vmatpush.msra.mxu0 %v800
  %1658 = vmatpush.msra.mxu0 %v796
  %1659 = vmatpush.msra.mxu0 %v792
  %1660 = vmatpush.msra.mxu0 %v788
  %1661 = vmatpush.msra.mxu0 %v784
  %1662 = vmatpush.msra.mxu0 %v780
  %1663 = vmatpush.msra.mxu0 %v776
  %1664 = vmatpush.msra.mxu0 %v772
  %1665 = vmatpush.msra.mxu0 %v768
  %1666 = vmatpush.msra.mxu0 %v764
  %1667 = vmatpush.msra.mxu0 %v760
  %1668 = vmatpush.msra.mxu0 %v756
  %1669 = vmatpush.msra.mxu0 %v752
  %1670 = vmatmul.f32.gmra.mxu0 %v35
  %v1671 = vpop.f32.mrf.mxu0
  %v1672 = vadd.f32 %v1652, %v1671
  %1673 = vdwg.mxu0
  %1674 = vmatpush.msra.mxu0 %v876
  %1675 = vmatpush.msra.mxu0 %v872
  %1676 = vmatpush.msra.mxu0 %v868
  %1677 = vmatpush.msra.mxu0 %v864
  %1678 = vmatpush.msra.mxu0 %v860
  %1679 = vmatpush.msra.mxu0 %v856
  %1680 = vmatpush.msra.mxu0 %v852
  %1681 = vmatpush.msra.mxu0 %v848
  %1682 = vmatpush.msra.mxu0 %v844
  %1683 = vmatpush.msra.mxu0 %v840
  %1684 = vmatpush.msra.mxu0 %v836
  %1685 = vmatpush.msra.mxu0 %v832
  %1686 = vmatpush.msra.mxu0 %v828
  %1687 = vmatpush.msra.mxu0 %v824
  %1688 = vmatpush.msra.mxu0 %v820
  %1689 = vmatpush.msra.mxu0 %v816
  %1690 = vmatmul.f32.gmra.mxu0 %v36
  %v1691 = vpop.f32.mrf.mxu0
  %v1692 = vadd.f32 %v1672, %v1691
  %1693 = vdwg.mxu0
  %1694 = vmatpush.msra.mxu0 %v940
  %1695 = vmatpush.msra.mxu0 %v936
  %1696 = vmatpush.msra.mxu0 %v932
  %1697 = vmatpush.msra.mxu0 %v928
  %1698 = vmatpush.msra.mxu0 %v924
  %1699 = vmatpush.msra.mxu0 %v920
  %1700 = vmatpush.msra.mxu0 %v916
  %1701 = vmatpush.msra.mxu0 %v912
  %1702 = vmatpush.msra.mxu0 %v908
  %1703 = vmatpush.msra.mxu0 %v904
  %1704 = vmatpush.msra.mxu0 %v900
  %1705 = vmatpush.msra.mxu0 %v896
  %1706 = vmatpush.msra.mxu0 %v892
  %1707 = vmatpush.msra.mxu0 %v888
  %1708 = vmatpush.msra.mxu0 %v884
  %1709 = vmatpush.msra.mxu0 %v880
  %1710 = vmatmul.f32.gmra.mxu0 %v37
  %v1711 = vpop.f32.mrf.mxu0
  %v1712 = vadd.f32 %v1692, %v1711
  %1713 = vdwg.mxu0
  %1714 = vmatpush.msra.mxu0 %v1004
  %1715 = vmatpush.msra.mxu0 %v1000
  %1716 = vmatpush.msra.mxu0 %v996
  %1717 = vmatpush.msra.mxu0 %v992
  %1718 = vmatpush.msra.mxu0 %v988
  %1719 = vmatpush.msra.mxu0 %v984
  %1720 = vmatpush.msra.mxu0 %v980
  %1721 = vmatpush.msra.mxu0 %v976
  %1722 = vmatpush.msra.mxu0 %v972
  %1723 = vmatpush.msra.mxu0 %v968
  %1724 = vmatpush.msra.mxu0 %v964
  %1725 = vmatpush.msra.mxu0 %v960
  %1726 = vmatpush.msra.mxu0 %v956
  %1727 = vmatpush.msra.mxu0 %v952
  %1728 = vmatpush.msra.mxu0 %v948
  %1729 = vmatpush.msra.mxu0 %v944
  %1730 = vmatmul.f32.gmra.mxu0 %v38
  %v1731 = vpop.f32.mrf.mxu0
  %v1732 = vadd.f32 %v1712, %v1731
  %1733 = vdwg.mxu0
  %1734 = vmatpush.msra.mxu0 %v1068
  %1735 = vmatpush.msra.mxu0 %v1064
  %1736 = vmatpush.msra.mxu0 %v1060
  %1737 = vmatpush.msra.mxu0 %v1056
  %1738 = vmatpush.msra.mxu0 %v1052
  %1739 = vmatpush.msra.mxu0 %v1048
  %1740 = vmatpush.msra.mxu0 %v1044
  %1741 = vmatpush.msra.mxu0 %v1040
  %1742 = vmatpush.msra.mxu0 %v1036
  %1743 = vmatpush.msra.mxu0 %v1032
  %1744 = vmatpush.msra.mxu0 %v1028
  %1745 = vmatpush.msra.mxu0 %v1024
  %1746 = vmatpush.msra.mxu0 %v1020
  %1747 = vmatpush.msra.mxu0 %v1016
  %1748 = vmatpush.msra.mxu0 %v1012
  %1749 = vmatpush.msra.mxu0 %v1008
  %1750 = vmatmul.f32.gmra.mxu0 %v39
  %v1751 = vpop.f32.mrf.mxu0
  %v1752 = vadd.f32 %v1732, %v1751
  %1753 = vdwg.mxu0
  %1754 = vmatpush.msra.mxu0 %v1132
  %1755 = vmatpush.msra.mxu0 %v1128
  %1756 = vmatpush.msra.mxu0 %v1124
  %1757 = vmatpush.msra.mxu0 %v1120
  %1758 = vmatpush.msra.mxu0 %v1116
  %1759 = vmatpush.msra.mxu0 %v1112
  %1760 = vmatpush.msra.mxu0 %v1108
  %1761 = vmatpush.msra.mxu0 %v1104
  %1762 = vmatpush.msra.mxu0 %v1100
  %1763 = vmatpush.msra.mxu0 %v1096
  %1764 = vmatpush.msra.mxu0 %v1092
  %1765 = vmatpush.msra.mxu0 %v1088
  %1766 = vmatpush.msra.mxu0 %v1084
  %1767 = vmatpush.msra.mxu0 %v1080
  %1768 = vmatpush.msra.mxu0 %v1076
  %1769 = vmatpush.msra.mxu0 %v1072
  %1770 = vmatmul.f32.gmra.mxu0 %v40
  %v1771 = vpop.f32.mrf.mxu0
  %v1772 = vadd.f32 %v1752, %v1771
  %1773 = vdwg.mxu0
  %1774 = vmatpush.msra.mxu0 %v1196
  %1775 = vmatpush.msra.mxu0 %v1192
  %1776 = vmatpush.msra.mxu0 %v1188
  %1777 = vmatpush.msra.mxu0 %v1184
  %1778 = vmatpush.msra.mxu0 %v1180
  %1779 = vmatpush.msra.mxu0 %v1176
  %1780 = vmatpush.msra.mxu0 %v1172
  %1781 = vmatpush.msra.mxu0 %v1168
  %1782 = vmatpush.msra.mxu0 %v1164
  %1783 = vmatpush.msra.mxu0 %v1160
  %1784 = vmatpush.msra.mxu0 %v1156
  %1785 = vmatpush.msra.mxu0 %v1152
  %1786 = vmatpush.msra.mxu0 %v1148
  %1787 = vmatpush.msra.mxu0 %v1144
  %1788 = vmatpush.msra.mxu0 %v1140
  %1789 = vmatpush.msra.mxu0 %v1136
  %1790 = vmatmul.f32.gmra.mxu0 %v41
  %v1791 = vpop.f32.mrf.mxu0
  %v1792 = vadd.f32 %v1772, %v1791
  %1793 = vdwg.mxu0
  %1794 = vmatpush.msra.mxu0 %v1260
  %1795 = vmatpush.msra.mxu0 %v1256
  %1796 = vmatpush.msra.mxu0 %v1252
  %1797 = vmatpush.msra.mxu0 %v1248
  %1798 = vmatpush.msra.mxu0 %v1244
  %1799 = vmatpush.msra.mxu0 %v1240
  %1800 = vmatpush.msra.mxu0 %v1236
  %1801 = vmatpush.msra.mxu0 %v1232
  %1802 = vmatpush.msra.mxu0 %v1228
  %1803 = vmatpush.msra.mxu0 %v1224
  %1804 = vmatpush.msra.mxu0 %v1220
  %1805 = vmatpush.msra.mxu0 %v1216
  %1806 = vmatpush.msra.mxu0 %v1212
  %1807 = vmatpush.msra.mxu0 %v1208
  %1808 = vmatpush.msra.mxu0 %v1204
  %1809 = vmatpush.msra.mxu0 %v1200
  %1810 = vmatmul.f32.gmra.mxu0 %v42
  %v1811 = vpop.f32.mrf.mxu0
  %v1812 = vadd.f32 %v1792, %v1811
  %1813 = vdwg.mxu0
  %1814 = vmatpush.msra.mxu0 %v1324
  %1815 = vmatpush.msra.mxu0 %v1320
  %1816 = vmatpush.msra.mxu0 %v1316
  %1817 = vmatpush.msra.mxu0 %v1312
  %1818 = vmatpush.msra.mxu0 %v1308
  %1819 = vmatpush.msra.mxu0 %v1304
  %1820 = vmatpush.msra.mxu0 %v1300
  %1821 = vmatpush.msra.mxu0 %v1296
  %1822 = vmatpush.msra.mxu0 %v1292
  %1823 = vmatpush.msra.mxu0 %v1288
  %1824 = vmatpush.msra.mxu0 %v1284
  %1825 = vmatpush.msra.mxu0 %v1280
  %1826 = vmatpush.msra.mxu0 %v1276
  %1827 = vmatpush.msra.mxu0 %v1272
  %1828 = vmatpush.msra.mxu0 %v1268
  %1829 = vmatpush.msra.mxu0 %v1264
  %1830 = vmatmul.f32.gmra.mxu0 %v43
  %v1831 = vpop.f32.mrf.mxu0
  %v1832 = vadd.f32 %v1812, %v1831
  %1833 = vdwg.mxu0
  %1834 = vmatpush.msra.mxu0 %v1388
  %1835 = vmatpush.msra.mxu0 %v1384
  %1836 = vmatpush.msra.mxu0 %v1380
  %1837 = vmatpush.msra.mxu0 %v1376
  %1838 = vmatpush.msra.mxu0 %v1372
  %1839 = vmatpush.msra.mxu0 %v1368
  %1840 = vmatpush.msra.mxu0 %v1364
  %1841 = vmatpush.msra.mxu0 %v1360
  %1842 = vmatpush.msra.mxu0 %v1356
  %1843 = vmatpush.msra.mxu0 %v1352
  %1844 = vmatpush.msra.mxu0 %v1348
  %1845 = vmatpush.msra.mxu0 %v1344
  %1846 = vmatpush.msra.mxu0 %v1340
  %1847 = vmatpush.msra.mxu0 %v1336
  %1848 = vmatpush.msra.mxu0 %v1332
  %1849 = vmatpush.msra.mxu0 %v1328
  %1850 = vmatmul.f32.gmra.mxu0 %v44
  %v1851 = vpop.f32.mrf.mxu0
  %v1852 = vadd.f32 %v1832, %v1851
  %1853 = vdwg.mxu0
  %1854 = vmatpush.msra.mxu0 %v1452
  %1855 = vmatpush.msra.mxu0 %v1448
  %1856 = vmatpush.msra.mxu0 %v1444
  %1857 = vmatpush.msra.mxu0 %v1440
  %1858 = vmatpush.msra.mxu0 %v1436
  %1859 = vmatpush.msra.mxu0 %v1432
  %1860 = vmatpush.msra.mxu0 %v1428
  %1861 = vmatpush.msra.mxu0 %v1424
  %1862 = vmatpush.msra.mxu0 %v1420
  %1863 = vmatpush.msra.mxu0 %v1416
  %1864 = vmatpush.msra.mxu0 %v1412
  %1865 = vmatpush.msra.mxu0 %v1408
  %1866 = vmatpush.msra.mxu0 %v1404
  %1867 = vmatpush.msra.mxu0 %v1400
  %1868 = vmatpush.msra.mxu0 %v1396
  %1869 = vmatpush.msra.mxu0 %v1392
  %1870 = vmatmul.f32.gmra.mxu0 %v45
  %v1871 = vpop.f32.mrf.mxu0
  %v1872 = vadd.f32 %v1852, %v1871
  %1873 = vdwg.mxu0
  %1874 = vmatpush.msra.mxu0 %v1516
  %1875 = vmatpush.msra.mxu0 %v1512
  %1876 = vmatpush.msra.mxu0 %v1508
  %1877 = vmatpush.msra.mxu0 %v1504
  %1878 = vmatpush.msra.mxu0 %v1500
  %1879 = vmatpush.msra.mxu0 %v1496
  %1880 = vmatpush.msra.mxu0 %v1492
  %1881 = vmatpush.msra.mxu0 %v1488
  %1882 = vmatpush.msra.mxu0 %v1484
  %1883 = vmatpush.msra.mxu0 %v1480
  %1884 = vmatpush.msra.mxu0 %v1476
  %1885 = vmatpush.msra.mxu0 %v1472
  %1886 = vmatpush.msra.mxu0 %v1468
  %1887 = vmatpush.msra.mxu0 %v1464
  %1888 = vmatpush.msra.mxu0 %v1460
  %1889 = vmatpush.msra.mxu0 %v1456
  %1890 = vmatmul.f32.gmra.mxu0 %v46
  %v1891 = vpop.f32.mrf.mxu0
  %v1892 = vadd.f32 %v1872, %v1891
  %1893 = vdwg.mxu0
  %1894 = vmatpush.msra.mxu0 %v1580
  %1895 = vmatpush.msra.mxu0 %v1576
  %1896 = vmatpush.msra.mxu0 %v1572
  %1897 = vmatpush.msra.mxu0 %v1568
  %1898 = vmatpush.msra.mxu0 %v1564
  %1899 = vmatpush.msra.mxu0 %v1560
  %1900 = vmatpush.msra.mxu0 %v1556
  %1901 = vmatpush.msra.mxu0 %v1552
  %1902 = vmatpush.msra.mxu0 %v1548
  %1903 = vmatpush.msra.mxu0 %v1544
  %1904 = vmatpush.msra.mxu0 %v1540
  %1905 = vmatpush.msra.mxu0 %v1536
  %1906 = vmatpush.msra.mxu0 %v1532
  %1907 = vmatpush.msra.mxu0 %v1528
  %1908 = vmatpush.msra.mxu0 %v1524
  %1909 = vmatpush.msra.mxu0 %v1520
  %1910 = vmatmul.f32.gmra.mxu0 %v47
  %v1911 = vpop.f32.mrf.mxu0
  %v1912 = vadd.f32 %v1892, %v1911
  %1913 = vdwg.mxu0
  %1914 = vmatpush.msra.mxu0 %v621
  %1915 = vmatpush.msra.mxu0 %v617
  %1916 = vmatpush.msra.mxu0 %v613
  %1917 = vmatpush.msra.mxu0 %v609
  %1918 = vmatpush.msra.mxu0 %v605
  %1919 = vmatpush.msra.mxu0 %v601
  %1920 = vmatpush.msra.mxu0 %v597
  %1921 = vmatpush.msra.mxu0 %v593
  %1922 = vmatpush.msra.mxu0 %v589
  %1923 = vmatpush.msra.mxu0 %v585
  %1924 = vmatpush.msra.mxu0 %v581
  %1925 = vmatpush.msra.mxu0 %v577
  %1926 = vmatpush.msra.mxu0 %v573
  %1927 = vmatpush.msra.mxu0 %v569
  %1928 = vmatpush.msra.mxu0 %v565
  %1929 = vmatpush.msra.mxu0 %v561
  %1930 = vmatmul.f32.gmra.mxu0 %v32
  %v1931 = vpop.f32.mrf.mxu0
  %v1932 = vadd.f32 %v1587, %v1931
  %1933 = vdwg.mxu0
  %1934 = vmatpush.msra.mxu0 %v685
  %1935 = vmatpush.msra.mxu0 %v681
  %1936 = vmatpush.msra.mxu0 %v677
  %1937 = vmatpush.msra.mxu0 %v673
  %1938 = vmatpush.msra.mxu0 %v669
  %1939 = vmatpush.msra.mxu0 %v665
  %1940 = vmatpush.msra.mxu0 %v661
  %1941 = vmatpush.msra.mxu0 %v657
  %1942 = vmatpush.msra.mxu0 %v653
  %1943 = vmatpush.msra.mxu0 %v649
  %1944 = vmatpush.msra.mxu0 %v645
  %1945 = vmatpush.msra.mxu0 %v641
  %1946 = vmatpush.msra.mxu0 %v637
  %1947 = vmatpush.msra.mxu0 %v633
  %1948 = vmatpush.msra.mxu0 %v629
  %1949 = vmatpush.msra.mxu0 %v625
  %1950 = vmatmul.f32.gmra.mxu0 %v33
  %v1951 = vpop.f32.mrf.mxu0
  %v1952 = vadd.f32 %v1932, %v1951
  %1953 = vdwg.mxu0
  %1954 = vmatpush.msra.mxu0 %v749
  %1955 = vmatpush.msra.mxu0 %v745
  %1956 = vmatpush.msra.mxu0 %v741
  %1957 = vmatpush.msra.mxu0 %v737
  %1958 = vmatpush.msra.mxu0 %v733
  %1959 = vmatpush.msra.mxu0 %v729
  %1960 = vmatpush.msra.mxu0 %v725
  %1961 = vmatpush.msra.mxu0 %v721
  %1962 = vmatpush.msra.mxu0 %v717
  %1963 = vmatpush.msra.mxu0 %v713
  %1964 = vmatpush.msra.mxu0 %v709
  %1965 = vmatpush.msra.mxu0 %v705
  %1966 = vmatpush.msra.mxu0 %v701
  %1967 = vmatpush.msra.mxu0 %v697
  %1968 = vmatpush.msra.mxu0 %v693
  %1969 = vmatpush.msra.mxu0 %v689
  %1970 = vmatmul.f32.gmra.mxu0 %v34
  %v1971 = vpop.f32.mrf.mxu0
  %v1972 = vadd.f32 %v1952, %v1971
  %1973 = vdwg.mxu0
  %1974 = vmatpush.msra.mxu0 %v813
  %1975 = vmatpush.msra.mxu0 %v809
  %1976 = vmatpush.msra.mxu0 %v805
  %1977 = vmatpush.msra.mxu0 %v801
  %1978 = vmatpush.msra.mxu0 %v797
  %1979 = vmatpush.msra.mxu0 %v793
  %1980 = vmatpush.msra.mxu0 %v789
  %1981 = vmatpush.msra.mxu0 %v785
  %1982 = vmatpush.msra.mxu0 %v781
  %1983 = vmatpush.msra.mxu0 %v777
  %1984 = vmatpush.msra.mxu0 %v773
  %1985 = vmatpush.msra.mxu0 %v769
  %1986 = vmatpush.msra.mxu0 %v765
  %1987 = vmatpush.msra.mxu0 %v761
  %1988 = vmatpush.msra.mxu0 %v757
  %1989 = vmatpush.msra.mxu0 %v753
  %1990 = vmatmul.f32.gmra.mxu0 %v35
  %v1991 = vpop.f32.mrf.mxu0
  %v1992 = vadd.f32 %v1972, %v1991
  %1993 = vdwg.mxu0
  %1994 = vmatpush.msra.mxu0 %v877
  %1995 = vmatpush.msra.mxu0 %v873
  %1996 = vmatpush.msra.mxu0 %v869
  %1997 = vmatpush.msra.mxu0 %v865
  %1998 = vmatpush.msra.mxu0 %v861
  %1999 = vmatpush.msra.mxu0 %v857
  %2000 = vmatpush.msra.mxu0 %v853
  %2001 = vmatpush.msra.mxu0 %v849
  %2002 = vmatpush.msra.mxu0 %v845
  %2003 = vmatpush.msra.mxu0 %v841
  %2004 = vmatpush.msra.mxu0 %v837
  %2005 = vmatpush.msra.mxu0 %v833
  %2006 = vmatpush.msra.mxu0 %v829
  %2007 = vmatpush.msra.mxu0 %v825
  %2008 = vmatpush.msra.mxu0 %v821
  %2009 = vmatpush.msra.mxu0 %v817
  %2010 = vmatmul.f32.gmra.mxu0 %v36
  %v2011 = vpop.f32.mrf.mxu0
  %v2012 = vadd.f32 %v1992, %v2011
  %2013 = vdwg.mxu0
  %2014 = vmatpush.msra.mxu0 %v941
  %2015 = vmatpush.msra.mxu0 %v937
  %2016 = vmatpush.msra.mxu0 %v933
  %2017 = vmatpush.msra.mxu0 %v929
  %2018 = vmatpush.msra.mxu0 %v925
  %2019 = vmatpush.msra.mxu0 %v921
  %2020 = vmatpush.msra.mxu0 %v917
  %2021 = vmatpush.msra.mxu0 %v913
  %2022 = vmatpush.msra.mxu0 %v909
  %2023 = vmatpush.msra.mxu0 %v905
  %2024 = vmatpush.msra.mxu0 %v901
  %2025 = vmatpush.msra.mxu0 %v897
  %2026 = vmatpush.msra.mxu0 %v893
  %2027 = vmatpush.msra.mxu0 %v889
  %2028 = vmatpush.msra.mxu0 %v885
  %2029 = vmatpush.msra.mxu0 %v881
  %2030 = vmatmul.f32.gmra.mxu0 %v37
  %v2031 = vpop.f32.mrf.mxu0
  %v2032 = vadd.f32 %v2012, %v2031
  %2033 = vdwg.mxu0
  %2034 = vmatpush.msra.mxu0 %v1005
  %2035 = vmatpush.msra.mxu0 %v1001
  %2036 = vmatpush.msra.mxu0 %v997
  %2037 = vmatpush.msra.mxu0 %v993
  %2038 = vmatpush.msra.mxu0 %v989
  %2039 = vmatpush.msra.mxu0 %v985
  %2040 = vmatpush.msra.mxu0 %v981
  %2041 = vmatpush.msra.mxu0 %v977
  %2042 = vmatpush.msra.mxu0 %v973
  %2043 = vmatpush.msra.mxu0 %v969
  %2044 = vmatpush.msra.mxu0 %v965
  %2045 = vmatpush.msra.mxu0 %v961
  %2046 = vmatpush.msra.mxu0 %v957
  %2047 = vmatpush.msra.mxu0 %v953
  %2048 = vmatpush.msra.mxu0 %v949
  %2049 = vmatpush.msra.mxu0 %v945
  %2050 = vmatmul.f32.gmra.mxu0 %v38
  %v2051 = vpop.f32.mrf.mxu0
  %v2052 = vadd.f32 %v2032, %v2051
  %2053 = vdwg.mxu0
  %2054 = vmatpush.msra.mxu0 %v1069
  %2055 = vmatpush.msra.mxu0 %v1065
  %2056 = vmatpush.msra.mxu0 %v1061
  %2057 = vmatpush.msra.mxu0 %v1057
  %2058 = vmatpush.msra.mxu0 %v1053
  %2059 = vmatpush.msra.mxu0 %v1049
  %2060 = vmatpush.msra.mxu0 %v1045
  %2061 = vmatpush.msra.mxu0 %v1041
  %2062 = vmatpush.msra.mxu0 %v1037
  %2063 = vmatpush.msra.mxu0 %v1033
  %2064 = vmatpush.msra.mxu0 %v1029
  %2065 = vmatpush.msra.mxu0 %v1025
  %2066 = vmatpush.msra.mxu0 %v1021
  %2067 = vmatpush.msra.mxu0 %v1017
  %2068 = vmatpush.msra.mxu0 %v1013
  %2069 = vmatpush.msra.mxu0 %v1009
  %2070 = vmatmul.f32.gmra.mxu0 %v39
  %v2071 = vpop.f32.mrf.mxu0
  %v2072 = vadd.f32 %v2052, %v2071
  %2073 = vdwg.mxu0
  %2074 = vmatpush.msra.mxu0 %v1133
  %2075 = vmatpush.msra.mxu0 %v1129
  %2076 = vmatpush.msra.mxu0 %v1125
  %2077 = vmatpush.msra.mxu0 %v1121
  %2078 = vmatpush.msra.mxu0 %v1117
  %2079 = vmatpush.msra.mxu0 %v1113
  %2080 = vmatpush.msra.mxu0 %v1109
  %2081 = vmatpush.msra.mxu0 %v1105
  %2082 = vmatpush.msra.mxu0 %v1101
  %2083 = vmatpush.msra.mxu0 %v1097
  %2084 = vmatpush.msra.mxu0 %v1093
  %2085 = vmatpush.msra.mxu0 %v1089
  %2086 = vmatpush.msra.mxu0 %v1085
  %2087 = vmatpush.msra.mxu0 %v1081
  %2088 = vmatpush.msra.mxu0 %v1077
  %2089 = vmatpush.msra.mxu0 %v1073
  %2090 = vmatmul.f32.gmra.mxu0 %v40
  %v2091 = vpop.f32.mrf.mxu0
  %v2092 = vadd.f32 %v2072, %v2091
  %2093 = vdwg.mxu0
  %2094 = vmatpush.msra.mxu0 %v1197
  %2095 = vmatpush.msra.mxu0 %v1193
  %2096 = vmatpush.msra.mxu0 %v1189
  %2097 = vmatpush.msra.mxu0 %v1185
  %2098 = vmatpush.msra.mxu0 %v1181
  %2099 = vmatpush.msra.mxu0 %v1177
  %2100 = vmatpush.msra.mxu0 %v1173
  %2101 = vmatpush.msra.mxu0 %v1169
  %2102 = vmatpush.msra.mxu0 %v1165
  %2103 = vmatpush.msra.mxu0 %v1161
  %2104 = vmatpush.msra.mxu0 %v1157
  %2105 = vmatpush.msra.mxu0 %v1153
  %2106 = vmatpush.msra.mxu0 %v1149
  %2107 = vmatpush.msra.mxu0 %v1145
  %2108 = vmatpush.msra.mxu0 %v1141
  %2109 = vmatpush.msra.mxu0 %v1137
  %2110 = vmatmul.f32.gmra.mxu0 %v41
  %v2111 = vpop.f32.mrf.mxu0
  %v2112 = vadd.f32 %v2092, %v2111
  %2113 = vdwg.mxu0
  %2114 = vmatpush.msra.mxu0 %v1261
  %2115 = vmatpush.msra.mxu0 %v1257
  %2116 = vmatpush.msra.mxu0 %v1253
  %2117 = vmatpush.msra.mxu0 %v1249
  %2118 = vmatpush.msra.mxu0 %v1245
  %2119 = vmatpush.msra.mxu0 %v1241
  %2120 = vmatpush.msra.mxu0 %v1237
  %2121 = vmatpush.msra.mxu0 %v1233
  %2122 = vmatpush.msra.mxu0 %v1229
  %2123 = vmatpush.msra.mxu0 %v1225
  %2124 = vmatpush.msra.mxu0 %v1221
  %2125 = vmatpush.msra.mxu0 %v1217
  %2126 = vmatpush.msra.mxu0 %v1213
  %2127 = vmatpush.msra.mxu0 %v1209
  %2128 = vmatpush.msra.mxu0 %v1205
  %2129 = vmatpush.msra.mxu0 %v1201
  %2130 = vmatmul.f32.gmra.mxu0 %v42
  %v2131 = vpop.f32.mrf.mxu0
  %v2132 = vadd.f32 %v2112, %v2131
  %2133 = vdwg.mxu0
  %2134 = vmatpush.msra.mxu0 %v1325
  %2135 = vmatpush.msra.mxu0 %v1321
  %2136 = vmatpush.msra.mxu0 %v1317
  %2137 = vmatpush.msra.mxu0 %v1313
  %2138 = vmatpush.msra.mxu0 %v1309
  %2139 = vmatpush.msra.mxu0 %v1305
  %2140 = vmatpush.msra.mxu0 %v1301
  %2141 = vmatpush.msra.mxu0 %v1297
  %2142 = vmatpush.msra.mxu0 %v1293
  %2143 = vmatpush.msra.mxu0 %v1289
  %2144 = vmatpush.msra.mxu0 %v1285
  %2145 = vmatpush.msra.mxu0 %v1281
  %2146 = vmatpush.msra.mxu0 %v1277
  %2147 = vmatpush.msra.mxu0 %v1273
  %2148 = vmatpush.msra.mxu0 %v1269
  %2149 = vmatpush.msra.mxu0 %v1265
  %2150 = vmatmul.f32.gmra.mxu0 %v43
  %v2151 = vpop.f32.mrf.mxu0
  %v2152 = vadd.f32 %v2132, %v2151
  %2153 = vdwg.mxu0
  %2154 = vmatpush.msra.mxu0 %v1389
  %2155 = vmatpush.msra.mxu0 %v1385
  %2156 = vmatpush.msra.mxu0 %v1381
  %2157 = vmatpush.msra.mxu0 %v1377
  %2158 = vmatpush.msra.mxu0 %v1373
  %2159 = vmatpush.msra.mxu0 %v1369
  %2160 = vmatpush.msra.mxu0 %v1365
  %2161 = vmatpush.msra.mxu0 %v1361
  %2162 = vmatpush.msra.mxu0 %v1357
  %2163 = vmatpush.msra.mxu0 %v1353
  %2164 = vmatpush.msra.mxu0 %v1349
  %2165 = vmatpush.msra.mxu0 %v1345
  %2166 = vmatpush.msra.mxu0 %v1341
  %2167 = vmatpush.msra.mxu0 %v1337
  %2168 = vmatpush.msra.mxu0 %v1333
  %2169 = vmatpush.msra.mxu0 %v1329
  %2170 = vmatmul.f32.gmra.mxu0 %v44
  %v2171 = vpop.f32.mrf.mxu0
  %v2172 = vadd.f32 %v2152, %v2171
  %2173 = vdwg.mxu0
  %2174 = vmatpush.msra.mxu0 %v1453
  %2175 = vmatpush.msra.mxu0 %v1449
  %2176 = vmatpush.msra.mxu0 %v1445
  %2177 = vmatpush.msra.mxu0 %v1441
  %2178 = vmatpush.msra.mxu0 %v1437
  %2179 = vmatpush.msra.mxu0 %v1433
  %2180 = vmatpush.msra.mxu0 %v1429
  %2181 = vmatpush.msra.mxu0 %v1425
  %2182 = vmatpush.msra.mxu0 %v1421
  %2183 = vmatpush.msra.mxu0 %v1417
  %2184 = vmatpush.msra.mxu0 %v1413
  %2185 = vmatpush.msra.mxu0 %v1409
  %2186 = vmatpush.msra.mxu0 %v1405
  %2187 = vmatpush.msra.mxu0 %v1401
  %2188 = vmatpush.msra.mxu0 %v1397
  %2189 = vmatpush.msra.mxu0 %v1393
  %2190 = vmatmul.f32.gmra.mxu0 %v45
  %v2191 = vpop.f32.mrf.mxu0
  %v2192 = vadd.f32 %v2172, %v2191
  %2193 = vdwg.mxu0
  %2194 = vmatpush.msra.mxu0 %v1517
  %2195 = vmatpush.msra.mxu0 %v1513
  %2196 = vmatpush.msra.mxu0 %v1509
  %2197 = vmatpush.msra.mxu0 %v1505
  %2198 = vmatpush.msra.mxu0 %v1501
  %2199 = vmatpush.msra.mxu0 %v1497
  %2200 = vmatpush.msra.mxu0 %v1493
  %2201 = vmatpush.msra.mxu0 %v1489
  %2202 = vmatpush.msra.mxu0 %v1485
  %2203 = vmatpush.msra.mxu0 %v1481
  %2204 = vmatpush.msra.mxu0 %v1477
  %2205 = vmatpush.msra.mxu0 %v1473
  %2206 = vmatpush.msra.mxu0 %v1469
  %2207 = vmatpush.msra.mxu0 %v1465
  %2208 = vmatpush.msra.mxu0 %v1461
  %2209 = vmatpush.msra.mxu0 %v1457
  %2210 = vmatmul.f32.gmra.mxu0 %v46
  %v2211 = vpop.f32.mrf.mxu0
  %v2212 = vadd.f32 %v2192, %v2211
  %2213 = vdwg.mxu0
  %2214 = vmatpush.msra.mxu0 %v1581
  %2215 = vmatpush.msra.mxu0 %v1577
  %2216 = vmatpush.msra.mxu0 %v1573
  %2217 = vmatpush.msra.mxu0 %v1569
  %2218 = vmatpush.msra.mxu0 %v1565
  %2219 = vmatpush.msra.mxu0 %v1561
  %2220 = vmatpush.msra.mxu0 %v1557
  %2221 = vmatpush.msra.mxu0 %v1553
  %2222 = vmatpush.msra.mxu0 %v1549
  %2223 = vmatpush.msra.mxu0 %v1545
  %2224 = vmatpush.msra.mxu0 %v1541
  %2225 = vmatpush.msra.mxu0 %v1537
  %2226 = vmatpush.msra.mxu0 %v1533
  %2227 = vmatpush.msra.mxu0 %v1529
  %2228 = vmatpush.msra.mxu0 %v1525
  %2229 = vmatpush.msra.mxu0 %v1521
  %2230 = vmatmul.f32.gmra.mxu0 %v47
  %v2231 = vpop.f32.mrf.mxu0
  %v2232 = vadd.f32 %v2212, %v2231
  %2233 = vdwg.mxu0
  %2234 = vmatpush.msra.mxu0 %v622
  %2235 = vmatpush.msra.mxu0 %v618
  %2236 = vmatpush.msra.mxu0 %v614
  %2237 = vmatpush.msra.mxu0 %v610
  %2238 = vmatpush.msra.mxu0 %v606
  %2239 = vmatpush.msra.mxu0 %v602
  %2240 = vmatpush.msra.mxu0 %v598
  %2241 = vmatpush.msra.mxu0 %v594
  %2242 = vmatpush.msra.mxu0 %v590
  %2243 = vmatpush.msra.mxu0 %v586
  %2244 = vmatpush.msra.mxu0 %v582
  %2245 = vmatpush.msra.mxu0 %v578
  %2246 = vmatpush.msra.mxu0 %v574
  %2247 = vmatpush.msra.mxu0 %v570
  %2248 = vmatpush.msra.mxu0 %v566
  %2249 = vmatpush.msra.mxu0 %v562
  %2250 = vmatmul.f32.gmra.mxu0 %v32
  %v2251 = vpop.f32.mrf.mxu0
  %v2252 = vadd.f32 %v1588, %v2251
  %2253 = vdwg.mxu0
  %2254 = vmatpush.msra.mxu0 %v686
  %2255 = vmatpush.msra.mxu0 %v682
  %2256 = vmatpush.msra.mxu0 %v678
  %2257 = vmatpush.msra.mxu0 %v674
  %2258 = vmatpush.msra.mxu0 %v670
  %2259 = vmatpush.msra.mxu0 %v666
  %2260 = vmatpush.msra.mxu0 %v662
  %2261 = vmatpush.msra.mxu0 %v658
  %2262 = vmatpush.msra.mxu0 %v654
  %2263 = vmatpush.msra.mxu0 %v650
  %2264 = vmatpush.msra.mxu0 %v646
  %2265 = vmatpush.msra.mxu0 %v642
  %2266 = vmatpush.msra.mxu0 %v638
  %2267 = vmatpush.msra.mxu0 %v634
  %2268 = vmatpush.msra.mxu0 %v630
  %2269 = vmatpush.msra.mxu0 %v626
  %2270 = vmatmul.f32.gmra.mxu0 %v33
  %v2271 = vpop.f32.mrf.mxu0
  %v2272 = vadd.f32 %v2252, %v2271
  %2273 = vdwg.mxu0
  %2274 = vmatpush.msra.mxu0 %v750
  %2275 = vmatpush.msra.mxu0 %v746
  %2276 = vmatpush.msra.mxu0 %v742
  %2277 = vmatpush.msra.mxu0 %v738
  %2278 = vmatpush.msra.mxu0 %v734
  %2279 = vmatpush.msra.mxu0 %v730
  %2280 = vmatpush.msra.mxu0 %v726
  %2281 = vmatpush.msra.mxu0 %v722
  %2282 = vmatpush.msra.mxu0 %v718
  %2283 = vmatpush.msra.mxu0 %v714
  %2284 = vmatpush.msra.mxu0 %v710
  %2285 = vmatpush.msra.mxu0 %v706
  %2286 = vmatpush.msra.mxu0 %v702
  %2287 = vmatpush.msra.mxu0 %v698
  %2288 = vmatpush.msra.mxu0 %v694
  %2289 = vmatpush.msra.mxu0 %v690
  %2290 = vmatmul.f32.gmra.mxu0 %v34
  %v2291 = vpop.f32.mrf.mxu0
  %v2292 = vadd.f32 %v2272, %v2291
  %2293 = vdwg.mxu0
  %2294 = vmatpush.msra.mxu0 %v814
  %2295 = vmatpush.msra.mxu0 %v810
  %2296 = vmatpush.msra.mxu0 %v806
  %2297 = vmatpush.msra.mxu0 %v802
  %2298 = vmatpush.msra.mxu0 %v798
  %2299 = vmatpush.msra.mxu0 %v794
  %2300 = vmatpush.msra.mxu0 %v790
  %2301 = vmatpush.msra.mxu0 %v786
  %2302 = vmatpush.msra.mxu0 %v782
  %2303 = vmatpush.msra.mxu0 %v778
  %2304 = vmatpush.msra.mxu0 %v774
  %2305 = vmatpush.msra.mxu0 %v770
  %2306 = vmatpush.msra.mxu0 %v766
  %2307 = vmatpush.msra.mxu0 %v762
  %2308 = vmatpush.msra.mxu0 %v758
  %2309 = vmatpush.msra.mxu0 %v754
  %2310 = vmatmul.f32.gmra.mxu0 %v35
  %v2311 = vpop.f32.mrf.mxu0
  %v2312 = vadd.f32 %v2292, %v2311
  %2313 = vdwg.mxu0
  %2314 = vmatpush.msra.mxu0 %v878
  %2315 = vmatpush.msra.mxu0 %v874
  %2316 = vmatpush.msra.mxu0 %v870
  %2317 = vmatpush.msra.mxu0 %v866
  %2318 = vmatpush.msra.mxu0 %v862
  %2319 = vmatpush.msra.mxu0 %v858
  %2320 = vmatpush.msra.mxu0 %v854
  %2321 = vmatpush.msra.mxu0 %v850
  %2322 = vmatpush.msra.mxu0 %v846
  %2323 = vmatpush.msra.mxu0 %v842
  %2324 = vmatpush.msra.mxu0 %v838
  %2325 = vmatpush.msra.mxu0 %v834
  %2326 = vmatpush.msra.mxu0 %v830
  %2327 = vmatpush.msra.mxu0 %v826
  %2328 = vmatpush.msra.mxu0 %v822
  %2329 = vmatpush.msra.mxu0 %v818
  %2330 = vmatmul.f32.gmra.mxu0 %v36
  %v2331 = vpop.f32.mrf.mxu0
  %v2332 = vadd.f32 %v2312, %v2331
  %2333 = vdwg.mxu0
  %2334 = vmatpush.msra.mxu0 %v942
  %2335 = vmatpush.msra.mxu0 %v938
  %2336 = vmatpush.msra.mxu0 %v934
  %2337 = vmatpush.msra.mxu0 %v930
  %2338 = vmatpush.msra.mxu0 %v926
  %2339 = vmatpush.msra.mxu0 %v922
  %2340 = vmatpush.msra.mxu0 %v918
  %2341 = vmatpush.msra.mxu0 %v914
  %2342 = vmatpush.msra.mxu0 %v910
  %2343 = vmatpush.msra.mxu0 %v906
  %2344 = vmatpush.msra.mxu0 %v902
  %2345 = vmatpush.msra.mxu0 %v898
  %2346 = vmatpush.msra.mxu0 %v894
  %2347 = vmatpush.msra.mxu0 %v890
  %2348 = vmatpush.msra.mxu0 %v886
  %2349 = vmatpush.msra.mxu0 %v882
  %2350 = vmatmul.f32.gmra.mxu0 %v37
  %v2351 = vpop.f32.mrf.mxu0
  %v2352 = vadd.f32 %v2332, %v2351
  %2353 = vdwg.mxu0
  %2354 = vmatpush.msra.mxu0 %v1006
  %2355 = vmatpush.msra.mxu0 %v1002
  %2356 = vmatpush.msra.mxu0 %v998
  %2357 = vmatpush.msra.mxu0 %v994
  %2358 = vmatpush.msra.mxu0 %v990
  %2359 = vmatpush.msra.mxu0 %v986
  %2360 = vmatpush.msra.mxu0 %v982
  %2361 = vmatpush.msra.mxu0 %v978
  %2362 = vmatpush.msra.mxu0 %v974
  %2363 = vmatpush.msra.mxu0 %v970
  %2364 = vmatpush.msra.mxu0 %v966
  %2365 = vmatpush.msra.mxu0 %v962
  %2366 = vmatpush.msra.mxu0 %v958
  %2367 = vmatpush.msra.mxu0 %v954
  %2368 = vmatpush.msra.mxu0 %v950
  %2369 = vmatpush.msra.mxu0 %v946
  %2370 = vmatmul.f32.gmra.mxu0 %v38
  %v2371 = vpop.f32.mrf.mxu0
  %v2372 = vadd.f32 %v2352, %v2371
  %2373 = vdwg.mxu0
  %2374 = vmatpush.msra.mxu0 %v1070
  %2375 = vmatpush.msra.mxu0 %v1066
  %2376 = vmatpush.msra.mxu0 %v1062
  %2377 = vmatpush.msra.mxu0 %v1058
  %2378 = vmatpush.msra.mxu0 %v1054
  %2379 = vmatpush.msra.mxu0 %v1050
  %2380 = vmatpush.msra.mxu0 %v1046
  %2381 = vmatpush.msra.mxu0 %v1042
  %2382 = vmatpush.msra.mxu0 %v1038
  %2383 = vmatpush.msra.mxu0 %v1034
  %2384 = vmatpush.msra.mxu0 %v1030
  %2385 = vmatpush.msra.mxu0 %v1026
  %2386 = vmatpush.msra.mxu0 %v1022
  %2387 = vmatpush.msra.mxu0 %v1018
  %2388 = vmatpush.msra.mxu0 %v1014
  %2389 = vmatpush.msra.mxu0 %v1010
  %2390 = vmatmul.f32.gmra.mxu0 %v39
  %v2391 = vpop.f32.mrf.mxu0
  %v2392 = vadd.f32 %v2372, %v2391
  %2393 = vdwg.mxu0
  %2394 = vmatpush.msra.mxu0 %v1134
  %2395 = vmatpush.msra.mxu0 %v1130
  %2396 = vmatpush.msra.mxu0 %v1126
  %2397 = vmatpush.msra.mxu0 %v1122
  %2398 = vmatpush.msra.mxu0 %v1118
  %2399 = vmatpush.msra.mxu0 %v1114
  %2400 = vmatpush.msra.mxu0 %v1110
  %2401 = vmatpush.msra.mxu0 %v1106
  %2402 = vmatpush.msra.mxu0 %v1102
  %2403 = vmatpush.msra.mxu0 %v1098
  %2404 = vmatpush.msra.mxu0 %v1094
  %2405 = vmatpush.msra.mxu0 %v1090
  %2406 = vmatpush.msra.mxu0 %v1086
  %2407 = vmatpush.msra.mxu0 %v1082
  %2408 = vmatpush.msra.mxu0 %v1078
  %2409 = vmatpush.msra.mxu0 %v1074
  %2410 = vmatmul.f32.gmra.mxu0 %v40
  %v2411 = vpop.f32.mrf.mxu0
  %v2412 = vadd.f32 %v2392, %v2411
  %2413 = vdwg.mxu0
  %2414 = vmatpush.msra.mxu0 %v1198
  %2415 = vmatpush.msra.mxu0 %v1194
  %2416 = vmatpush.msra.mxu0 %v1190
  %2417 = vmatpush.msra.mxu0 %v1186
  %2418 = vmatpush.msra.mxu0 %v1182
  %2419 = vmatpush.msra.mxu0 %v1178
  %2420 = vmatpush.msra.mxu0 %v1174
  %2421 = vmatpush.msra.mxu0 %v1170
  %2422 = vmatpush.msra.mxu0 %v1166
  %2423 = vmatpush.msra.mxu0 %v1162
  %2424 = vmatpush.msra.mxu0 %v1158
  %2425 = vmatpush.msra.mxu0 %v1154
  %2426 = vmatpush.msra.mxu0 %v1150
  %2427 = vmatpush.msra.mxu0 %v1146
  %2428 = vmatpush.msra.mxu0 %v1142
  %2429 = vmatpush.msra.mxu0 %v1138
  %2430 = vmatmul.f32.gmra.mxu0 %v41
  %v2431 = vpop.f32.mrf.mxu0
  %v2432 = vadd.f32 %v2412, %v2431
  %2433 = vdwg.mxu0
  %2434 = vmatpush.msra.mxu0 %v1262
  %2435 = vmatpush.msra.mxu0 %v1258
  %2436 = vmatpush.msra.mxu0 %v1254
  %2437 = vmatpush.msra.mxu0 %v1250
  %2438 = vmatpush.msra.mxu0 %v1246
  %2439 = vmatpush.msra.mxu0 %v1242
  %2440 = vmatpush.msra.mxu0 %v1238
  %2441 = vmatpush.msra.mxu0 %v1234
  %2442 = vmatpush.msra.mxu0 %v1230
  %2443 = vmatpush.msra.mxu0 %v1226
  %2444 = vmatpush.msra.mxu0 %v1222
  %2445 = vmatpush.msra.mxu0 %v1218
  %2446 = vmatpush.msra.mxu0 %v1214
  %2447 = vmatpush.msra.mxu0 %v1210
  %2448 = vmatpush.msra.mxu0 %v1206
  %2449 = vmatpush.msra.mxu0 %v1202
  %2450 = vmatmul.f32.gmra.mxu0 %v42
  %v2451 = vpop.f32.mrf.mxu0
  %v2452 = vadd.f32 %v2432, %v2451
  %2453 = vdwg.mxu0
  %2454 = vmatpush.msra.mxu0 %v1326
  %2455 = vmatpush.msra.mxu0 %v1322
  %2456 = vmatpush.msra.mxu0 %v1318
  %2457 = vmatpush.msra.mxu0 %v1314
  %2458 = vmatpush.msra.mxu0 %v1310
  %2459 = vmatpush.msra.mxu0 %v1306
  %2460 = vmatpush.msra.mxu0 %v1302
  %2461 = vmatpush.msra.mxu0 %v1298
  %2462 = vmatpush.msra.mxu0 %v1294
  %2463 = vmatpush.msra.mxu0 %v1290
  %2464 = vmatpush.msra.mxu0 %v1286
  %2465 = vmatpush.msra.mxu0 %v1282
  %2466 = vmatpush.msra.mxu0 %v1278
  %2467 = vmatpush.msra.mxu0 %v1274
  %2468 = vmatpush.msra.mxu0 %v1270
  %2469 = vmatpush.msra.mxu0 %v1266
  %2470 = vmatmul.f32.gmra.mxu0 %v43
  %v2471 = vpop.f32.mrf.mxu0
  %v2472 = vadd.f32 %v2452, %v2471
  %2473 = vdwg.mxu0
  %2474 = vmatpush.msra.mxu0 %v1390
  %2475 = vmatpush.msra.mxu0 %v1386
  %2476 = vmatpush.msra.mxu0 %v1382
  %2477 = vmatpush.msra.mxu0 %v1378
  %2478 = vmatpush.msra.mxu0 %v1374
  %2479 = vmatpush.msra.mxu0 %v1370
  %2480 = vmatpush.msra.mxu0 %v1366
  %2481 = vmatpush.msra.mxu0 %v1362
  %2482 = vmatpush.msra.mxu0 %v1358
  %2483 = vmatpush.msra.mxu0 %v1354
  %2484 = vmatpush.msra.mxu0 %v1350
  %2485 = vmatpush.msra.mxu0 %v1346
  %2486 = vmatpush.msra.mxu0 %v1342
  %2487 = vmatpush.msra.mxu0 %v1338
  %2488 = vmatpush.msra.mxu0 %v1334
  %2489 = vmatpush.msra.mxu0 %v1330
  %2490 = vmatmul.f32.gmra.mxu0 %v44
  %v2491 = vpop.f32.mrf.mxu0
  %v2492 = vadd.f32 %v2472, %v2491
  %2493 = vdwg.mxu0
  %2494 = vmatpush.msra.mxu0 %v1454
  %2495 = vmatpush.msra.mxu0 %v1450
  %2496 = vmatpush.msra.mxu0 %v1446
  %2497 = vmatpush.msra.mxu0 %v1442
  %2498 = vmatpush.msra.mxu0 %v1438
  %2499 = vmatpush.msra.mxu0 %v1434
  %2500 = vmatpush.msra.mxu0 %v1430
  %2501 = vmatpush.msra.mxu0 %v1426
  %2502 = vmatpush.msra.mxu0 %v1422
  %2503 = vmatpush.msra.mxu0 %v1418
  %2504 = vmatpush.msra.mxu0 %v1414
  %2505 = vmatpush.msra.mxu0 %v1410
  %2506 = vmatpush.msra.mxu0 %v1406
  %2507 = vmatpush.msra.mxu0 %v1402
  %2508 = vmatpush.msra.mxu0 %v1398
  %2509 = vmatpush.msra.mxu0 %v1394
  %2510 = vmatmul.f32.gmra.mxu0 %v45
  %v2511 = vpop.f32.mrf.mxu0
  %v2512 = vadd.f32 %v2492, %v2511
  %2513 = vdwg.mxu0
  %2514 = vmatpush.msra.mxu0 %v1518
  %2515 = vmatpush.msra.mxu0 %v1514
  %2516 = vmatpush.msra.mxu0 %v1510
  %2517 = vmatpush.msra.mxu0 %v1506
  %2518 = vmatpush.msra.mxu0 %v1502
  %2519 = vmatpush.msra.mxu0 %v1498
  %2520 = vmatpush.msra.mxu0 %v1494
  %2521 = vmatpush.msra.mxu0 %v1490
  %2522 = vmatpush.msra.mxu0 %v1486
  %2523 = vmatpush.msra.mxu0 %v1482
  %2524 = vmatpush.msra.mxu0 %v1478
  %2525 = vmatpush.msra.mxu0 %v1474
  %2526 = vmatpush.msra.mxu0 %v1470
  %2527 = vmatpush.msra.mxu0 %v1466
  %2528 = vmatpush.msra.mxu0 %v1462
  %2529 = vmatpush.msra.mxu0 %v1458
  %2530 = vmatmul.f32.gmra.mxu0 %v46
  %v2531 = vpop.f32.mrf.mxu0
  %v2532 = vadd.f32 %v2512, %v2531
  %2533 = vdwg.mxu0
  %2534 = vmatpush.msra.mxu0 %v1582
  %2535 = vmatpush.msra.mxu0 %v1578
  %2536 = vmatpush.msra.mxu0 %v1574
  %2537 = vmatpush.msra.mxu0 %v1570
  %2538 = vmatpush.msra.mxu0 %v1566
  %2539 = vmatpush.msra.mxu0 %v1562
  %2540 = vmatpush.msra.mxu0 %v1558
  %2541 = vmatpush.msra.mxu0 %v1554
  %2542 = vmatpush.msra.mxu0 %v1550
  %2543 = vmatpush.msra.mxu0 %v1546
  %2544 = vmatpush.msra.mxu0 %v1542
  %2545 = vmatpush.msra.mxu0 %v1538
  %2546 = vmatpush.msra.mxu0 %v1534
  %2547 = vmatpush.msra.mxu0 %v1530
  %2548 = vmatpush.msra.mxu0 %v1526
  %2549 = vmatpush.msra.mxu0 %v1522
  %2550 = vmatmul.f32.gmra.mxu0 %v47
  %v2551 = vpop.f32.mrf.mxu0
  %v2552 = vadd.f32 %v2532, %v2551
  %2553 = vdwg.mxu0
  %2554 = vmatpush.msra.mxu0 %v623
  %2555 = vmatpush.msra.mxu0 %v619
  %2556 = vmatpush.msra.mxu0 %v615
  %2557 = vmatpush.msra.mxu0 %v611
  %2558 = vmatpush.msra.mxu0 %v607
  %2559 = vmatpush.msra.mxu0 %v603
  %2560 = vmatpush.msra.mxu0 %v599
  %2561 = vmatpush.msra.mxu0 %v595
  %2562 = vmatpush.msra.mxu0 %v591
  %2563 = vmatpush.msra.mxu0 %v587
  %2564 = vmatpush.msra.mxu0 %v583
  %2565 = vmatpush.msra.mxu0 %v579
  %2566 = vmatpush.msra.mxu0 %v575
  %2567 = vmatpush.msra.mxu0 %v571
  %2568 = vmatpush.msra.mxu0 %v567
  %2569 = vmatpush.msra.mxu0 %v563
  %2570 = vmatmul.f32.gmra.mxu0 %v32
  %v2571 = vpop.f32.mrf.mxu0
  %v2572 = vadd.f32 %v1589, %v2571
  %2573 = vdwg.mxu0
  %2574 = vmatpush.msra.mxu0 %v687
  %2575 = vmatpush.msra.mxu0 %v683
  %2576 = vmatpush.msra.mxu0 %v679
  %2577 = vmatpush.msra.mxu0 %v675
  %2578 = vmatpush.msra.mxu0 %v671
  %2579 = vmatpush.msra.mxu0 %v667
  %2580 = vmatpush.msra.mxu0 %v663
  %2581 = vmatpush.msra.mxu0 %v659
  %2582 = vmatpush.msra.mxu0 %v655
  %2583 = vmatpush.msra.mxu0 %v651
  %2584 = vmatpush.msra.mxu0 %v647
  %2585 = vmatpush.msra.mxu0 %v643
  %2586 = vmatpush.msra.mxu0 %v639
  %2587 = vmatpush.msra.mxu0 %v635
  %2588 = vmatpush.msra.mxu0 %v631
  %2589 = vmatpush.msra.mxu0 %v627
  %2590 = vmatmul.f32.gmra.mxu0 %v33
  %v2591 = vpop.f32.mrf.mxu0
  %v2592 = vadd.f32 %v2572, %v2591
  %2593 = vdwg.mxu0
  %2594 = vmatpush.msra.mxu0 %v751
  %2595 = vmatpush.msra.mxu0 %v747
  %2596 = vmatpush.msra.mxu0 %v743
  %2597 = vmatpush.msra.mxu0 %v739
  %2598 = vmatpush.msra.mxu0 %v735
  %2599 = vmatpush.msra.mxu0 %v731
  %2600 = vmatpush.msra.mxu0 %v727
  %2601 = vmatpush.msra.mxu0 %v723
  %2602 = vmatpush.msra.mxu0 %v719
  %2603 = vmatpush.msra.mxu0 %v715
  %2604 = vmatpush.msra.mxu0 %v711
  %2605 = vmatpush.msra.mxu0 %v707
  %2606 = vmatpush.msra.mxu0 %v703
  %2607 = vmatpush.msra.mxu0 %v699
  %2608 = vmatpush.msra.mxu0 %v695
  %2609 = vmatpush.msra.mxu0 %v691
  %2610 = vmatmul.f32.gmra.mxu0 %v34
  %v2611 = vpop.f32.mrf.mxu0
  %v2612 = vadd.f32 %v2592, %v2611
  %2613 = vdwg.mxu0
  %2614 = vmatpush.msra.mxu0 %v815
  %2615 = vmatpush.msra.mxu0 %v811
  %2616 = vmatpush.msra.mxu0 %v807
  %2617 = vmatpush.msra.mxu0 %v803
  %2618 = vmatpush.msra.mxu0 %v799
  %2619 = vmatpush.msra.mxu0 %v795
  %2620 = vmatpush.msra.mxu0 %v791
  %2621 = vmatpush.msra.mxu0 %v787
  %2622 = vmatpush.msra.mxu0 %v783
  %2623 = vmatpush.msra.mxu0 %v779
  %2624 = vmatpush.msra.mxu0 %v775
  %2625 = vmatpush.msra.mxu0 %v771
  %2626 = vmatpush.msra.mxu0 %v767
  %2627 = vmatpush.msra.mxu0 %v763
  %2628 = vmatpush.msra.mxu0 %v759
  %2629 = vmatpush.msra.mxu0 %v755
  %2630 = vmatmul.f32.gmra.mxu0 %v35
  %v2631 = vpop.f32.mrf.mxu0
  %v2632 = vadd.f32 %v2612, %v2631
  %2633 = vdwg.mxu0
  %2634 = vmatpush.msra.mxu0 %v879
  %2635 = vmatpush.msra.mxu0 %v875
  %2636 = vmatpush.msra.mxu0 %v871
  %2637 = vmatpush.msra.mxu0 %v867
  %2638 = vmatpush.msra.mxu0 %v863
  %2639 = vmatpush.msra.mxu0 %v859
  %2640 = vmatpush.msra.mxu0 %v855
  %2641 = vmatpush.msra.mxu0 %v851
  %2642 = vmatpush.msra.mxu0 %v847
  %2643 = vmatpush.msra.mxu0 %v843
  %2644 = vmatpush.msra.mxu0 %v839
  %2645 = vmatpush.msra.mxu0 %v835
  %2646 = vmatpush.msra.mxu0 %v831
  %2647 = vmatpush.msra.mxu0 %v827
  %2648 = vmatpush.msra.mxu0 %v823
  %2649 = vmatpush.msra.mxu0 %v819
  %2650 = vmatmul.f32.gmra.mxu0 %v36
  %v2651 = vpop.f32.mrf.mxu0
  %v2652 = vadd.f32 %v2632, %v2651
  %2653 = vdwg.mxu0
  %2654 = vmatpush.msra.mxu0 %v943
  %2655 = vmatpush.msra.mxu0 %v939
  %2656 = vmatpush.msra.mxu0 %v935
  %2657 = vmatpush.msra.mxu0 %v931
  %2658 = vmatpush.msra.mxu0 %v927
  %2659 = vmatpush.msra.mxu0 %v923
  %2660 = vmatpush.msra.mxu0 %v919
  %2661 = vmatpush.msra.mxu0 %v915
  %2662 = vmatpush.msra.mxu0 %v911
  %2663 = vmatpush.msra.mxu0 %v907
  %2664 = vmatpush.msra.mxu0 %v903
  %2665 = vmatpush.msra.mxu0 %v899
  %2666 = vmatpush.msra.mxu0 %v895
  %2667 = vmatpush.msra.mxu0 %v891
  %2668 = vmatpush.msra.mxu0 %v887
  %2669 = vmatpush.msra.mxu0 %v883
  %2670 = vmatmul.f32.gmra.mxu0 %v37
  %v2671 = vpop.f32.mrf.mxu0
  %v2672 = vadd.f32 %v2652, %v2671
  %2673 = vdwg.mxu0
  %2674 = vmatpush.msra.mxu0 %v1007
  %2675 = vmatpush.msra.mxu0 %v1003
  %2676 = vmatpush.msra.mxu0 %v999
  %2677 = vmatpush.msra.mxu0 %v995
  %2678 = vmatpush.msra.mxu0 %v991
  %2679 = vmatpush.msra.mxu0 %v987
  %2680 = vmatpush.msra.mxu0 %v983
  %2681 = vmatpush.msra.mxu0 %v979
  %2682 = vmatpush.msra.mxu0 %v975
  %2683 = vmatpush.msra.mxu0 %v971
  %2684 = vmatpush.msra.mxu0 %v967
  %2685 = vmatpush.msra.mxu0 %v963
  %2686 = vmatpush.msra.mxu0 %v959
  %2687 = vmatpush.msra.mxu0 %v955
  %2688 = vmatpush.msra.mxu0 %v951
  %2689 = vmatpush.msra.mxu0 %v947
  %2690 = vmatmul.f32.gmra.mxu0 %v38
  %v2691 = vpop.f32.mrf.mxu0
  %v2692 = vadd.f32 %v2672, %v2691
  %2693 = vdwg.mxu0
  %2694 = vmatpush.msra.mxu0 %v1071
  %2695 = vmatpush.msra.mxu0 %v1067
  %2696 = vmatpush.msra.mxu0 %v1063
  %2697 = vmatpush.msra.mxu0 %v1059
  %2698 = vmatpush.msra.mxu0 %v1055
  %2699 = vmatpush.msra.mxu0 %v1051
  %2700 = vmatpush.msra.mxu0 %v1047
  %2701 = vmatpush.msra.mxu0 %v1043
  %2702 = vmatpush.msra.mxu0 %v1039
  %2703 = vmatpush.msra.mxu0 %v1035
  %2704 = vmatpush.msra.mxu0 %v1031
  %2705 = vmatpush.msra.mxu0 %v1027
  %2706 = vmatpush.msra.mxu0 %v1023
  %2707 = vmatpush.msra.mxu0 %v1019
  %2708 = vmatpush.msra.mxu0 %v1015
  %2709 = vmatpush.msra.mxu0 %v1011
  %2710 = vmatmul.f32.gmra.mxu0 %v39
  %v2711 = vpop.f32.mrf.mxu0
  %v2712 = vadd.f32 %v2692, %v2711
  %2713 = vdwg.mxu0
  %2714 = vmatpush.msra.mxu0 %v1135
  %2715 = vmatpush.msra.mxu0 %v1131
  %2716 = vmatpush.msra.mxu0 %v1127
  %2717 = vmatpush.msra.mxu0 %v1123
  %2718 = vmatpush.msra.mxu0 %v1119
  %2719 = vmatpush.msra.mxu0 %v1115
  %2720 = vmatpush.msra.mxu0 %v1111
  %2721 = vmatpush.msra.mxu0 %v1107
  %2722 = vmatpush.msra.mxu0 %v1103
  %2723 = vmatpush.msra.mxu0 %v1099
  %2724 = vmatpush.msra.mxu0 %v1095
  %2725 = vmatpush.msra.mxu0 %v1091
  %2726 = vmatpush.msra.mxu0 %v1087
  %2727 = vmatpush.msra.mxu0 %v1083
  %2728 = vmatpush.msra.mxu0 %v1079
  %2729 = vmatpush.msra.mxu0 %v1075
  %2730 = vmatmul.f32.gmra.mxu0 %v40
  %v2731 = vpop.f32.mrf.mxu0
  %v2732 = vadd.f32 %v2712, %v2731
  %2733 = vdwg.mxu0
  %2734 = vmatpush.msra.mxu0 %v1199
  %2735 = vmatpush.msra.mxu0 %v1195
  %2736 = vmatpush.msra.mxu0 %v1191
  %2737 = vmatpush.msra.mxu0 %v1187
  %2738 = vmatpush.msra.mxu0 %v1183
  %2739 = vmatpush.msra.mxu0 %v1179
  %2740 = vmatpush.msra.mxu0 %v1175
  %2741 = vmatpush.msra.mxu0 %v1171
  %2742 = vmatpush.msra.mxu0 %v1167
  %2743 = vmatpush.msra.mxu0 %v1163
  %2744 = vmatpush.msra.mxu0 %v1159
  %2745 = vmatpush.msra.mxu0 %v1155
  %2746 = vmatpush.msra.mxu0 %v1151
  %2747 = vmatpush.msra.mxu0 %v1147
  %2748 = vmatpush.msra.mxu0 %v1143
  %2749 = vmatpush.msra.mxu0 %v1139
  %2750 = vmatmul.f32.gmra.mxu0 %v41
  %v2751 = vpop.f32.mrf.mxu0
  %v2752 = vadd.f32 %v2732, %v2751
  %2753 = vdwg.mxu0
  %2754 = vmatpush.msra.mxu0 %v1263
  %2755 = vmatpush.msra.mxu0 %v1259
  %2756 = vmatpush.msra.mxu0 %v1255
  %2757 = vmatpush.msra.mxu0 %v1251
  %2758 = vmatpush.msra.mxu0 %v1247
  %2759 = vmatpush.msra.mxu0 %v1243
  %2760 = vmatpush.msra.mxu0 %v1239
  %2761 = vmatpush.msra.mxu0 %v1235
  %2762 = vmatpush.msra.mxu0 %v1231
  %2763 = vmatpush.msra.mxu0 %v1227
  %2764 = vmatpush.msra.mxu0 %v1223
  %2765 = vmatpush.msra.mxu0 %v1219
  %2766 = vmatpush.msra.mxu0 %v1215
  %2767 = vmatpush.msra.mxu0 %v1211
  %2768 = vmatpush.msra.mxu0 %v1207
  %2769 = vmatpush.msra.mxu0 %v1203
  %2770 = vmatmul.f32.gmra.mxu0 %v42
  %v2771 = vpop.f32.mrf.mxu0
  %v2772 = vadd.f32 %v2752, %v2771
  %2773 = vdwg.mxu0
  %2774 = vmatpush.msra.mxu0 %v1327
  %2775 = vmatpush.msra.mxu0 %v1323
  %2776 = vmatpush.msra.mxu0 %v1319
  %2777 = vmatpush.msra.mxu0 %v1315
  %2778 = vmatpush.msra.mxu0 %v1311
  %2779 = vmatpush.msra.mxu0 %v1307
  %2780 = vmatpush.msra.mxu0 %v1303
  %2781 = vmatpush.msra.mxu0 %v1299
  %2782 = vmatpush.msra.mxu0 %v1295
  %2783 = vmatpush.msra.mxu0 %v1291
  %2784 = vmatpush.msra.mxu0 %v1287
  %2785 = vmatpush.msra.mxu0 %v1283
  %2786 = vmatpush.msra.mxu0 %v1279
  %2787 = vmatpush.msra.mxu0 %v1275
  %2788 = vmatpush.msra.mxu0 %v1271
  %2789 = vmatpush.msra.mxu0 %v1267
  %2790 = vmatmul.f32.gmra.mxu0 %v43
  %v2791 = vpop.f32.mrf.mxu0
  %v2792 = vadd.f32 %v2772, %v2791
  %2793 = vdwg.mxu0
  %2794 = vmatpush.msra.mxu0 %v1391
  %2795 = vmatpush.msra.mxu0 %v1387
  %2796 = vmatpush.msra.mxu0 %v1383
  %2797 = vmatpush.msra.mxu0 %v1379
  %2798 = vmatpush.msra.mxu0 %v1375
  %2799 = vmatpush.msra.mxu0 %v1371
  %2800 = vmatpush.msra.mxu0 %v1367
  %2801 = vmatpush.msra.mxu0 %v1363
  %2802 = vmatpush.msra.mxu0 %v1359
  %2803 = vmatpush.msra.mxu0 %v1355
  %2804 = vmatpush.msra.mxu0 %v1351
  %2805 = vmatpush.msra.mxu0 %v1347
  %2806 = vmatpush.msra.mxu0 %v1343
  %2807 = vmatpush.msra.mxu0 %v1339
  %2808 = vmatpush.msra.mxu0 %v1335
  %2809 = vmatpush.msra.mxu0 %v1331
  %2810 = vmatmul.f32.gmra.mxu0 %v44
  %v2811 = vpop.f32.mrf.mxu0
  %v2812 = vadd.f32 %v2792, %v2811
  %2813 = vdwg.mxu0
  %2814 = vmatpush.msra.mxu0 %v1455
  %2815 = vmatpush.msra.mxu0 %v1451
  %2816 = vmatpush.msra.mxu0 %v1447
  %2817 = vmatpush.msra.mxu0 %v1443
  %2818 = vmatpush.msra.mxu0 %v1439
  %2819 = vmatpush.msra.mxu0 %v1435
  %2820 = vmatpush.msra.mxu0 %v1431
  %2821 = vmatpush.msra.mxu0 %v1427
  %2822 = vmatpush.msra.mxu0 %v1423
  %2823 = vmatpush.msra.mxu0 %v1419
  %2824 = vmatpush.msra.mxu0 %v1415
  %2825 = vmatpush.msra.mxu0 %v1411
  %2826 = vmatpush.msra.mxu0 %v1407
  %2827 = vmatpush.msra.mxu0 %v1403
  %2828 = vmatpush.msra.mxu0 %v1399
  %2829 = vmatpush.msra.mxu0 %v1395
  %2830 = vmatmul.f32.gmra.mxu0 %v45
  %v2831 = vpop.f32.mrf.mxu0
  %v2832 = vadd.f32 %v2812, %v2831
  %2833 = vdwg.mxu0
  %2834 = vmatpush.msra.mxu0 %v1519
  %2835 = vmatpush.msra.mxu0 %v1515
  %2836 = vmatpush.msra.mxu0 %v1511
  %2837 = vmatpush.msra.mxu0 %v1507
  %2838 = vmatpush.msra.mxu0 %v1503
  %2839 = vmatpush.msra.mxu0 %v1499
  %2840 = vmatpush.msra.mxu0 %v1495
  %2841 = vmatpush.msra.mxu0 %v1491
  %2842 = vmatpush.msra.mxu0 %v1487
  %2843 = vmatpush.msra.mxu0 %v1483
  %2844 = vmatpush.msra.mxu0 %v1479
  %2845 = vmatpush.msra.mxu0 %v1475
  %2846 = vmatpush.msra.mxu0 %v1471
  %2847 = vmatpush.msra.mxu0 %v1467
  %2848 = vmatpush.msra.mxu0 %v1463
  %2849 = vmatpush.msra.mxu0 %v1459
  %2850 = vmatmul.f32.gmra.mxu0 %v46
  %v2851 = vpop.f32.mrf.mxu0
  %v2852 = vadd.f32 %v2832, %v2851
  %2853 = vdwg.mxu0
  %2854 = vmatpush.msra.mxu0 %v1583
  %2855 = vmatpush.msra.mxu0 %v1579
  %2856 = vmatpush.msra.mxu0 %v1575
  %2857 = vmatpush.msra.mxu0 %v1571
  %2858 = vmatpush.msra.mxu0 %v1567
  %2859 = vmatpush.msra.mxu0 %v1563
  %2860 = vmatpush.msra.mxu0 %v1559
  %2861 = vmatpush.msra.mxu0 %v1555
  %2862 = vmatpush.msra.mxu0 %v1551
  %2863 = vmatpush.msra.mxu0 %v1547
  %2864 = vmatpush.msra.mxu0 %v1543
  %2865 = vmatpush.msra.mxu0 %v1539
  %2866 = vmatpush.msra.mxu0 %v1535
  %2867 = vmatpush.msra.mxu0 %v1531
  %2868 = vmatpush.msra.mxu0 %v1527
  %2869 = vmatpush.msra.mxu0 %v1523
  %2870 = vmatmul.f32.gmra.mxu0 %v47
  %v2871 = vpop.f32.mrf.mxu0
  %v2872 = vadd.f32 %v2852, %v2871
  %2873 = vdwg.mxu0
  %v2874 = vxor.u32 %v1912, 2147483648
  %v2875 = vxor.u32 %v2232, 2147483648
  %v2876 = vxor.u32 %v2552, 2147483648
  %v2877 = vxor.u32 %v2872, 2147483648
  %v2878 = vmul.f32 %v2874, 1.442695
  %v2879 = vpow.pop %v2878
  %v2880 = vmul.f32 %v2875, 1.442695
  %v2881 = vpow.pop %v2880
  %v2882 = vmul.f32 %v2876, 1.442695
  %v2883 = vpow.pop %v2882
  %v2884 = vmul.f32 %v2877, 1.442695
  %v2885 = vpow.pop %v2884
  %v2886 = vadd.f32 %v2879, 1.0
  %v2887 = vadd.f32 %v2881, 1.0
  %v2888 = vadd.f32 %v2883, 1.0
  %v2889 = vadd.f32 %v2885, 1.0
  %v2890 = vrcp.pop %v2886
  %v2891 = vmul.f32 %v2886, %v2890
  %v2892 = vsub.f32 1.0, %v2891
  %v2893 = vmul.f32 %v2890, %v2892
  %v2894 = vadd.f32 %v2890, %v2893
  %vm2895 = vweird.f32 %v2886
  %vm2896 = vweird.f32 %v2890
  %vm2897 = vmor %vm2895, %vm2896
  %v2898 = vsel %vm2897, %v2890, %v2894
  %v2899 = vand.u32 2147483647, %v2886
  %vm2900 = vcmp.eq.f32.partialorder %v2899, 8.507059e+37
  %v2901 = vand.u32 %v2886, 2147483648
  %v2902 = vor.u32 1.1754944e-38, %v2901
  %v2903 = vsel %vm2900, %v2902, %v2898
  %v2904 = vmul.f32 1.0, %v2903
  %v2905 = vrcp.pop %v2887
  %v2906 = vmul.f32 %v2887, %v2905
  %v2907 = vsub.f32 1.0, %v2906
  %v2908 = vmul.f32 %v2905, %v2907
  %v2909 = vadd.f32 %v2905, %v2908
  %vm2910 = vweird.f32 %v2887
  %vm2911 = vweird.f32 %v2905
  %vm2912 = vmor %vm2910, %vm2911
  %v2913 = vsel %vm2912, %v2905, %v2909
  %v2914 = vand.u32 2147483647, %v2887
  %vm2915 = vcmp.eq.f32.partialorder %v2914, 8.507059e+37
  %v2916 = vand.u32 %v2887, 2147483648
  %v2917 = vor.u32 1.1754944e-38, %v2916
  %v2918 = vsel %vm2915, %v2917, %v2913
  %v2919 = vmul.f32 1.0, %v2918
  %v2920 = vrcp.pop %v2888
  %v2921 = vmul.f32 %v2888, %v2920
  %v2922 = vsub.f32 1.0, %v2921
  %v2923 = vmul.f32 %v2920, %v2922
  %v2924 = vadd.f32 %v2920, %v2923
  %vm2925 = vweird.f32 %v2888
  %vm2926 = vweird.f32 %v2920
  %vm2927 = vmor %vm2925, %vm2926
  %v2928 = vsel %vm2927, %v2920, %v2924
  %v2929 = vand.u32 2147483647, %v2888
  %vm2930 = vcmp.eq.f32.partialorder %v2929, 8.507059e+37
  %v2931 = vand.u32 %v2888, 2147483648
  %v2932 = vor.u32 1.1754944e-38, %v2931
  %v2933 = vsel %vm2930, %v2932, %v2928
  %v2934 = vmul.f32 1.0, %v2933
  %v2935 = vrcp.pop %v2889
  %v2936 = vmul.f32 %v2889, %v2935
  %v2937 = vsub.f32 1.0, %v2936
  %v2938 = vmul.f32 %v2935, %v2937
  %v2939 = vadd.f32 %v2935, %v2938
  %vm2940 = vweird.f32 %v2889
  %vm2941 = vweird.f32 %v2935
  %vm2942 = vmor %vm2940, %vm2941
  %v2943 = vsel %vm2942, %v2935, %v2939
  %v2944 = vand.u32 2147483647, %v2889
  %vm2945 = vcmp.eq.f32.partialorder %v2944, 8.507059e+37
  %v2946 = vand.u32 %v2889, 2147483648
  %v2947 = vor.u32 1.1754944e-38, %v2946
  %v2948 = vsel %vm2945, %v2947, %v2943
  %v2949 = vmul.f32 1.0, %v2948
  %v2950 = vld [vmem:[%s3] sm:$0xff]
  %v2951 = vld [vmem:[%s3 + $0x8] sm:$0xff]
  %v2952 = vld [vmem:[%s3 + $0x10] sm:$0xff]
  %v2953 = vld [vmem:[%s3 + $0x18] sm:$0xff]
  %v2954 = vld [vmem:[%s3 + $0x20] sm:$0xff]
  %v2955 = vld [vmem:[%s3 + $0x28] sm:$0xff]
  %v2956 = vld [vmem:[%s3 + $0x30] sm:$0xff]
  %v2957 = vld [vmem:[%s3 + $0x38] sm:$0xff]
  %v2958 = vld [vmem:[%s3 + $0x40] sm:$0xff]
  %v2959 = vld [vmem:[%s3 + $0x48] sm:$0xff]
  %v2960 = vld [vmem:[%s3 + $0x50] sm:$0xff]
  %v2961 = vld [vmem:[%s3 + $0x58] sm:$0xff]
  %v2962 = vld [vmem:[%s3 + $0x60] sm:$0xff]
  %v2963 = vld [vmem:[%s3 + $0x68] sm:$0xff]
  %v2964 = vld [vmem:[%s3 + $0x70] sm:$0xff]
  %v2965 = vld [vmem:[%s3 + $0x78] sm:$0xff]
  %v2966 = vld [vmem:[%s3 + $0x80] sm:$0xff]
  %v2967 = vld [vmem:[%s3 + $0x88] sm:$0xff]
  %v2968 = vld [vmem:[%s3 + $0x90] sm:$0xff]
  %v2969 = vld [vmem:[%s3 + $0x98] sm:$0xff]
  %v2970 = vld [vmem:[%s3 + $0xa0] sm:$0xff]
  %v2971 = vld [vmem:[%s3 + $0xa8] sm:$0xff]
  %v2972 = vld [vmem:[%s3 + $0xb0] sm:$0xff]
  %v2973 = vld [vmem:[%s3 + $0xb8] sm:$0xff]
  %v2974 = vld [vmem:[%s3 + $0xc0] sm:$0xff]
  %v2975 = vld [vmem:[%s3 + $0xc8] sm:$0xff]
  %v2976 = vld [vmem:[%s3 + $0xd0] sm:$0xff]
  %v2977 = vld [vmem:[%s3 + $0xd8] sm:$0xff]
  %v2978 = vld [vmem:[%s3 + $0xe0] sm:$0xff]
  %v2979 = vld [vmem:[%s3 + $0xe8] sm:$0xff]
  %v2980 = vld [vmem:[%s3 + $0xf0] sm:$0xff]
  %v2981 = vld [vmem:[%s3 + $0xf8] sm:$0xff]
  %v2982 = vld [vmem:[%s3 + $0x100] sm:$0xff]
  %v2983 = vld [vmem:[%s3 + $0x108] sm:$0xff]
  %v2984 = vld [vmem:[%s3 + $0x110] sm:$0xff]
  %v2985 = vld [vmem:[%s3 + $0x118] sm:$0xff]
  %v2986 = vld [vmem:[%s3 + $0x120] sm:$0xff]
  %v2987 = vld [vmem:[%s3 + $0x128] sm:$0xff]
  %v2988 = vld [vmem:[%s3 + $0x130] sm:$0xff]
  %v2989 = vld [vmem:[%s3 + $0x138] sm:$0xff]
  %v2990 = vld [vmem:[%s3 + $0x140] sm:$0xff]
  %v2991 = vld [vmem:[%s3 + $0x148] sm:$0xff]
  %v2992 = vld [vmem:[%s3 + $0x150] sm:$0xff]
  %v2993 = vld [vmem:[%s3 + $0x158] sm:$0xff]
  %v2994 = vld [vmem:[%s3 + $0x160] sm:$0xff]
  %v2995 = vld [vmem:[%s3 + $0x168] sm:$0xff]
  %v2996 = vld [vmem:[%s3 + $0x170] sm:$0xff]
  %v2997 = vld [vmem:[%s3 + $0x178] sm:$0xff]
  %v2998 = vld [vmem:[%s3 + $0x180] sm:$0xff]
  %v2999 = vld [vmem:[%s3 + $0x188] sm:$0xff]
  %v3000 = vld [vmem:[%s3 + $0x190] sm:$0xff]
  %v3001 = vld [vmem:[%s3 + $0x198] sm:$0xff]
  %v3002 = vld [vmem:[%s3 + $0x1a0] sm:$0xff]
  %v3003 = vld [vmem:[%s3 + $0x1a8] sm:$0xff]
  %v3004 = vld [vmem:[%s3 + $0x1b0] sm:$0xff]
  %v3005 = vld [vmem:[%s3 + $0x1b8] sm:$0xff]
  %v3006 = vld [vmem:[%s3 + $0x1c0] sm:$0xff]
  %v3007 = vld [vmem:[%s3 + $0x1c8] sm:$0xff]
  %v3008 = vld [vmem:[%s3 + $0x1d0] sm:$0xff]
  %v3009 = vld [vmem:[%s3 + $0x1d8] sm:$0xff]
  %v3010 = vld [vmem:[%s3 + $0x1e0] sm:$0xff]
  %v3011 = vld [vmem:[%s3 + $0x1e8] sm:$0xff]
  %v3012 = vld [vmem:[%s3 + $0x1f0] sm:$0xff]
  %v3013 = vld [vmem:[%s3 + $0x1f8] sm:$0xff]
  %v3014 = vunpack.c.l.bf16 %v2950
  %v3015 = vunpack.c.h.bf16 %v2950
  %v3016 = vunpack.c.l.bf16 %v2951
  %v3017 = vunpack.c.h.bf16 %v2951
  %v3018 = vunpack.c.l.bf16 %v2952
  %v3019 = vunpack.c.h.bf16 %v2952
  %v3020 = vunpack.c.l.bf16 %v2953
  %v3021 = vunpack.c.h.bf16 %v2953
  %v3022 = vunpack.c.l.bf16 %v2954
  %v3023 = vunpack.c.h.bf16 %v2954
  %v3024 = vunpack.c.l.bf16 %v2955
  %v3025 = vunpack.c.h.bf16 %v2955
  %v3026 = vunpack.c.l.bf16 %v2956
  %v3027 = vunpack.c.h.bf16 %v2956
  %v3028 = vunpack.c.l.bf16 %v2957
  %v3029 = vunpack.c.h.bf16 %v2957
  %v3030 = vunpack.c.l.bf16 %v2958
  %v3031 = vunpack.c.h.bf16 %v2958
  %v3032 = vunpack.c.l.bf16 %v2959
  %v3033 = vunpack.c.h.bf16 %v2959
  %v3034 = vunpack.c.l.bf16 %v2960
  %v3035 = vunpack.c.h.bf16 %v2960
  %v3036 = vunpack.c.l.bf16 %v2961
  %v3037 = vunpack.c.h.bf16 %v2961
  %v3038 = vunpack.c.l.bf16 %v2962
  %v3039 = vunpack.c.h.bf16 %v2962
  %v3040 = vunpack.c.l.bf16 %v2963
  %v3041 = vunpack.c.h.bf16 %v2963
  %v3042 = vunpack.c.l.bf16 %v2964
  %v3043 = vunpack.c.h.bf16 %v2964
  %v3044 = vunpack.c.l.bf16 %v2965
  %v3045 = vunpack.c.h.bf16 %v2965
  %v3046 = vunpack.c.l.bf16 %v2966
  %v3047 = vunpack.c.h.bf16 %v2966
  %v3048 = vunpack.c.l.bf16 %v2967
  %v3049 = vunpack.c.h.bf16 %v2967
  %v3050 = vunpack.c.l.bf16 %v2968
  %v3051 = vunpack.c.h.bf16 %v2968
  %v3052 = vunpack.c.l.bf16 %v2969
  %v3053 = vunpack.c.h.bf16 %v2969
  %v3054 = vunpack.c.l.bf16 %v2970
  %v3055 = vunpack.c.h.bf16 %v2970
  %v3056 = vunpack.c.l.bf16 %v2971
  %v3057 = vunpack.c.h.bf16 %v2971
  %v3058 = vunpack.c.l.bf16 %v2972
  %v3059 = vunpack.c.h.bf16 %v2972
  %v3060 = vunpack.c.l.bf16 %v2973
  %v3061 = vunpack.c.h.bf16 %v2973
  %v3062 = vunpack.c.l.bf16 %v2974
  %v3063 = vunpack.c.h.bf16 %v2974
  %v3064 = vunpack.c.l.bf16 %v2975
  %v3065 = vunpack.c.h.bf16 %v2975
  %v3066 = vunpack.c.l.bf16 %v2976
  %v3067 = vunpack.c.h.bf16 %v2976
  %v3068 = vunpack.c.l.bf16 %v2977
  %v3069 = vunpack.c.h.bf16 %v2977
  %v3070 = vunpack.c.l.bf16 %v2978
  %v3071 = vunpack.c.h.bf16 %v2978
  %v3072 = vunpack.c.l.bf16 %v2979
  %v3073 = vunpack.c.h.bf16 %v2979
  %v3074 = vunpack.c.l.bf16 %v2980
  %v3075 = vunpack.c.h.bf16 %v2980
  %v3076 = vunpack.c.l.bf16 %v2981
  %v3077 = vunpack.c.h.bf16 %v2981
  %v3078 = vunpack.c.l.bf16 %v2982
  %v3079 = vunpack.c.h.bf16 %v2982
  %v3080 = vunpack.c.l.bf16 %v2983
  %v3081 = vunpack.c.h.bf16 %v2983
  %v3082 = vunpack.c.l.bf16 %v2984
  %v3083 = vunpack.c.h.bf16 %v2984
  %v3084 = vunpack.c.l.bf16 %v2985
  %v3085 = vunpack.c.h.bf16 %v2985
  %v3086 = vunpack.c.l.bf16 %v2986
  %v3087 = vunpack.c.h.bf16 %v2986
  %v3088 = vunpack.c.l.bf16 %v2987
  %v3089 = vunpack.c.h.bf16 %v2987
  %v3090 = vunpack.c.l.bf16 %v2988
  %v3091 = vunpack.c.h.bf16 %v2988
  %v3092 = vunpack.c.l.bf16 %v2989
  %v3093 = vunpack.c.h.bf16 %v2989
  %v3094 = vunpack.c.l.bf16 %v2990
  %v3095 = vunpack.c.h.bf16 %v2990
  %v3096 = vunpack.c.l.bf16 %v2991
  %v3097 = vunpack.c.h.bf16 %v2991
  %v3098 = vunpack.c.l.bf16 %v2992
  %v3099 = vunpack.c.h.bf16 %v2992
  %v3100 = vunpack.c.l.bf16 %v2993
  %v3101 = vunpack.c.h.bf16 %v2993
  %v3102 = vunpack.c.l.bf16 %v2994
  %v3103 = vunpack.c.h.bf16 %v2994
  %v3104 = vunpack.c.l.bf16 %v2995
  %v3105 = vunpack.c.h.bf16 %v2995
  %v3106 = vunpack.c.l.bf16 %v2996
  %v3107 = vunpack.c.h.bf16 %v2996
  %v3108 = vunpack.c.l.bf16 %v2997
  %v3109 = vunpack.c.h.bf16 %v2997
  %v3110 = vunpack.c.l.bf16 %v2998
  %v3111 = vunpack.c.h.bf16 %v2998
  %v3112 = vunpack.c.l.bf16 %v2999
  %v3113 = vunpack.c.h.bf16 %v2999
  %v3114 = vunpack.c.l.bf16 %v3000
  %v3115 = vunpack.c.h.bf16 %v3000
  %v3116 = vunpack.c.l.bf16 %v3001
  %v3117 = vunpack.c.h.bf16 %v3001
  %v3118 = vunpack.c.l.bf16 %v3002
  %v3119 = vunpack.c.h.bf16 %v3002
  %v3120 = vunpack.c.l.bf16 %v3003
  %v3121 = vunpack.c.h.bf16 %v3003
  %v3122 = vunpack.c.l.bf16 %v3004
  %v3123 = vunpack.c.h.bf16 %v3004
  %v3124 = vunpack.c.l.bf16 %v3005
  %v3125 = vunpack.c.h.bf16 %v3005
  %v3126 = vunpack.c.l.bf16 %v3006
  %v3127 = vunpack.c.h.bf16 %v3006
  %v3128 = vunpack.c.l.bf16 %v3007
  %v3129 = vunpack.c.h.bf16 %v3007
  %v3130 = vunpack.c.l.bf16 %v3008
  %v3131 = vunpack.c.h.bf16 %v3008
  %v3132 = vunpack.c.l.bf16 %v3009
  %v3133 = vunpack.c.h.bf16 %v3009
  %v3134 = vunpack.c.l.bf16 %v3010
  %v3135 = vunpack.c.h.bf16 %v3010
  %v3136 = vunpack.c.l.bf16 %v3011
  %v3137 = vunpack.c.h.bf16 %v3011
  %v3138 = vunpack.c.l.bf16 %v3012
  %v3139 = vunpack.c.h.bf16 %v3012
  %v3140 = vunpack.c.l.bf16 %v3013
  %v3141 = vunpack.c.h.bf16 %v3013
  %v3142 = vld [vmem:[%s4] sm:$0x3]
  %v3144 = vperm.slane %v3142, 0
  %v3145 = vperm.slane %v3142, 1
  %3148 = vmatpush.msra.mxu0 %v3044
  %3149 = vmatpush.msra.mxu0 %v3042
  %3150 = vmatpush.msra.mxu0 %v3040
  %3151 = vmatpush.msra.mxu0 %v3038
  %3152 = vmatpush.msra.mxu0 %v3036
  %3153 = vmatpush.msra.mxu0 %v3034
  %3154 = vmatpush.msra.mxu0 %v3032
  %3155 = vmatpush.msra.mxu0 %v3030
  %3156 = vmatpush.msra.mxu0 %v3028
  %3157 = vmatpush.msra.mxu0 %v3026
  %3158 = vmatpush.msra.mxu0 %v3024
  %3159 = vmatpush.msra.mxu0 %v3022
  %3160 = vmatpush.msra.mxu0 %v3020
  %3161 = vmatpush.msra.mxu0 %v3018
  %3162 = vmatpush.msra.mxu0 %v3016
  %3163 = vmatpush.msra.mxu0 %v3014
  %3164 = vmatmul.f32.gmra.mxu0 %v2904
  %v3165 = vpop.f32.mrf.mxu0
  %v3166 = vadd.f32 %v3144, %v3165
  %3167 = vdwg.mxu0
  %3168 = vmatpush.msra.mxu0 %v3076
  %3169 = vmatpush.msra.mxu0 %v3074
  %3170 = vmatpush.msra.mxu0 %v3072
  %3171 = vmatpush.msra.mxu0 %v3070
  %3172 = vmatpush.msra.mxu0 %v3068
  %3173 = vmatpush.msra.mxu0 %v3066
  %3174 = vmatpush.msra.mxu0 %v3064
  %3175 = vmatpush.msra.mxu0 %v3062
  %3176 = vmatpush.msra.mxu0 %v3060
  %3177 = vmatpush.msra.mxu0 %v3058
  %3178 = vmatpush.msra.mxu0 %v3056
  %3179 = vmatpush.msra.mxu0 %v3054
  %3180 = vmatpush.msra.mxu0 %v3052
  %3181 = vmatpush.msra.mxu0 %v3050
  %3182 = vmatpush.msra.mxu0 %v3048
  %3183 = vmatpush.msra.mxu0 %v3046
  %3184 = vmatmul.f32.gmra.mxu0 %v2919
  %v3185 = vpop.f32.mrf.mxu0
  %v3186 = vadd.f32 %v3166, %v3185
  %3187 = vdwg.mxu0
  %3188 = vmatpush.msra.mxu0 %v3108
  %3189 = vmatpush.msra.mxu0 %v3106
  %3190 = vmatpush.msra.mxu0 %v3104
  %3191 = vmatpush.msra.mxu0 %v3102
  %3192 = vmatpush.msra.mxu0 %v3100
  %3193 = vmatpush.msra.mxu0 %v3098
  %3194 = vmatpush.msra.mxu0 %v3096
  %3195 = vmatpush.msra.mxu0 %v3094
  %3196 = vmatpush.msra.mxu0 %v3092
  %3197 = vmatpush.msra.mxu0 %v3090
  %3198 = vmatpush.msra.mxu0 %v3088
  %3199 = vmatpush.msra.mxu0 %v3086
  %3200 = vmatpush.msra.mxu0 %v3084
  %3201 = vmatpush.msra.mxu0 %v3082
  %3202 = vmatpush.msra.mxu0 %v3080
  %3203 = vmatpush.msra.mxu0 %v3078
  %3204 = vmatmul.f32.gmra.mxu0 %v2934
  %v3205 = vpop.f32.mrf.mxu0
  %v3206 = vadd.f32 %v3186, %v3205
  %3207 = vdwg.mxu0
  %3208 = vmatpush.msra.mxu0 %v3140
  %3209 = vmatpush.msra.mxu0 %v3138
  %3210 = vmatpush.msra.mxu0 %v3136
  %3211 = vmatpush.msra.mxu0 %v3134
  %3212 = vmatpush.msra.mxu0 %v3132
  %3213 = vmatpush.msra.mxu0 %v3130
  %3214 = vmatpush.msra.mxu0 %v3128
  %3215 = vmatpush.msra.mxu0 %v3126
  %3216 = vmatpush.msra.mxu0 %v3124
  %3217 = vmatpush.msra.mxu0 %v3122
  %3218 = vmatpush.msra.mxu0 %v3120
  %3219 = vmatpush.msra.mxu0 %v3118
  %3220 = vmatpush.msra.mxu0 %v3116
  %3221 = vmatpush.msra.mxu0 %v3114
  %3222 = vmatpush.msra.mxu0 %v3112
  %3223 = vmatpush.msra.mxu0 %v3110
  %3224 = vmatmul.f32.gmra.mxu0 %v2949
  %v3225 = vpop.f32.mrf.mxu0
  %v3226 = vadd.f32 %v3206, %v3225
  %3227 = vdwg.mxu0
  %3228 = vmatpush.msra.mxu0 %v3045
  %3229 = vmatpush.msra.mxu0 %v3043
  %3230 = vmatpush.msra.mxu0 %v3041
  %3231 = vmatpush.msra.mxu0 %v3039
  %3232 = vmatpush.msra.mxu0 %v3037
  %3233 = vmatpush.msra.mxu0 %v3035
  %3234 = vmatpush.msra.mxu0 %v3033
  %3235 = vmatpush.msra.mxu0 %v3031
  %3236 = vmatpush.msra.mxu0 %v3029
  %3237 = vmatpush.msra.mxu0 %v3027
  %3238 = vmatpush.msra.mxu0 %v3025
  %3239 = vmatpush.msra.mxu0 %v3023
  %3240 = vmatpush.msra.mxu0 %v3021
  %3241 = vmatpush.msra.mxu0 %v3019
  %3242 = vmatpush.msra.mxu0 %v3017
  %3243 = vmatpush.msra.mxu0 %v3015
  %3244 = vmatmul.f32.gmra.mxu0 %v2904
  %v3245 = vpop.f32.mrf.mxu0
  %v3246 = vadd.f32 %v3145, %v3245
  %3247 = vdwg.mxu0
  %3248 = vmatpush.msra.mxu0 %v3077
  %3249 = vmatpush.msra.mxu0 %v3075
  %3250 = vmatpush.msra.mxu0 %v3073
  %3251 = vmatpush.msra.mxu0 %v3071
  %3252 = vmatpush.msra.mxu0 %v3069
  %3253 = vmatpush.msra.mxu0 %v3067
  %3254 = vmatpush.msra.mxu0 %v3065
  %3255 = vmatpush.msra.mxu0 %v3063
  %3256 = vmatpush.msra.mxu0 %v3061
  %3257 = vmatpush.msra.mxu0 %v3059
  %3258 = vmatpush.msra.mxu0 %v3057
  %3259 = vmatpush.msra.mxu0 %v3055
  %3260 = vmatpush.msra.mxu0 %v3053
  %3261 = vmatpush.msra.mxu0 %v3051
  %3262 = vmatpush.msra.mxu0 %v3049
  %3263 = vmatpush.msra.mxu0 %v3047
  %3264 = vmatmul.f32.gmra.mxu0 %v2919
  %v3265 = vpop.f32.mrf.mxu0
  %v3266 = vadd.f32 %v3246, %v3265
  %3267 = vdwg.mxu0
  %3268 = vmatpush.msra.mxu0 %v3109
  %3269 = vmatpush.msra.mxu0 %v3107
  %3270 = vmatpush.msra.mxu0 %v3105
  %3271 = vmatpush.msra.mxu0 %v3103
  %3272 = vmatpush.msra.mxu0 %v3101
  %3273 = vmatpush.msra.mxu0 %v3099
  %3274 = vmatpush.msra.mxu0 %v3097
  %3275 = vmatpush.msra.mxu0 %v3095
  %3276 = vmatpush.msra.mxu0 %v3093
  %3277 = vmatpush.msra.mxu0 %v3091
  %3278 = vmatpush.msra.mxu0 %v3089
  %3279 = vmatpush.msra.mxu0 %v3087
  %3280 = vmatpush.msra.mxu0 %v3085
  %3281 = vmatpush.msra.mxu0 %v3083
  %3282 = vmatpush.msra.mxu0 %v3081
  %3283 = vmatpush.msra.mxu0 %v3079
  %3284 = vmatmul.f32.gmra.mxu0 %v2934
  %v3285 = vpop.f32.mrf.mxu0
  %v3286 = vadd.f32 %v3266, %v3285
  %3287 = vdwg.mxu0
  %3288 = vmatpush.msra.mxu0 %v3141
  %3289 = vmatpush.msra.mxu0 %v3139
  %3290 = vmatpush.msra.mxu0 %v3137
  %3291 = vmatpush.msra.mxu0 %v3135
  %3292 = vmatpush.msra.mxu0 %v3133
  %3293 = vmatpush.msra.mxu0 %v3131
  %3294 = vmatpush.msra.mxu0 %v3129
  %3295 = vmatpush.msra.mxu0 %v3127
  %3296 = vmatpush.msra.mxu0 %v3125
  %3297 = vmatpush.msra.mxu0 %v3123
  %3298 = vmatpush.msra.mxu0 %v3121
  %3299 = vmatpush.msra.mxu0 %v3119
  %3300 = vmatpush.msra.mxu0 %v3117
  %3301 = vmatpush.msra.mxu0 %v3115
  %3302 = vmatpush.msra.mxu0 %v3113
  %3303 = vmatpush.msra.mxu0 %v3111
  %3304 = vmatmul.f32.gmra.mxu0 %v2949
  %v3305 = vpop.f32.mrf.mxu0
  %v3306 = vadd.f32 %v3286, %v3305
  %3307 = vdwg.mxu0
  %v3308 = vxor.u32 %v3226, 2147483648
  %v3309 = vxor.u32 %v3306, 2147483648
  %v3310 = vmul.f32 %v3308, 1.442695
  %v3311 = vpow.pop %v3310
  %v3312 = vmul.f32 %v3309, 1.442695
  %v3313 = vpow.pop %v3312
  %v3314 = vadd.f32 %v3311, 1.0
  %v3315 = vadd.f32 %v3313, 1.0
  %v3316 = vrcp.pop %v3314
  %v3317 = vmul.f32 %v3314, %v3316
  %v3318 = vsub.f32 1.0, %v3317
  %v3319 = vmul.f32 %v3316, %v3318
  %v3320 = vadd.f32 %v3316, %v3319
  %vm3321 = vweird.f32 %v3314
  %vm3322 = vweird.f32 %v3316
  %vm3323 = vmor %vm3321, %vm3322
  %v3324 = vsel %vm3323, %v3316, %v3320
  %v3325 = vand.u32 2147483647, %v3314
  %vm3326 = vcmp.eq.f32.partialorder %v3325, 8.507059e+37
  %v3327 = vand.u32 %v3314, 2147483648
  %v3328 = vor.u32 1.1754944e-38, %v3327
  %v3329 = vsel %vm3326, %v3328, %v3324
  %v3330 = vmul.f32 1.0, %v3329
  %v3331 = vrcp.pop %v3315
  %v3332 = vmul.f32 %v3315, %v3331
  %v3333 = vsub.f32 1.0, %v3332
  %v3334 = vmul.f32 %v3331, %v3333
  %v3335 = vadd.f32 %v3331, %v3334
  %vm3336 = vweird.f32 %v3315
  %vm3337 = vweird.f32 %v3331
  %vm3338 = vmor %vm3336, %vm3337
  %v3339 = vsel %vm3338, %v3331, %v3335
  %v3340 = vand.u32 2147483647, %v3315
  %vm3341 = vcmp.eq.f32.partialorder %v3340, 8.507059e+37
  %v3342 = vand.u32 %v3315, 2147483648
  %v3343 = vor.u32 1.1754944e-38, %v3342
  %v3344 = vsel %vm3341, %v3343, %v3339
  %v3345 = vmul.f32 1.0, %v3344
  %v3346 = vld [vmem:[%s5] sm:$0xff]
  %v3347 = vld [vmem:[%s5 + $0x8] sm:$0xff]
  %v3348 = vld [vmem:[%s5 + $0x10] sm:$0xff]
  %v3349 = vld [vmem:[%s5 + $0x18] sm:$0xff]
  %v3350 = vld [vmem:[%s5 + $0x20] sm:$0xff]
  %v3351 = vld [vmem:[%s5 + $0x28] sm:$0xff]
  %v3352 = vld [vmem:[%s5 + $0x30] sm:$0xff]
  %v3353 = vld [vmem:[%s5 + $0x38] sm:$0xff]
  %v3354 = vld [vmem:[%s5 + $0x40] sm:$0xff]
  %v3355 = vld [vmem:[%s5 + $0x48] sm:$0xff]
  %v3356 = vld [vmem:[%s5 + $0x50] sm:$0xff]
  %v3357 = vld [vmem:[%s5 + $0x58] sm:$0xff]
  %v3358 = vld [vmem:[%s5 + $0x60] sm:$0xff]
  %v3359 = vld [vmem:[%s5 + $0x68] sm:$0xff]
  %v3360 = vld [vmem:[%s5 + $0x70] sm:$0xff]
  %v3361 = vld [vmem:[%s5 + $0x78] sm:$0xff]
  %v3362 = vld [vmem:[%s5 + $0x80] sm:$0xff]
  %v3363 = vld [vmem:[%s5 + $0x88] sm:$0xff]
  %v3364 = vld [vmem:[%s5 + $0x90] sm:$0xff]
  %v3365 = vld [vmem:[%s5 + $0x98] sm:$0xff]
  %v3366 = vld [vmem:[%s5 + $0xa0] sm:$0xff]
  %v3367 = vld [vmem:[%s5 + $0xa8] sm:$0xff]
  %v3368 = vld [vmem:[%s5 + $0xb0] sm:$0xff]
  %v3369 = vld [vmem:[%s5 + $0xb8] sm:$0xff]
  %v3370 = vld [vmem:[%s5 + $0xc0] sm:$0xff]
  %v3371 = vld [vmem:[%s5 + $0xc8] sm:$0xff]
  %v3372 = vld [vmem:[%s5 + $0xd0] sm:$0xff]
  %v3373 = vld [vmem:[%s5 + $0xd8] sm:$0xff]
  %v3374 = vld [vmem:[%s5 + $0xe0] sm:$0xff]
  %v3375 = vld [vmem:[%s5 + $0xe8] sm:$0xff]
  %v3376 = vld [vmem:[%s5 + $0xf0] sm:$0xff]
  %v3377 = vld [vmem:[%s5 + $0xf8] sm:$0xff]
  %v3378 = vunpack.c.l.bf16 %v3346
  %v3379 = vunpack.c.h.bf16 %v3346
  %v3380 = vunpack.c.l.bf16 %v3347
  %v3381 = vunpack.c.h.bf16 %v3347
  %v3382 = vunpack.c.l.bf16 %v3348
  %v3383 = vunpack.c.h.bf16 %v3348
  %v3384 = vunpack.c.l.bf16 %v3349
  %v3385 = vunpack.c.h.bf16 %v3349
  %v3386 = vunpack.c.l.bf16 %v3350
  %v3387 = vunpack.c.h.bf16 %v3350
  %v3388 = vunpack.c.l.bf16 %v3351
  %v3389 = vunpack.c.h.bf16 %v3351
  %v3390 = vunpack.c.l.bf16 %v3352
  %v3391 = vunpack.c.h.bf16 %v3352
  %v3392 = vunpack.c.l.bf16 %v3353
  %v3393 = vunpack.c.h.bf16 %v3353
  %v3394 = vunpack.c.l.bf16 %v3354
  %v3395 = vunpack.c.h.bf16 %v3354
  %v3396 = vunpack.c.l.bf16 %v3355
  %v3397 = vunpack.c.h.bf16 %v3355
  %v3398 = vunpack.c.l.bf16 %v3356
  %v3399 = vunpack.c.h.bf16 %v3356
  %v3400 = vunpack.c.l.bf16 %v3357
  %v3401 = vunpack.c.h.bf16 %v3357
  %v3402 = vunpack.c.l.bf16 %v3358
  %v3403 = vunpack.c.h.bf16 %v3358
  %v3404 = vunpack.c.l.bf16 %v3359
  %v3405 = vunpack.c.h.bf16 %v3359
  %v3406 = vunpack.c.l.bf16 %v3360
  %v3407 = vunpack.c.h.bf16 %v3360
  %v3408 = vunpack.c.l.bf16 %v3361
  %v3409 = vunpack.c.h.bf16 %v3361
  %v3410 = vunpack.c.l.bf16 %v3362
  %v3411 = vunpack.c.h.bf16 %v3362
  %v3412 = vunpack.c.l.bf16 %v3363
  %v3413 = vunpack.c.h.bf16 %v3363
  %v3414 = vunpack.c.l.bf16 %v3364
  %v3415 = vunpack.c.h.bf16 %v3364
  %v3416 = vunpack.c.l.bf16 %v3365
  %v3417 = vunpack.c.h.bf16 %v3365
  %v3418 = vunpack.c.l.bf16 %v3366
  %v3419 = vunpack.c.h.bf16 %v3366
  %v3420 = vunpack.c.l.bf16 %v3367
  %v3421 = vunpack.c.h.bf16 %v3367
  %v3422 = vunpack.c.l.bf16 %v3368
  %v3423 = vunpack.c.h.bf16 %v3368
  %v3424 = vunpack.c.l.bf16 %v3369
  %v3425 = vunpack.c.h.bf16 %v3369
  %v3426 = vunpack.c.l.bf16 %v3370
  %v3427 = vunpack.c.h.bf16 %v3370
  %v3428 = vunpack.c.l.bf16 %v3371
  %v3429 = vunpack.c.h.bf16 %v3371
  %v3430 = vunpack.c.l.bf16 %v3372
  %v3431 = vunpack.c.h.bf16 %v3372
  %v3432 = vunpack.c.l.bf16 %v3373
  %v3433 = vunpack.c.h.bf16 %v3373
  %v3434 = vunpack.c.l.bf16 %v3374
  %v3435 = vunpack.c.h.bf16 %v3374
  %v3436 = vunpack.c.l.bf16 %v3375
  %v3437 = vunpack.c.h.bf16 %v3375
  %v3438 = vunpack.c.l.bf16 %v3376
  %v3439 = vunpack.c.h.bf16 %v3376
  %v3440 = vunpack.c.l.bf16 %v3377
  %v3441 = vunpack.c.h.bf16 %v3377
  %v3442 = vld [vmem:[%s6] sm:$0x3]
  %v3444 = vperm.slane %v3442, 0
  %v3445 = vperm.slane %v3442, 1
  %3448 = vmatpush.msra.mxu0 %v3408
  %3449 = vmatpush.msra.mxu0 %v3406
  %3450 = vmatpush.msra.mxu0 %v3404
  %3451 = vmatpush.msra.mxu0 %v3402
  %3452 = vmatpush.msra.mxu0 %v3400
  %3453 = vmatpush.msra.mxu0 %v3398
  %3454 = vmatpush.msra.mxu0 %v3396
  %3455 = vmatpush.msra.mxu0 %v3394
  %3456 = vmatpush.msra.mxu0 %v3392
  %3457 = vmatpush.msra.mxu0 %v3390
  %3458 = vmatpush.msra.mxu0 %v3388
  %3459 = vmatpush.msra.mxu0 %v3386
  %3460 = vmatpush.msra.mxu0 %v3384
  %3461 = vmatpush.msra.mxu0 %v3382
  %3462 = vmatpush.msra.mxu0 %v3380
  %3463 = vmatpush.msra.mxu0 %v3378
  %3464 = vmatmul.f32.gmra.mxu0 %v3330
  %v3465 = vpop.f32.mrf.mxu0
  %v3466 = vadd.f32 %v3444, %v3465
  %3467 = vdwg.mxu0
  %3468 = vmatpush.msra.mxu0 %v3440
  %3469 = vmatpush.msra.mxu0 %v3438
  %3470 = vmatpush.msra.mxu0 %v3436
  %3471 = vmatpush.msra.mxu0 %v3434
  %3472 = vmatpush.msra.mxu0 %v3432
  %3473 = vmatpush.msra.mxu0 %v3430
  %3474 = vmatpush.msra.mxu0 %v3428
  %3475 = vmatpush.msra.mxu0 %v3426
  %3476 = vmatpush.msra.mxu0 %v3424
  %3477 = vmatpush.msra.mxu0 %v3422
  %3478 = vmatpush.msra.mxu0 %v3420
  %3479 = vmatpush.msra.mxu0 %v3418
  %3480 = vmatpush.msra.mxu0 %v3416
  %3481 = vmatpush.msra.mxu0 %v3414
  %3482 = vmatpush.msra.mxu0 %v3412
  %3483 = vmatpush.msra.mxu0 %v3410
  %3484 = vmatmul.f32.gmra.mxu0 %v3345
  %v3485 = vpop.f32.mrf.mxu0
  %v3486 = vadd.f32 %v3466, %v3485
  %3487 = vdwg.mxu0
  %3488 = vmatpush.msra.mxu0 %v3409
  %3489 = vmatpush.msra.mxu0 %v3407
  %3490 = vmatpush.msra.mxu0 %v3405
  %3491 = vmatpush.msra.mxu0 %v3403
  %3492 = vmatpush.msra.mxu0 %v3401
  %3493 = vmatpush.msra.mxu0 %v3399
  %3494 = vmatpush.msra.mxu0 %v3397
  %3495 = vmatpush.msra.mxu0 %v3395
  %3496 = vmatpush.msra.mxu0 %v3393
  %3497 = vmatpush.msra.mxu0 %v3391
  %3498 = vmatpush.msra.mxu0 %v3389
  %3499 = vmatpush.msra.mxu0 %v3387
  %3500 = vmatpush.msra.mxu0 %v3385
  %3501 = vmatpush.msra.mxu0 %v3383
  %3502 = vmatpush.msra.mxu0 %v3381
  %3503 = vmatpush.msra.mxu0 %v3379
  %3504 = vmatmul.f32.gmra.mxu0 %v3330
  %v3505 = vpop.f32.mrf.mxu0
  %v3506 = vadd.f32 %v3445, %v3505
  %3507 = vdwg.mxu0
  %3508 = vmatpush.msra.mxu0 %v3441
  %3509 = vmatpush.msra.mxu0 %v3439
  %3510 = vmatpush.msra.mxu0 %v3437
  %3511 = vmatpush.msra.mxu0 %v3435
  %3512 = vmatpush.msra.mxu0 %v3433
  %3513 = vmatpush.msra.mxu0 %v3431
  %3514 = vmatpush.msra.mxu0 %v3429
  %3515 = vmatpush.msra.mxu0 %v3427
  %3516 = vmatpush.msra.mxu0 %v3425
  %3517 = vmatpush.msra.mxu0 %v3423
  %3518 = vmatpush.msra.mxu0 %v3421
  %3519 = vmatpush.msra.mxu0 %v3419
  %3520 = vmatpush.msra.mxu0 %v3417
  %3521 = vmatpush.msra.mxu0 %v3415
  %3522 = vmatpush.msra.mxu0 %v3413
  %3523 = vmatpush.msra.mxu0 %v3411
  %3524 = vmatmul.f32.gmra.mxu0 %v3345
  %v3525 = vpop.f32.mrf.mxu0
  %v3526 = vadd.f32 %v3506, %v3525
  %3527 = vdwg.mxu0
  %v3528 = vxor.u32 %v3486, 2147483648
  %v3529 = vxor.u32 %v3526, 2147483648
  %v3530 = vmul.f32 %v3528, 1.442695
  %v3531 = vpow.pop %v3530
  %v3532 = vmul.f32 %v3529, 1.442695
  %v3533 = vpow.pop %v3532
  %v3534 = vadd.f32 %v3531, 1.0
  %v3535 = vadd.f32 %v3533, 1.0
  %v3536 = vrcp.pop %v3534
  %v3537 = vmul.f32 %v3534, %v3536
  %v3538 = vsub.f32 1.0, %v3537
  %v3539 = vmul.f32 %v3536, %v3538
  %v3540 = vadd.f32 %v3536, %v3539
  %vm3541 = vweird.f32 %v3534
  %vm3542 = vweird.f32 %v3536
  %vm3543 = vmor %vm3541, %vm3542
  %v3544 = vsel %vm3543, %v3536, %v3540
  %v3545 = vand.u32 2147483647, %v3534
  %vm3546 = vcmp.eq.f32.partialorder %v3545, 8.507059e+37
  %v3547 = vand.u32 %v3534, 2147483648
  %v3548 = vor.u32 1.1754944e-38, %v3547
  %v3549 = vsel %vm3546, %v3548, %v3544
  %v3550 = vmul.f32 1.0, %v3549
  %v3551 = vrcp.pop %v3535
  %v3552 = vmul.f32 %v3535, %v3551
  %v3553 = vsub.f32 1.0, %v3552
  %v3554 = vmul.f32 %v3551, %v3553
  %v3555 = vadd.f32 %v3551, %v3554
  %vm3556 = vweird.f32 %v3535
  %vm3557 = vweird.f32 %v3551
  %vm3558 = vmor %vm3556, %vm3557
  %v3559 = vsel %vm3558, %v3551, %v3555
  %v3560 = vand.u32 2147483647, %v3535
  %vm3561 = vcmp.eq.f32.partialorder %v3560, 8.507059e+37
  %v3562 = vand.u32 %v3535, 2147483648
  %v3563 = vor.u32 1.1754944e-38, %v3562
  %v3564 = vsel %vm3561, %v3563, %v3559
  %v3565 = vmul.f32 1.0, %v3564
  %v3566 = vld [vmem:[%s7] sm:$0xff]
  %v3567 = vld [vmem:[%s7 + $0x8] sm:$0xff]
  %v3568 = vld [vmem:[%s7 + $0x10] sm:$0xff]
  %v3569 = vld [vmem:[%s7 + $0x18] sm:$0xff]
  %v3570 = vld [vmem:[%s7 + $0x20] sm:$0xff]
  %v3571 = vld [vmem:[%s7 + $0x28] sm:$0xff]
  %v3572 = vld [vmem:[%s7 + $0x30] sm:$0xff]
  %v3573 = vld [vmem:[%s7 + $0x38] sm:$0xff]
  %v3574 = vld [vmem:[%s7 + $0x40] sm:$0xff]
  %v3575 = vld [vmem:[%s7 + $0x48] sm:$0xff]
  %v3576 = vld [vmem:[%s7 + $0x50] sm:$0xff]
  %v3577 = vld [vmem:[%s7 + $0x58] sm:$0xff]
  %v3578 = vld [vmem:[%s7 + $0x60] sm:$0xff]
  %v3579 = vld [vmem:[%s7 + $0x68] sm:$0xff]
  %v3580 = vld [vmem:[%s7 + $0x70] sm:$0xff]
  %v3581 = vld [vmem:[%s7 + $0x78] sm:$0xff]
  %v3582 = vld [vmem:[%s7 + $0x80] sm:$0xff]
  %v3583 = vld [vmem:[%s7 + $0x88] sm:$0xff]
  %v3584 = vld [vmem:[%s7 + $0x90] sm:$0xff]
  %v3585 = vld [vmem:[%s7 + $0x98] sm:$0xff]
  %v3586 = vld [vmem:[%s7 + $0xa0] sm:$0xff]
  %v3587 = vld [vmem:[%s7 + $0xa8] sm:$0xff]
  %v3588 = vld [vmem:[%s7 + $0xb0] sm:$0xff]
  %v3589 = vld [vmem:[%s7 + $0xb8] sm:$0xff]
  %v3590 = vld [vmem:[%s7 + $0xc0] sm:$0xff]
  %v3591 = vld [vmem:[%s7 + $0xc8] sm:$0xff]
  %v3592 = vld [vmem:[%s7 + $0xd0] sm:$0xff]
  %v3593 = vld [vmem:[%s7 + $0xd8] sm:$0xff]
  %v3594 = vld [vmem:[%s7 + $0xe0] sm:$0xff]
  %v3595 = vld [vmem:[%s7 + $0xe8] sm:$0xff]
  %v3596 = vld [vmem:[%s7 + $0xf0] sm:$0xff]
  %v3597 = vld [vmem:[%s7 + $0xf8] sm:$0xff]
  %v3598 = vld [vmem:[%s8] sm:$0x1]
  %v3600 = vperm.slane %v3598, 0
  %3602 = vmatpush.msra.mxu0 %v3581
  %3603 = vmatpush.msra.mxu0 %v3580
  %3604 = vmatpush.msra.mxu0 %v3579
  %3605 = vmatpush.msra.mxu0 %v3578
  %3606 = vmatpush.msra.mxu0 %v3577
  %3607 = vmatpush.msra.mxu0 %v3576
  %3608 = vmatpush.msra.mxu0 %v3575
  %3609 = vmatpush.msra.mxu0 %v3574
  %3610 = vmatpush.msra.mxu0 %v3573
  %3611 = vmatpush.msra.mxu0 %v3572
  %3612 = vmatpush.msra.mxu0 %v3571
  %3613 = vmatpush.msra.mxu0 %v3570
  %3614 = vmatpush.msra.mxu0 %v3569
  %3615 = vmatpush.msra.mxu0 %v3568
  %3616 = vmatpush.msra.mxu0 %v3567
  %3617 = vmatpush.msra.mxu0 %v3566
  %3618 = vmatmul.f32.gmra.mxu0 %v3550
  %v3619 = vpop.f32.mrf.mxu0
  %v3620 = vadd.f32 %v3600, %v3619
  %3621 = vdwg.mxu0
  %3622 = vmatpush.msra.mxu0 %v3597
  %3623 = vmatpush.msra.mxu0 %v3596
  %3624 = vmatpush.msra.mxu0 %v3595
  %3625 = vmatpush.msra.mxu0 %v3594
  %3626 = vmatpush.msra.mxu0 %v3593
  %3627 = vmatpush.msra.mxu0 %v3592
  %3628 = vmatpush.msra.mxu0 %v3591
  %3629 = vmatpush.msra.mxu0 %v3590
  %3630 = vmatpush.msra.mxu0 %v3589
  %3631 = vmatpush.msra.mxu0 %v3588
  %3632 = vmatpush.msra.mxu0 %v3587
  %3633 = vmatpush.msra.mxu0 %v3586
  %3634 = vmatpush.msra.mxu0 %v3585
  %3635 = vmatpush.msra.mxu0 %v3584
  %3636 = vmatpush.msra.mxu0 %v3583
  %3637 = vmatpush.msra.mxu0 %v3582
  %3638 = vmatmul.f32.gmra.mxu0 %v3565
  %v3639 = vpop.f32.mrf.mxu0
  %v3640 = vadd.f32 %v3620, %v3639
  %3641 = vdwg.mxu0
  %3642 = vst [vmem:[%s9] sm:$0xff] %v3640
  // Predicated region
  $region38: #{original_net_forward.1} parent=0 // pred_check
    _
  $region39: #{original_net_forward.1} parent=0 // pred_check_branch
    %3644 = sbr.rel (0) target = $region41
  $region40: #{original_net_forward.1} parent=0 // pred_region
    _
  $region41: #{original_net_forward.1} parent=0 // pred_fallthru
    _
  // Predicated region
  $region42: #{original_net_forward.1} parent=0 // pred_check
    _
  $region43: #{original_net_forward.1} parent=0 // pred_check_branch
    %3646 = sbr.rel (0) target = $region45
  $region44: #{original_net_forward.1} parent=0 // pred_region
    _
  $region45: #{original_net_forward.1} parent=0 // pred_fallthru
    _

</llo_original>
